<compile_context>
chip_gen: v7x
topology: tpu7x:2x2x1
jax: 0.10.0
libtpu: 0.0.40
codegen_flags: <defaults>
</compile_context>

<pallas_src>
import functools

import jax
import jax.numpy as jnp
import numpy as np
from jax.experimental import pallas as pl
from jax.experimental.pallas import tpu as pltpu

D_MODEL = 32
N_HEAD = 4
D_HEAD = D_MODEL // N_HEAD
DIM_FF = 64
LN_EPS = 1e-5
SCALE = 1.0 / float(np.sqrt(D_HEAD))


# ----------------------------------------------------------------------------
# small math helpers (shared by kernel and reference)
# ----------------------------------------------------------------------------
def _layer_norm(x, gamma, beta):
    mu = jnp.mean(x, axis=-1, keepdims=True)
    var = jnp.mean(jnp.square(x - mu), axis=-1, keepdims=True)
    return (x - mu) * jax.lax.rsqrt(var + LN_EPS) * gamma + beta


def _softmax(logits):
    m = jnp.max(logits, axis=-1, keepdims=True)
    p = jnp.exp(logits - m)
    return p / jnp.sum(p, axis=-1, keepdims=True)


def _swap_halves(x):
    """Per-head swap of the two D_HEAD//2-wide halves of x: [B*S, D].

    This is rotate_half without the sign; the sign is folded into the
    precomputed sin table, so RoPE is q*cos + swap(q)*sin_signed.
    """
    h = D_HEAD // 2
    parts = []
    for head in range(N_HEAD):
        lo = head * D_HEAD
        parts.append(x[:, lo + h: lo + D_HEAD])
        parts.append(x[:, lo: lo + h])
    return jnp.concatenate(parts, axis=-1)


def _attend(q, k, v, bias, B, Sq, Sk):
    """Multi-head attention over flattened rows.

    q: [B*Sq, D] f32 (already RoPE'd), k, v: [B*Sk, D] f32,
    bias: [B, Sq, Sk] additive f32.  Returns [B*Sq, D] f32 (pre out-proj).
    """
    bf = jnp.bfloat16
    heads = []
    for h in range(N_HEAD):
        lo, hi = h * D_HEAD, (h + 1) * D_HEAD
        qh = q[:, lo:hi].reshape(B, Sq, D_HEAD).astype(bf)
        kh = k[:, lo:hi].reshape(B, Sk, D_HEAD).astype(bf)
        vh = v[:, lo:hi].reshape(B, Sk, D_HEAD).astype(bf)
        logits = jnp.einsum("bqd,bkd->bqk", qh, kh,
                            preferred_element_type=jnp.float32) * SCALE + bias
        p = _softmax(logits).astype(bf)
        o = jnp.einsum("bqk,bkd->bqd", p, vh,
                       preferred_element_type=jnp.float32)
        heads.append(o.reshape(B * Sq, D_HEAD))
    return jnp.concatenate(heads, axis=-1)


# ----------------------------------------------------------------------------
# Pallas kernel: full decoder layer, all batch elements in one invocation
# ----------------------------------------------------------------------------
def decoder_layer_kernel(tgt_ref, mem_ref, sin_ref, cos_ref, sbias_ref, mbias_ref,
                         wqkv_s_ref, wos_ref, wqc_ref, wkvc_ref, woc_ref,
                         w1_ref, b1_ref, w2_ref, b2_ref,
                         g1_ref, be1_ref, g2_ref, be2_ref, g3_ref, be3_ref,
                         out_ref, *, B, St, Sm):
    bf = jnp.bfloat16
    f32 = jnp.float32

    x = tgt_ref[...]          # [B*St, D] f32
    mem = mem_ref[...]        # [B*Sm, D] bf16 (memory only feeds matmuls)

    # ---- 1) rotary self-attention + residual + norm1 ------------------------
    qkv = jnp.dot(x.astype(bf), wqkv_s_ref[...],
                  preferred_element_type=f32)                 # [B*St, 3D]
    q = qkv[:, :D_MODEL]
    k = qkv[:, D_MODEL:2 * D_MODEL]
    v = qkv[:, 2 * D_MODEL:]
    sin = sin_ref[...]
    cos = cos_ref[...]
    q = q * cos + _swap_halves(q) * sin                        # RoPE (sign folded)
    k = k * cos + _swap_halves(k) * sin
    sa = _attend(q, k, v, sbias_ref[...], B, St, St)
    sa = jnp.dot(sa.astype(bf), wos_ref[...], preferred_element_type=f32)
    x = _layer_norm(x + sa, g1_ref[...], be1_ref[...])

    # ---- 2) cross-attention over memory + residual + norm2 ------------------
    qc = jnp.dot(x.astype(bf), wqc_ref[...], preferred_element_type=f32)
    kvc = jnp.dot(mem, wkvc_ref[...], preferred_element_type=f32)  # [B*Sm, 2D]
    kc = kvc[:, :D_MODEL]
    vc = kvc[:, D_MODEL:]
    ca = _attend(qc, kc, vc, mbias_ref[...], B, St, Sm)
    ca = jnp.dot(ca.astype(bf), woc_ref[...], preferred_element_type=f32)
    x = _layer_norm(x + ca, g2_ref[...], be2_ref[...])

    # ---- 3) feed-forward (linear1 -> relu -> linear2) + residual + norm3 -----
    h = jnp.maximum(
        jnp.dot(x.astype(bf), w1_ref[...], preferred_element_type=f32) + b1_ref[...],
        0.0)
    ff = jnp.dot(h.astype(bf), w2_ref[...], preferred_element_type=f32) + b2_ref[...]
    x = _layer_norm(x + ff, g3_ref[...], be3_ref[...])

    out_ref[...] = x


# ----------------------------------------------------------------------------
# RoPE tables
# ----------------------------------------------------------------------------
def rope_tables(seq_len, dim, pos_offset=0, base=10000.0):
    """Standard per-head sin/cos tables [S, dim] (for the reference)."""
    inv_freq = 1.0 / (base ** (np.arange(0, dim, 2, dtype=np.float32) / dim))
    t = np.arange(pos_offset, pos_offset + seq_len, dtype=np.float32)
    freqs = np.einsum("i,j->ij", t, inv_freq)
    emb = np.concatenate([freqs, freqs], axis=-1)
    return jnp.asarray(np.sin(emb)), jnp.asarray(np.cos(emb))


def rope_tables_flat(seq_len, batch, pos_offset=0, base=10000.0):
    """Sign-folded sin and cos tiled over heads and batch -> [B*S, D]."""
    inv_freq = 1.0 / (base ** (np.arange(0, D_HEAD, 2, dtype=np.float32) / D_HEAD))
    t = np.arange(pos_offset, pos_offset + seq_len, dtype=np.float32)
    freqs = np.einsum("i,j->ij", t, inv_freq)                   # [S, Dh/2]
    cos = np.cos(np.concatenate([freqs, freqs], axis=-1))        # [S, Dh]
    s = np.sin(freqs)
    sin_signed = np.concatenate([-s, s], axis=-1)                # [S, Dh]
    cos_full = np.tile(np.tile(cos, (1, N_HEAD)), (batch, 1))    # [B*S, D]
    sin_full = np.tile(np.tile(sin_signed, (1, N_HEAD)), (batch, 1))
    return jnp.asarray(sin_full), jnp.asarray(cos_full)


# ----------------------------------------------------------------------------
# wrapper: weight fusion / bias broadcasting + pallas_call
# ----------------------------------------------------------------------------
def rotary_transformer_decoder_layer(tgt, memory, params,
                                     tgt_mask=None,
                                     memory_key_padding_mask=None,
                                     pos_offset=0):
    B, St, D = tgt.shape
    _, Sm, _ = memory.shape
    assert D == D_MODEL
    bf = jnp.bfloat16

    sin_full, cos_full = rope_tables_flat(St, B, pos_offset)

    # additive attention biases, pre-broadcast to [B, Sq, Sk]
    if tgt_mask is None:
        sbias = jnp.zeros((B, St, St), jnp.float32)
    else:  # True == masked-out position
        sbias = jnp.broadcast_to(
            jnp.where(tgt_mask, -1e9, 0.0).astype(jnp.float32), (B, St, St))
    if memory_key_padding_mask is None:
        mbias = jnp.zeros((B, St, Sm), jnp.float32)
    else:  # True == padded key position
        mbias = jnp.broadcast_to(
            jnp.where(memory_key_padding_mask, -1e9, 0.0)
            .astype(jnp.float32)[:, None, :], (B, St, Sm))

    # fused weights (done once in the wrapper, cast to bf16 for the MXU);
    # NOTE: no scale folding into weights -> exact bf16 parity with the
    # separate-weight formulation of the module.
    w_qkv_s = jnp.concatenate(
        [params["wqs"], params["wks"], params["wvs"]], axis=1).astype(bf)
    wos = params["wos"].astype(bf)
    wqc = params["wqc"].astype(bf)
    w_kv_c = jnp.concatenate([params["wkc"], params["wvc"]], axis=1).astype(bf)
    woc = params["woc"].astype(bf)
    w1 = params["w1"].astype(bf)
    w2 = params["w2"].astype(bf)
    b1, b2 = params["b1"], params["b2"]
    lns = [params[n] for n in ("g1", "be1", "g2", "be2", "g3", "be3")]

    tgt_flat = tgt.reshape(B * St, D)                 # f32 (needed for residual)
    mem_flat = memory.reshape(B * Sm, D).astype(bf)   # only used as matmul input

    inputs = [tgt_flat, mem_flat, sin_full, cos_full, sbias, mbias,
              w_qkv_s, wos, wqc, w_kv_c, woc, w1, b1, w2, b2, *lns]

    vmem = pl.BlockSpec(memory_space=pltpu.MemorySpace.VMEM)
    kernel = functools.partial(decoder_layer_kernel, B=B, St=St, Sm=Sm)

    out = pl.pallas_call(
        kernel,
        out_shape=jax.ShapeDtypeStruct((B * St, D), jnp.float32),
        in_specs=[vmem] * len(inputs),
        out_specs=vmem,
    )(*inputs)
    return out.reshape(B, St, D)


# ----------------------------------------------------------------------------
# deterministic parameter init (synthetic; mirrors shapes of the torch module)
# ----------------------------------------------------------------------------
def build_params(key):
    D, F = D_MODEL, DIM_FF
    ks = jax.random.split(key, 12)

    def xavier(k, shape, gain=1.0):
        fan_in, fan_out = shape
        limit = gain * np.sqrt(6.0 / (fan_in + fan_out))
        return jax.random.uniform(k, shape, jnp.float32, -limit, limit)

    return dict(
        wqs=xavier(ks[0], (D, D)), wks=xavier(ks[1], (D, D)),
        wvs=xavier(ks[2], (D, D)), wos=xavier(ks[3], (D, D)),
        wqc=xavier(ks[4], (D, D)), wkc=xavier(ks[5], (D, D)),
        wvc=xavier(ks[6], (D, D)), woc=xavier(ks[7], (D, D)),
        w1=xavier(ks[8], (D, F), gain=np.sqrt(2.0)),
        w2=xavier(ks[9], (F, D)),
        b1=jax.random.uniform(ks[10], (1, F), jnp.float32, -0.1, 0.1),
        b2=jax.random.uniform(ks[11], (1, D), jnp.float32, -0.1, 0.1),
        g1=jnp.ones((1, D), jnp.float32), be1=jnp.zeros((1, D), jnp.float32),
        g2=jnp.ones((1, D), jnp.float32), be2=jnp.zeros((1, D), jnp.float32),
        g3=jnp.ones((1, D), jnp.float32), be3=jnp.zeros((1, D), jnp.float32),
    )


# ----------------------------------------------------------------------------
# pure-JAX reference: module-faithful structure (per-batch, per-head, separate
# Q/K/V weights, explicit scale & rotate_half), with the same bf16-operand /
# f32-accumulate matmul policy as the kernel.
# ----------------------------------------------------------------------------
def _bdot(a, b):
    return jnp.dot(a.astype(jnp.bfloat16), b.astype(jnp.bfloat16),
                   preferred_element_type=jnp.float32)


def _rotate_half(x):
    h = x.shape[-1] // 2
    return jnp.concatenate([-x[:, h:], x[:, :h]], axis=-1)


def _ref_mha(q_in, kv_in, wq, wk, wv, wo, bias, sin=None, cos=None):
    q, k, v = _bdot(q_in, wq), _bdot(kv_in, wk), _bdot(kv_in, wv)
    heads = []
    for h in range(N_HEAD):
        lo, hi = h * D_HEAD, (h + 1) * D_HEAD
        qh, kh, vh = q[:, lo:hi], k[:, lo:hi], v[:, lo:hi]
        if sin is not None:
            qh = qh * cos + _rotate_half(qh) * sin
            kh = kh * cos + _rotate_half(kh) * sin
        logits = _bdot(qh, kh.T) * SCALE + bias
        p = _softmax(logits)
        heads.append(_bdot(p, vh))
    return _bdot(jnp.concatenate(heads, axis=-1), wo)


def reference(tgt, memory, p, tgt_mask, mem_pad, pos_offset):
    B, St, _ = tgt.shape
    Sm = memory.shape[1]
    sin, cos = rope_tables(St, D_HEAD, pos_offset)
    sbias = (jnp.zeros((St, St), jnp.float32) if tgt_mask is None
             else jnp.where(tgt_mask, -1e9, 0.0).astype(jnp.float32))
    outs = []
    for b in range(B):
        x, mem = tgt[b], memory[b]
        mb = (jnp.zeros((1, Sm), jnp.float32) if mem_pad is None
              else jnp.where(mem_pad[b], -1e9, 0.0).astype(jnp.float32)[None, :])
        sa = _ref_mha(x, x, p["wqs"], p["wks"], p["wvs"], p["wos"], sbias, sin, cos)
        x = _layer_norm(x + sa, p["g1"], p["be1"])
        ca = _ref_mha(x, mem, p["wqc"], p["wkc"], p["wvc"], p["woc"], mb)
        x = _layer_norm(x + ca, p["g2"], p["be2"])
        hh = jnp.maximum(_bdot(x, p["w1"]) + p["b1"], 0.0)
        ff = _bdot(hh, p["w2"]) + p["b2"]
        x = _layer_norm(x + ff, p["g3"], p["be3"])
        outs.append(x)
    return jnp.stack(outs)


if __name__ == "__main__":
    B, St, Sm = 2, 8, 8
    key = jax.random.PRNGKey(0)
    kp, kt, km = jax.random.split(key, 3)

    params = build_params(kp)
    tgt = jax.random.normal(kt, (B, St, D_MODEL), jnp.float32)
    memory = jax.random.normal(km, (B, Sm, D_MODEL), jnp.float32)

    # causal target mask (True = masked) and a memory key padding mask
    tgt_mask = jnp.triu(jnp.ones((St, St), dtype=bool), k=1)
    mem_pad = jnp.zeros((B, Sm), dtype=bool).at[1, Sm - 2:].set(True)

    out = rotary_transformer_decoder_layer(
        tgt, memory, params,
        tgt_mask=tgt_mask,
        memory_key_padding_mask=mem_pad,
        pos_offset=0)
    out = jax.block_until_ready(out)

    ref = reference(tgt, memory, params, tgt_mask, mem_pad, 0)
    np.testing.assert_allclose(np.asarray(out), np.asarray(ref),
                               rtol=1e-2, atol=1e-2)
    print("KERNEL_OK")
</pallas_src>

<mosaic_0001>
module attributes {stable_mosaic.version = 11 : i64} {
  func.func @decoder_layer_kernel(%arg0: memref<16x32xf32, #tpu.memory_space<vmem>>, %arg1: memref<16x32xbf16, #tpu.memory_space<vmem>>, %arg2: memref<16x32xf32, #tpu.memory_space<vmem>>, %arg3: memref<16x32xf32, #tpu.memory_space<vmem>>, %arg4: memref<2x8x8xf32, #tpu.memory_space<vmem>>, %arg5: memref<2x8x8xf32, #tpu.memory_space<vmem>>, %arg6: memref<32x96xbf16, #tpu.memory_space<vmem>>, %arg7: memref<32x32xbf16, #tpu.memory_space<vmem>>, %arg8: memref<32x32xbf16, #tpu.memory_space<vmem>>, %arg9: memref<32x64xbf16, #tpu.memory_space<vmem>>, %arg10: memref<32x32xbf16, #tpu.memory_space<vmem>>, %arg11: memref<32x64xbf16, #tpu.memory_space<vmem>>, %arg12: memref<1x64xf32, #tpu.memory_space<vmem>>, %arg13: memref<64x32xbf16, #tpu.memory_space<vmem>>, %arg14: memref<1x32xf32, #tpu.memory_space<vmem>>, %arg15: memref<1x32xf32, #tpu.memory_space<vmem>>, %arg16: memref<1x32xf32, #tpu.memory_space<vmem>>, %arg17: memref<1x32xf32, #tpu.memory_space<vmem>>, %arg18: memref<1x32xf32, #tpu.memory_space<vmem>>, %arg19: memref<1x32xf32, #tpu.memory_space<vmem>>, %arg20: memref<1x32xf32, #tpu.memory_space<vmem>>, %arg21: memref<16x32xf32, #tpu.memory_space<vmem>>) attributes {dimension_semantics = [], scalar_prefetch = 0 : i64, scratch_operands = 0 : i64, tpu.core_type = #tpu.core_type<tc>} {
    %c0 = arith.constant 0 : index
    %c0_0 = arith.constant 0 : index
    %0 = vector.load %arg0[%c0, %c0_0] : memref<16x32xf32, #tpu.memory_space<vmem>>, vector<16x32xf32>
    %c0_1 = arith.constant 0 : index
    %c0_2 = arith.constant 0 : index
    %1 = vector.load %arg1[%c0_1, %c0_2] : memref<16x32xbf16, #tpu.memory_space<vmem>>, vector<16x32xbf16>
    %2 = arith.truncf %0 : vector<16x32xf32> to vector<16x32xbf16>
    %c0_3 = arith.constant 0 : index
    %c0_4 = arith.constant 0 : index
    %3 = vector.load %arg6[%c0_3, %c0_4] : memref<32x96xbf16, #tpu.memory_space<vmem>>, vector<32x96xbf16>
    %cst = arith.constant dense<0.000000e+00> : vector<16x96xf32>
    %4 = tpu.matmul %2, %3, %cst {dimension_numbers = #tpu.dot_dimension_numbers<[1], [0], [0], [1], [0, 0, 1, 1], [], []>} : vector<16x32xbf16>, vector<32x96xbf16>, vector<16x96xf32> -> vector<16x96xf32>
    %5 = vector.extract_strided_slice %4 {offsets = [0, 0], sizes = [16, 32], strides = [1, 1]} : vector<16x96xf32> to vector<16x32xf32>
    %6 = vector.extract_strided_slice %4 {offsets = [0, 32], sizes = [16, 32], strides = [1, 1]} : vector<16x96xf32> to vector<16x32xf32>
    %7 = vector.extract_strided_slice %4 {offsets = [0, 64], sizes = [16, 32], strides = [1, 1]} : vector<16x96xf32> to vector<16x32xf32>
    %c0_5 = arith.constant 0 : index
    %c0_6 = arith.constant 0 : index
    %8 = vector.load %arg2[%c0_5, %c0_6] : memref<16x32xf32, #tpu.memory_space<vmem>>, vector<16x32xf32>
    %c0_7 = arith.constant 0 : index
    %c0_8 = arith.constant 0 : index
    %9 = vector.load %arg3[%c0_7, %c0_8] : memref<16x32xf32, #tpu.memory_space<vmem>>, vector<16x32xf32>
    %10 = arith.mulf %5, %9 : vector<16x32xf32>
    %11 = vector.extract_strided_slice %5 {offsets = [0, 4], sizes = [16, 4], strides = [1, 1]} : vector<16x32xf32> to vector<16x4xf32>
    %12 = vector.extract_strided_slice %5 {offsets = [0, 0], sizes = [16, 4], strides = [1, 1]} : vector<16x32xf32> to vector<16x4xf32>
    %13 = vector.extract_strided_slice %5 {offsets = [0, 12], sizes = [16, 4], strides = [1, 1]} : vector<16x32xf32> to vector<16x4xf32>
    %14 = vector.extract_strided_slice %5 {offsets = [0, 8], sizes = [16, 4], strides = [1, 1]} : vector<16x32xf32> to vector<16x4xf32>
    %15 = vector.extract_strided_slice %5 {offsets = [0, 20], sizes = [16, 4], strides = [1, 1]} : vector<16x32xf32> to vector<16x4xf32>
    %16 = vector.extract_strided_slice %5 {offsets = [0, 16], sizes = [16, 4], strides = [1, 1]} : vector<16x32xf32> to vector<16x4xf32>
    %17 = vector.extract_strided_slice %5 {offsets = [0, 28], sizes = [16, 4], strides = [1, 1]} : vector<16x32xf32> to vector<16x4xf32>
    %18 = vector.extract_strided_slice %5 {offsets = [0, 24], sizes = [16, 4], strides = [1, 1]} : vector<16x32xf32> to vector<16x4xf32>
    %19 = tpu.concatenate %11, %12, %13, %14, %15, %16, %17, %18 in 1 : vector<16x4xf32>, vector<16x4xf32>, vector<16x4xf32>, vector<16x4xf32>, vector<16x4xf32>, vector<16x4xf32>, vector<16x4xf32>, vector<16x4xf32> -> vector<16x32xf32>
    %20 = arith.mulf %19, %8 : vector<16x32xf32>
    %21 = arith.addf %10, %20 : vector<16x32xf32>
    %22 = arith.mulf %6, %9 : vector<16x32xf32>
    %23 = vector.extract_strided_slice %6 {offsets = [0, 4], sizes = [16, 4], strides = [1, 1]} : vector<16x32xf32> to vector<16x4xf32>
    %24 = vector.extract_strided_slice %6 {offsets = [0, 0], sizes = [16, 4], strides = [1, 1]} : vector<16x32xf32> to vector<16x4xf32>
    %25 = vector.extract_strided_slice %6 {offsets = [0, 12], sizes = [16, 4], strides = [1, 1]} : vector<16x32xf32> to vector<16x4xf32>
    %26 = vector.extract_strided_slice %6 {offsets = [0, 8], sizes = [16, 4], strides = [1, 1]} : vector<16x32xf32> to vector<16x4xf32>
    %27 = vector.extract_strided_slice %6 {offsets = [0, 20], sizes = [16, 4], strides = [1, 1]} : vector<16x32xf32> to vector<16x4xf32>
    %28 = vector.extract_strided_slice %6 {offsets = [0, 16], sizes = [16, 4], strides = [1, 1]} : vector<16x32xf32> to vector<16x4xf32>
    %29 = vector.extract_strided_slice %6 {offsets = [0, 28], sizes = [16, 4], strides = [1, 1]} : vector<16x32xf32> to vector<16x4xf32>
    %30 = vector.extract_strided_slice %6 {offsets = [0, 24], sizes = [16, 4], strides = [1, 1]} : vector<16x32xf32> to vector<16x4xf32>
    %31 = tpu.concatenate %23, %24, %25, %26, %27, %28, %29, %30 in 1 : vector<16x4xf32>, vector<16x4xf32>, vector<16x4xf32>, vector<16x4xf32>, vector<16x4xf32>, vector<16x4xf32>, vector<16x4xf32>, vector<16x4xf32> -> vector<16x32xf32>
    %32 = arith.mulf %31, %8 : vector<16x32xf32>
    %33 = arith.addf %22, %32 : vector<16x32xf32>
    %c0_9 = arith.constant 0 : index
    %c0_10 = arith.constant 0 : index
    %c0_11 = arith.constant 0 : index
    %34 = vector.load %arg4[%c0_9, %c0_10, %c0_11] : memref<2x8x8xf32, #tpu.memory_space<vmem>>, vector<2x8x8xf32>
    %35 = vector.extract_strided_slice %21 {offsets = [0, 0], sizes = [16, 8], strides = [1, 1]} : vector<16x32xf32> to vector<16x8xf32>
    %36 = vector.shape_cast %35 : vector<16x8xf32> to vector<2x8x8xf32>
    %37 = arith.truncf %36 : vector<2x8x8xf32> to vector<2x8x8xbf16>
    %38 = vector.extract_strided_slice %33 {offsets = [0, 0], sizes = [16, 8], strides = [1, 1]} : vector<16x32xf32> to vector<16x8xf32>
    %39 = vector.shape_cast %38 : vector<16x8xf32> to vector<2x8x8xf32>
    %40 = arith.truncf %39 : vector<2x8x8xf32> to vector<2x8x8xbf16>
    %41 = vector.extract_strided_slice %7 {offsets = [0, 0], sizes = [16, 8], strides = [1, 1]} : vector<16x32xf32> to vector<16x8xf32>
    %42 = vector.shape_cast %41 : vector<16x8xf32> to vector<2x8x8xf32>
    %43 = arith.truncf %42 : vector<2x8x8xf32> to vector<2x8x8xbf16>
    "tpu.trace_start"() <{level = 10 : i32, message = "bqd,bkd->bqk"}> : () -> ()
    %cst_12 = arith.constant dense<0.000000e+00> : vector<2x8x8xf32>
    %44 = tpu.matmul %37, %40, %cst_12 {dimension_numbers = #tpu.dot_dimension_numbers<[2], [2], [1], [1], [0, 0, 0, 1, 1, 1], [0], [0]>} : vector<2x8x8xbf16>, vector<2x8x8xbf16>, vector<2x8x8xf32> -> vector<2x8x8xf32>
    "tpu.trace_stop"() : () -> ()
    %cst_13 = arith.constant 0.353553385 : f32
    %45 = vector.broadcast %cst_13 : f32 to vector<2x8x8xf32>
    %46 = arith.mulf %44, %45 : vector<2x8x8xf32>
    %47 = arith.addf %46, %34 : vector<2x8x8xf32>
    %cst_14 = arith.constant dense<0xFF800000> : vector<2x8xf32>
    %48 = vector.multi_reduction <maximumf>, %47, %cst_14 [2] : vector<2x8x8xf32> to vector<2x8xf32>
    %49 = vector.shape_cast %48 : vector<2x8xf32> to vector<2x8x1xf32>
    %50 = vector.broadcast %49 : vector<2x8x1xf32> to vector<2x8x8xf32>
    %51 = arith.subf %47, %50 : vector<2x8x8xf32>
    %52 = math.exp %51 : vector<2x8x8xf32>
    %cst_15 = arith.constant dense<0.000000e+00> : vector<2x8xf32>
    %53 = vector.multi_reduction <add>, %52, %cst_15 [2] : vector<2x8x8xf32> to vector<2x8xf32>
    %54 = vector.shape_cast %53 : vector<2x8xf32> to vector<2x8x1xf32>
    %55 = vector.broadcast %54 : vector<2x8x1xf32> to vector<2x8x8xf32>
    %56 = arith.divf %52, %55 : vector<2x8x8xf32>
    %57 = arith.truncf %56 : vector<2x8x8xf32> to vector<2x8x8xbf16>
    "tpu.trace_start"() <{level = 10 : i32, message = "bqk,bkd->bqd"}> : () -> ()
    %cst_16 = arith.constant dense<0.000000e+00> : vector<2x8x8xf32>
    %58 = tpu.matmul %57, %43, %cst_16 {dimension_numbers = #tpu.dot_dimension_numbers<[2], [1], [1], [2], [0, 0, 0, 1, 1, 2], [0], [0]>} : vector<2x8x8xbf16>, vector<2x8x8xbf16>, vector<2x8x8xf32> -> vector<2x8x8xf32>
    "tpu.trace_stop"() : () -> ()
    %59 = vector.shape_cast %58 : vector<2x8x8xf32> to vector<16x8xf32>
    %60 = vector.extract_strided_slice %21 {offsets = [0, 8], sizes = [16, 8], strides = [1, 1]} : vector<16x32xf32> to vector<16x8xf32>
    %61 = vector.shape_cast %60 : vector<16x8xf32> to vector<2x8x8xf32>
    %62 = arith.truncf %61 : vector<2x8x8xf32> to vector<2x8x8xbf16>
    %63 = vector.extract_strided_slice %33 {offsets = [0, 8], sizes = [16, 8], strides = [1, 1]} : vector<16x32xf32> to vector<16x8xf32>
    %64 = vector.shape_cast %63 : vector<16x8xf32> to vector<2x8x8xf32>
    %65 = arith.truncf %64 : vector<2x8x8xf32> to vector<2x8x8xbf16>
    %66 = vector.extract_strided_slice %7 {offsets = [0, 8], sizes = [16, 8], strides = [1, 1]} : vector<16x32xf32> to vector<16x8xf32>
    %67 = vector.shape_cast %66 : vector<16x8xf32> to vector<2x8x8xf32>
    %68 = arith.truncf %67 : vector<2x8x8xf32> to vector<2x8x8xbf16>
    "tpu.trace_start"() <{level = 10 : i32, message = "bqd,bkd->bqk"}> : () -> ()
    %cst_17 = arith.constant dense<0.000000e+00> : vector<2x8x8xf32>
    %69 = tpu.matmul %62, %65, %cst_17 {dimension_numbers = #tpu.dot_dimension_numbers<[2], [2], [1], [1], [0, 0, 0, 1, 1, 1], [0], [0]>} : vector<2x8x8xbf16>, vector<2x8x8xbf16>, vector<2x8x8xf32> -> vector<2x8x8xf32>
    "tpu.trace_stop"() : () -> ()
    %cst_18 = arith.constant 0.353553385 : f32
    %70 = vector.broadcast %cst_18 : f32 to vector<2x8x8xf32>
    %71 = arith.mulf %69, %70 : vector<2x8x8xf32>
    %72 = arith.addf %71, %34 : vector<2x8x8xf32>
    %cst_19 = arith.constant dense<0xFF800000> : vector<2x8xf32>
    %73 = vector.multi_reduction <maximumf>, %72, %cst_19 [2] : vector<2x8x8xf32> to vector<2x8xf32>
    %74 = vector.shape_cast %73 : vector<2x8xf32> to vector<2x8x1xf32>
    %75 = vector.broadcast %74 : vector<2x8x1xf32> to vector<2x8x8xf32>
    %76 = arith.subf %72, %75 : vector<2x8x8xf32>
    %77 = math.exp %76 : vector<2x8x8xf32>
    %cst_20 = arith.constant dense<0.000000e+00> : vector<2x8xf32>
    %78 = vector.multi_reduction <add>, %77, %cst_20 [2] : vector<2x8x8xf32> to vector<2x8xf32>
    %79 = vector.shape_cast %78 : vector<2x8xf32> to vector<2x8x1xf32>
    %80 = vector.broadcast %79 : vector<2x8x1xf32> to vector<2x8x8xf32>
    %81 = arith.divf %77, %80 : vector<2x8x8xf32>
    %82 = arith.truncf %81 : vector<2x8x8xf32> to vector<2x8x8xbf16>
    "tpu.trace_start"() <{level = 10 : i32, message = "bqk,bkd->bqd"}> : () -> ()
    %cst_21 = arith.constant dense<0.000000e+00> : vector<2x8x8xf32>
    %83 = tpu.matmul %82, %68, %cst_21 {dimension_numbers = #tpu.dot_dimension_numbers<[2], [1], [1], [2], [0, 0, 0, 1, 1, 2], [0], [0]>} : vector<2x8x8xbf16>, vector<2x8x8xbf16>, vector<2x8x8xf32> -> vector<2x8x8xf32>
    "tpu.trace_stop"() : () -> ()
    %84 = vector.shape_cast %83 : vector<2x8x8xf32> to vector<16x8xf32>
    %85 = vector.extract_strided_slice %21 {offsets = [0, 16], sizes = [16, 8], strides = [1, 1]} : vector<16x32xf32> to vector<16x8xf32>
    %86 = vector.shape_cast %85 : vector<16x8xf32> to vector<2x8x8xf32>
    %87 = arith.truncf %86 : vector<2x8x8xf32> to vector<2x8x8xbf16>
    %88 = vector.extract_strided_slice %33 {offsets = [0, 16], sizes = [16, 8], strides = [1, 1]} : vector<16x32xf32> to vector<16x8xf32>
    %89 = vector.shape_cast %88 : vector<16x8xf32> to vector<2x8x8xf32>
    %90 = arith.truncf %89 : vector<2x8x8xf32> to vector<2x8x8xbf16>
    %91 = vector.extract_strided_slice %7 {offsets = [0, 16], sizes = [16, 8], strides = [1, 1]} : vector<16x32xf32> to vector<16x8xf32>
    %92 = vector.shape_cast %91 : vector<16x8xf32> to vector<2x8x8xf32>
    %93 = arith.truncf %92 : vector<2x8x8xf32> to vector<2x8x8xbf16>
    "tpu.trace_start"() <{level = 10 : i32, message = "bqd,bkd->bqk"}> : () -> ()
    %cst_22 = arith.constant dense<0.000000e+00> : vector<2x8x8xf32>
    %94 = tpu.matmul %87, %90, %cst_22 {dimension_numbers = #tpu.dot_dimension_numbers<[2], [2], [1], [1], [0, 0, 0, 1, 1, 1], [0], [0]>} : vector<2x8x8xbf16>, vector<2x8x8xbf16>, vector<2x8x8xf32> -> vector<2x8x8xf32>
    "tpu.trace_stop"() : () -> ()
    %cst_23 = arith.constant 0.353553385 : f32
    %95 = vector.broadcast %cst_23 : f32 to vector<2x8x8xf32>
    %96 = arith.mulf %94, %95 : vector<2x8x8xf32>
    %97 = arith.addf %96, %34 : vector<2x8x8xf32>
    %cst_24 = arith.constant dense<0xFF800000> : vector<2x8xf32>
    %98 = vector.multi_reduction <maximumf>, %97, %cst_24 [2] : vector<2x8x8xf32> to vector<2x8xf32>
    %99 = vector.shape_cast %98 : vector<2x8xf32> to vector<2x8x1xf32>
    %100 = vector.broadcast %99 : vector<2x8x1xf32> to vector<2x8x8xf32>
    %101 = arith.subf %97, %100 : vector<2x8x8xf32>
    %102 = math.exp %101 : vector<2x8x8xf32>
    %cst_25 = arith.constant dense<0.000000e+00> : vector<2x8xf32>
    %103 = vector.multi_reduction <add>, %102, %cst_25 [2] : vector<2x8x8xf32> to vector<2x8xf32>
    %104 = vector.shape_cast %103 : vector<2x8xf32> to vector<2x8x1xf32>
    %105 = vector.broadcast %104 : vector<2x8x1xf32> to vector<2x8x8xf32>
    %106 = arith.divf %102, %105 : vector<2x8x8xf32>
    %107 = arith.truncf %106 : vector<2x8x8xf32> to vector<2x8x8xbf16>
    "tpu.trace_start"() <{level = 10 : i32, message = "bqk,bkd->bqd"}> : () -> ()
    %cst_26 = arith.constant dense<0.000000e+00> : vector<2x8x8xf32>
    %108 = tpu.matmul %107, %93, %cst_26 {dimension_numbers = #tpu.dot_dimension_numbers<[2], [1], [1], [2], [0, 0, 0, 1, 1, 2], [0], [0]>} : vector<2x8x8xbf16>, vector<2x8x8xbf16>, vector<2x8x8xf32> -> vector<2x8x8xf32>
    "tpu.trace_stop"() : () -> ()
    %109 = vector.shape_cast %108 : vector<2x8x8xf32> to vector<16x8xf32>
    %110 = vector.extract_strided_slice %21 {offsets = [0, 24], sizes = [16, 8], strides = [1, 1]} : vector<16x32xf32> to vector<16x8xf32>
    %111 = vector.shape_cast %110 : vector<16x8xf32> to vector<2x8x8xf32>
    %112 = arith.truncf %111 : vector<2x8x8xf32> to vector<2x8x8xbf16>
    %113 = vector.extract_strided_slice %33 {offsets = [0, 24], sizes = [16, 8], strides = [1, 1]} : vector<16x32xf32> to vector<16x8xf32>
    %114 = vector.shape_cast %113 : vector<16x8xf32> to vector<2x8x8xf32>
    %115 = arith.truncf %114 : vector<2x8x8xf32> to vector<2x8x8xbf16>
    %116 = vector.extract_strided_slice %7 {offsets = [0, 24], sizes = [16, 8], strides = [1, 1]} : vector<16x32xf32> to vector<16x8xf32>
    %117 = vector.shape_cast %116 : vector<16x8xf32> to vector<2x8x8xf32>
    %118 = arith.truncf %117 : vector<2x8x8xf32> to vector<2x8x8xbf16>
    "tpu.trace_start"() <{level = 10 : i32, message = "bqd,bkd->bqk"}> : () -> ()
    %cst_27 = arith.constant dense<0.000000e+00> : vector<2x8x8xf32>
    %119 = tpu.matmul %112, %115, %cst_27 {dimension_numbers = #tpu.dot_dimension_numbers<[2], [2], [1], [1], [0, 0, 0, 1, 1, 1], [0], [0]>} : vector<2x8x8xbf16>, vector<2x8x8xbf16>, vector<2x8x8xf32> -> vector<2x8x8xf32>
    "tpu.trace_stop"() : () -> ()
    %cst_28 = arith.constant 0.353553385 : f32
    %120 = vector.broadcast %cst_28 : f32 to vector<2x8x8xf32>
    %121 = arith.mulf %119, %120 : vector<2x8x8xf32>
    %122 = arith.addf %121, %34 : vector<2x8x8xf32>
    %cst_29 = arith.constant dense<0xFF800000> : vector<2x8xf32>
    %123 = vector.multi_reduction <maximumf>, %122, %cst_29 [2] : vector<2x8x8xf32> to vector<2x8xf32>
    %124 = vector.shape_cast %123 : vector<2x8xf32> to vector<2x8x1xf32>
    %125 = vector.broadcast %124 : vector<2x8x1xf32> to vector<2x8x8xf32>
    %126 = arith.subf %122, %125 : vector<2x8x8xf32>
    %127 = math.exp %126 : vector<2x8x8xf32>
    %cst_30 = arith.constant dense<0.000000e+00> : vector<2x8xf32>
    %128 = vector.multi_reduction <add>, %127, %cst_30 [2] : vector<2x8x8xf32> to vector<2x8xf32>
    %129 = vector.shape_cast %128 : vector<2x8xf32> to vector<2x8x1xf32>
    %130 = vector.broadcast %129 : vector<2x8x1xf32> to vector<2x8x8xf32>
    %131 = arith.divf %127, %130 : vector<2x8x8xf32>
    %132 = arith.truncf %131 : vector<2x8x8xf32> to vector<2x8x8xbf16>
    "tpu.trace_start"() <{level = 10 : i32, message = "bqk,bkd->bqd"}> : () -> ()
    %cst_31 = arith.constant dense<0.000000e+00> : vector<2x8x8xf32>
    %133 = tpu.matmul %132, %118, %cst_31 {dimension_numbers = #tpu.dot_dimension_numbers<[2], [1], [1], [2], [0, 0, 0, 1, 1, 2], [0], [0]>} : vector<2x8x8xbf16>, vector<2x8x8xbf16>, vector<2x8x8xf32> -> vector<2x8x8xf32>
    "tpu.trace_stop"() : () -> ()
    %134 = vector.shape_cast %133 : vector<2x8x8xf32> to vector<16x8xf32>
    %135 = tpu.concatenate %59, %84, %109, %134 in 1 : vector<16x8xf32>, vector<16x8xf32>, vector<16x8xf32>, vector<16x8xf32> -> vector<16x32xf32>
    %136 = arith.truncf %135 : vector<16x32xf32> to vector<16x32xbf16>
    %c0_32 = arith.constant 0 : index
    %c0_33 = arith.constant 0 : index
    %137 = vector.load %arg7[%c0_32, %c0_33] : memref<32x32xbf16, #tpu.memory_space<vmem>>, vector<32x32xbf16>
    %cst_34 = arith.constant dense<0.000000e+00> : vector<16x32xf32>
    %138 = tpu.matmul %136, %137, %cst_34 {dimension_numbers = #tpu.dot_dimension_numbers<[1], [0], [0], [1], [0, 0, 1, 1], [], []>} : vector<16x32xbf16>, vector<32x32xbf16>, vector<16x32xf32> -> vector<16x32xf32>
    %139 = arith.addf %0, %138 : vector<16x32xf32>
    %c0_35 = arith.constant 0 : index
    %c0_36 = arith.constant 0 : index
    %140 = vector.load %arg15[%c0_35, %c0_36] : memref<1x32xf32, #tpu.memory_space<vmem>>, vector<1x32xf32>
    %c0_37 = arith.constant 0 : index
    %c0_38 = arith.constant 0 : index
    %141 = vector.load %arg16[%c0_37, %c0_38] : memref<1x32xf32, #tpu.memory_space<vmem>>, vector<1x32xf32>
    %cst_39 = arith.constant dense<0.000000e+00> : vector<16xf32>
    %142 = vector.multi_reduction <add>, %139, %cst_39 [1] : vector<16x32xf32> to vector<16xf32>
    %143 = vector.shape_cast %142 : vector<16xf32> to vector<16x1xf32>
    %cst_40 = arith.constant 3.200000e+01 : f32
    %144 = vector.broadcast %cst_40 : f32 to vector<16x1xf32>
    %145 = arith.divf %143, %144 : vector<16x1xf32>
    %146 = vector.broadcast %145 : vector<16x1xf32> to vector<16x32xf32>
    %147 = arith.subf %139, %146 : vector<16x32xf32>
    %148 = arith.mulf %147, %147 : vector<16x32xf32>
    %cst_41 = arith.constant dense<0.000000e+00> : vector<16xf32>
    %149 = vector.multi_reduction <add>, %148, %cst_41 [1] : vector<16x32xf32> to vector<16xf32>
    %150 = vector.shape_cast %149 : vector<16xf32> to vector<16x1xf32>
    %cst_42 = arith.constant 3.200000e+01 : f32
    %151 = vector.broadcast %cst_42 : f32 to vector<16x1xf32>
    %152 = arith.divf %150, %151 : vector<16x1xf32>
    %153 = vector.broadcast %145 : vector<16x1xf32> to vector<16x32xf32>
    %154 = arith.subf %139, %153 : vector<16x32xf32>
    %cst_43 = arith.constant 9.99999974E-6 : f32
    %155 = vector.broadcast %cst_43 : f32 to vector<16x1xf32>
    %156 = arith.addf %152, %155 : vector<16x1xf32>
    %157 = math.rsqrt %156 : vector<16x1xf32>
    %158 = vector.broadcast %157 : vector<16x1xf32> to vector<16x32xf32>
    %159 = arith.mulf %154, %158 : vector<16x32xf32>
    %160 = vector.broadcast %140 : vector<1x32xf32> to vector<16x32xf32>
    %161 = arith.mulf %159, %160 : vector<16x32xf32>
    %162 = vector.broadcast %141 : vector<1x32xf32> to vector<16x32xf32>
    %163 = arith.addf %161, %162 : vector<16x32xf32>
    %164 = arith.truncf %163 : vector<16x32xf32> to vector<16x32xbf16>
    %c0_44 = arith.constant 0 : index
    %c0_45 = arith.constant 0 : index
    %165 = vector.load %arg8[%c0_44, %c0_45] : memref<32x32xbf16, #tpu.memory_space<vmem>>, vector<32x32xbf16>
    %cst_46 = arith.constant dense<0.000000e+00> : vector<16x32xf32>
    %166 = tpu.matmul %164, %165, %cst_46 {dimension_numbers = #tpu.dot_dimension_numbers<[1], [0], [0], [1], [0, 0, 1, 1], [], []>} : vector<16x32xbf16>, vector<32x32xbf16>, vector<16x32xf32> -> vector<16x32xf32>
    %c0_47 = arith.constant 0 : index
    %c0_48 = arith.constant 0 : index
    %167 = vector.load %arg9[%c0_47, %c0_48] : memref<32x64xbf16, #tpu.memory_space<vmem>>, vector<32x64xbf16>
    %cst_49 = arith.constant dense<0.000000e+00> : vector<16x64xf32>
    %168 = tpu.matmul %1, %167, %cst_49 {dimension_numbers = #tpu.dot_dimension_numbers<[1], [0], [0], [1], [0, 0, 1, 1], [], []>} : vector<16x32xbf16>, vector<32x64xbf16>, vector<16x64xf32> -> vector<16x64xf32>
    %169 = vector.extract_strided_slice %168 {offsets = [0, 0], sizes = [16, 32], strides = [1, 1]} : vector<16x64xf32> to vector<16x32xf32>
    %170 = vector.extract_strided_slice %168 {offsets = [0, 32], sizes = [16, 32], strides = [1, 1]} : vector<16x64xf32> to vector<16x32xf32>
    %c0_50 = arith.constant 0 : index
    %c0_51 = arith.constant 0 : index
    %c0_52 = arith.constant 0 : index
    %171 = vector.load %arg5[%c0_50, %c0_51, %c0_52] : memref<2x8x8xf32, #tpu.memory_space<vmem>>, vector<2x8x8xf32>
    %172 = vector.extract_strided_slice %166 {offsets = [0, 0], sizes = [16, 8], strides = [1, 1]} : vector<16x32xf32> to vector<16x8xf32>
    %173 = vector.shape_cast %172 : vector<16x8xf32> to vector<2x8x8xf32>
    %174 = arith.truncf %173 : vector<2x8x8xf32> to vector<2x8x8xbf16>
    %175 = vector.extract_strided_slice %169 {offsets = [0, 0], sizes = [16, 8], strides = [1, 1]} : vector<16x32xf32> to vector<16x8xf32>
    %176 = vector.shape_cast %175 : vector<16x8xf32> to vector<2x8x8xf32>
    %177 = arith.truncf %176 : vector<2x8x8xf32> to vector<2x8x8xbf16>
    %178 = vector.extract_strided_slice %170 {offsets = [0, 0], sizes = [16, 8], strides = [1, 1]} : vector<16x32xf32> to vector<16x8xf32>
    %179 = vector.shape_cast %178 : vector<16x8xf32> to vector<2x8x8xf32>
    %180 = arith.truncf %179 : vector<2x8x8xf32> to vector<2x8x8xbf16>
    "tpu.trace_start"() <{level = 10 : i32, message = "bqd,bkd->bqk"}> : () -> ()
    %cst_53 = arith.constant dense<0.000000e+00> : vector<2x8x8xf32>
    %181 = tpu.matmul %174, %177, %cst_53 {dimension_numbers = #tpu.dot_dimension_numbers<[2], [2], [1], [1], [0, 0, 0, 1, 1, 1], [0], [0]>} : vector<2x8x8xbf16>, vector<2x8x8xbf16>, vector<2x8x8xf32> -> vector<2x8x8xf32>
    "tpu.trace_stop"() : () -> ()
    %cst_54 = arith.constant 0.353553385 : f32
    %182 = vector.broadcast %cst_54 : f32 to vector<2x8x8xf32>
    %183 = arith.mulf %181, %182 : vector<2x8x8xf32>
    %184 = arith.addf %183, %171 : vector<2x8x8xf32>
    %cst_55 = arith.constant dense<0xFF800000> : vector<2x8xf32>
    %185 = vector.multi_reduction <maximumf>, %184, %cst_55 [2] : vector<2x8x8xf32> to vector<2x8xf32>
    %186 = vector.shape_cast %185 : vector<2x8xf32> to vector<2x8x1xf32>
    %187 = vector.broadcast %186 : vector<2x8x1xf32> to vector<2x8x8xf32>
    %188 = arith.subf %184, %187 : vector<2x8x8xf32>
    %189 = math.exp %188 : vector<2x8x8xf32>
    %cst_56 = arith.constant dense<0.000000e+00> : vector<2x8xf32>
    %190 = vector.multi_reduction <add>, %189, %cst_56 [2] : vector<2x8x8xf32> to vector<2x8xf32>
    %191 = vector.shape_cast %190 : vector<2x8xf32> to vector<2x8x1xf32>
    %192 = vector.broadcast %191 : vector<2x8x1xf32> to vector<2x8x8xf32>
    %193 = arith.divf %189, %192 : vector<2x8x8xf32>
    %194 = arith.truncf %193 : vector<2x8x8xf32> to vector<2x8x8xbf16>
    "tpu.trace_start"() <{level = 10 : i32, message = "bqk,bkd->bqd"}> : () -> ()
    %cst_57 = arith.constant dense<0.000000e+00> : vector<2x8x8xf32>
    %195 = tpu.matmul %194, %180, %cst_57 {dimension_numbers = #tpu.dot_dimension_numbers<[2], [1], [1], [2], [0, 0, 0, 1, 1, 2], [0], [0]>} : vector<2x8x8xbf16>, vector<2x8x8xbf16>, vector<2x8x8xf32> -> vector<2x8x8xf32>
    "tpu.trace_stop"() : () -> ()
    %196 = vector.shape_cast %195 : vector<2x8x8xf32> to vector<16x8xf32>
    %197 = vector.extract_strided_slice %166 {offsets = [0, 8], sizes = [16, 8], strides = [1, 1]} : vector<16x32xf32> to vector<16x8xf32>
    %198 = vector.shape_cast %197 : vector<16x8xf32> to vector<2x8x8xf32>
    %199 = arith.truncf %198 : vector<2x8x8xf32> to vector<2x8x8xbf16>
    %200 = vector.extract_strided_slice %169 {offsets = [0, 8], sizes = [16, 8], strides = [1, 1]} : vector<16x32xf32> to vector<16x8xf32>
    %201 = vector.shape_cast %200 : vector<16x8xf32> to vector<2x8x8xf32>
    %202 = arith.truncf %201 : vector<2x8x8xf32> to vector<2x8x8xbf16>
    %203 = vector.extract_strided_slice %170 {offsets = [0, 8], sizes = [16, 8], strides = [1, 1]} : vector<16x32xf32> to vector<16x8xf32>
    %204 = vector.shape_cast %203 : vector<16x8xf32> to vector<2x8x8xf32>
    %205 = arith.truncf %204 : vector<2x8x8xf32> to vector<2x8x8xbf16>
    "tpu.trace_start"() <{level = 10 : i32, message = "bqd,bkd->bqk"}> : () -> ()
    %cst_58 = arith.constant dense<0.000000e+00> : vector<2x8x8xf32>
    %206 = tpu.matmul %199, %202, %cst_58 {dimension_numbers = #tpu.dot_dimension_numbers<[2], [2], [1], [1], [0, 0, 0, 1, 1, 1], [0], [0]>} : vector<2x8x8xbf16>, vector<2x8x8xbf16>, vector<2x8x8xf32> -> vector<2x8x8xf32>
    "tpu.trace_stop"() : () -> ()
    %cst_59 = arith.constant 0.353553385 : f32
    %207 = vector.broadcast %cst_59 : f32 to vector<2x8x8xf32>
    %208 = arith.mulf %206, %207 : vector<2x8x8xf32>
    %209 = arith.addf %208, %171 : vector<2x8x8xf32>
    %cst_60 = arith.constant dense<0xFF800000> : vector<2x8xf32>
    %210 = vector.multi_reduction <maximumf>, %209, %cst_60 [2] : vector<2x8x8xf32> to vector<2x8xf32>
    %211 = vector.shape_cast %210 : vector<2x8xf32> to vector<2x8x1xf32>
    %212 = vector.broadcast %211 : vector<2x8x1xf32> to vector<2x8x8xf32>
    %213 = arith.subf %209, %212 : vector<2x8x8xf32>
    %214 = math.exp %213 : vector<2x8x8xf32>
    %cst_61 = arith.constant dense<0.000000e+00> : vector<2x8xf32>
    %215 = vector.multi_reduction <add>, %214, %cst_61 [2] : vector<2x8x8xf32> to vector<2x8xf32>
    %216 = vector.shape_cast %215 : vector<2x8xf32> to vector<2x8x1xf32>
    %217 = vector.broadcast %216 : vector<2x8x1xf32> to vector<2x8x8xf32>
    %218 = arith.divf %214, %217 : vector<2x8x8xf32>
    %219 = arith.truncf %218 : vector<2x8x8xf32> to vector<2x8x8xbf16>
    "tpu.trace_start"() <{level = 10 : i32, message = "bqk,bkd->bqd"}> : () -> ()
    %cst_62 = arith.constant dense<0.000000e+00> : vector<2x8x8xf32>
    %220 = tpu.matmul %219, %205, %cst_62 {dimension_numbers = #tpu.dot_dimension_numbers<[2], [1], [1], [2], [0, 0, 0, 1, 1, 2], [0], [0]>} : vector<2x8x8xbf16>, vector<2x8x8xbf16>, vector<2x8x8xf32> -> vector<2x8x8xf32>
    "tpu.trace_stop"() : () -> ()
    %221 = vector.shape_cast %220 : vector<2x8x8xf32> to vector<16x8xf32>
    %222 = vector.extract_strided_slice %166 {offsets = [0, 16], sizes = [16, 8], strides = [1, 1]} : vector<16x32xf32> to vector<16x8xf32>
    %223 = vector.shape_cast %222 : vector<16x8xf32> to vector<2x8x8xf32>
    %224 = arith.truncf %223 : vector<2x8x8xf32> to vector<2x8x8xbf16>
    %225 = vector.extract_strided_slice %169 {offsets = [0, 16], sizes = [16, 8], strides = [1, 1]} : vector<16x32xf32> to vector<16x8xf32>
    %226 = vector.shape_cast %225 : vector<16x8xf32> to vector<2x8x8xf32>
    %227 = arith.truncf %226 : vector<2x8x8xf32> to vector<2x8x8xbf16>
    %228 = vector.extract_strided_slice %170 {offsets = [0, 16], sizes = [16, 8], strides = [1, 1]} : vector<16x32xf32> to vector<16x8xf32>
    %229 = vector.shape_cast %228 : vector<16x8xf32> to vector<2x8x8xf32>
    %230 = arith.truncf %229 : vector<2x8x8xf32> to vector<2x8x8xbf16>
    "tpu.trace_start"() <{level = 10 : i32, message = "bqd,bkd->bqk"}> : () -> ()
    %cst_63 = arith.constant dense<0.000000e+00> : vector<2x8x8xf32>
    %231 = tpu.matmul %224, %227, %cst_63 {dimension_numbers = #tpu.dot_dimension_numbers<[2], [2], [1], [1], [0, 0, 0, 1, 1, 1], [0], [0]>} : vector<2x8x8xbf16>, vector<2x8x8xbf16>, vector<2x8x8xf32> -> vector<2x8x8xf32>
    "tpu.trace_stop"() : () -> ()
    %cst_64 = arith.constant 0.353553385 : f32
    %232 = vector.broadcast %cst_64 : f32 to vector<2x8x8xf32>
    %233 = arith.mulf %231, %232 : vector<2x8x8xf32>
    %234 = arith.addf %233, %171 : vector<2x8x8xf32>
    %cst_65 = arith.constant dense<0xFF800000> : vector<2x8xf32>
    %235 = vector.multi_reduction <maximumf>, %234, %cst_65 [2] : vector<2x8x8xf32> to vector<2x8xf32>
    %236 = vector.shape_cast %235 : vector<2x8xf32> to vector<2x8x1xf32>
    %237 = vector.broadcast %236 : vector<2x8x1xf32> to vector<2x8x8xf32>
    %238 = arith.subf %234, %237 : vector<2x8x8xf32>
    %239 = math.exp %238 : vector<2x8x8xf32>
    %cst_66 = arith.constant dense<0.000000e+00> : vector<2x8xf32>
    %240 = vector.multi_reduction <add>, %239, %cst_66 [2] : vector<2x8x8xf32> to vector<2x8xf32>
    %241 = vector.shape_cast %240 : vector<2x8xf32> to vector<2x8x1xf32>
    %242 = vector.broadcast %241 : vector<2x8x1xf32> to vector<2x8x8xf32>
    %243 = arith.divf %239, %242 : vector<2x8x8xf32>
    %244 = arith.truncf %243 : vector<2x8x8xf32> to vector<2x8x8xbf16>
    "tpu.trace_start"() <{level = 10 : i32, message = "bqk,bkd->bqd"}> : () -> ()
    %cst_67 = arith.constant dense<0.000000e+00> : vector<2x8x8xf32>
    %245 = tpu.matmul %244, %230, %cst_67 {dimension_numbers = #tpu.dot_dimension_numbers<[2], [1], [1], [2], [0, 0, 0, 1, 1, 2], [0], [0]>} : vector<2x8x8xbf16>, vector<2x8x8xbf16>, vector<2x8x8xf32> -> vector<2x8x8xf32>
    "tpu.trace_stop"() : () -> ()
    %246 = vector.shape_cast %245 : vector<2x8x8xf32> to vector<16x8xf32>
    %247 = vector.extract_strided_slice %166 {offsets = [0, 24], sizes = [16, 8], strides = [1, 1]} : vector<16x32xf32> to vector<16x8xf32>
    %248 = vector.shape_cast %247 : vector<16x8xf32> to vector<2x8x8xf32>
    %249 = arith.truncf %248 : vector<2x8x8xf32> to vector<2x8x8xbf16>
    %250 = vector.extract_strided_slice %169 {offsets = [0, 24], sizes = [16, 8], strides = [1, 1]} : vector<16x32xf32> to vector<16x8xf32>
    %251 = vector.shape_cast %250 : vector<16x8xf32> to vector<2x8x8xf32>
    %252 = arith.truncf %251 : vector<2x8x8xf32> to vector<2x8x8xbf16>
    %253 = vector.extract_strided_slice %170 {offsets = [0, 24], sizes = [16, 8], strides = [1, 1]} : vector<16x32xf32> to vector<16x8xf32>
    %254 = vector.shape_cast %253 : vector<16x8xf32> to vector<2x8x8xf32>
    %255 = arith.truncf %254 : vector<2x8x8xf32> to vector<2x8x8xbf16>
    "tpu.trace_start"() <{level = 10 : i32, message = "bqd,bkd->bqk"}> : () -> ()
    %cst_68 = arith.constant dense<0.000000e+00> : vector<2x8x8xf32>
    %256 = tpu.matmul %249, %252, %cst_68 {dimension_numbers = #tpu.dot_dimension_numbers<[2], [2], [1], [1], [0, 0, 0, 1, 1, 1], [0], [0]>} : vector<2x8x8xbf16>, vector<2x8x8xbf16>, vector<2x8x8xf32> -> vector<2x8x8xf32>
    "tpu.trace_stop"() : () -> ()
    %cst_69 = arith.constant 0.353553385 : f32
    %257 = vector.broadcast %cst_69 : f32 to vector<2x8x8xf32>
    %258 = arith.mulf %256, %257 : vector<2x8x8xf32>
    %259 = arith.addf %258, %171 : vector<2x8x8xf32>
    %cst_70 = arith.constant dense<0xFF800000> : vector<2x8xf32>
    %260 = vector.multi_reduction <maximumf>, %259, %cst_70 [2] : vector<2x8x8xf32> to vector<2x8xf32>
    %261 = vector.shape_cast %260 : vector<2x8xf32> to vector<2x8x1xf32>
    %262 = vector.broadcast %261 : vector<2x8x1xf32> to vector<2x8x8xf32>
    %263 = arith.subf %259, %262 : vector<2x8x8xf32>
    %264 = math.exp %263 : vector<2x8x8xf32>
    %cst_71 = arith.constant dense<0.000000e+00> : vector<2x8xf32>
    %265 = vector.multi_reduction <add>, %264, %cst_71 [2] : vector<2x8x8xf32> to vector<2x8xf32>
    %266 = vector.shape_cast %265 : vector<2x8xf32> to vector<2x8x1xf32>
    %267 = vector.broadcast %266 : vector<2x8x1xf32> to vector<2x8x8xf32>
    %268 = arith.divf %264, %267 : vector<2x8x8xf32>
    %269 = arith.truncf %268 : vector<2x8x8xf32> to vector<2x8x8xbf16>
    "tpu.trace_start"() <{level = 10 : i32, message = "bqk,bkd->bqd"}> : () -> ()
    %cst_72 = arith.constant dense<0.000000e+00> : vector<2x8x8xf32>
    %270 = tpu.matmul %269, %255, %cst_72 {dimension_numbers = #tpu.dot_dimension_numbers<[2], [1], [1], [2], [0, 0, 0, 1, 1, 2], [0], [0]>} : vector<2x8x8xbf16>, vector<2x8x8xbf16>, vector<2x8x8xf32> -> vector<2x8x8xf32>
    "tpu.trace_stop"() : () -> ()
    %271 = vector.shape_cast %270 : vector<2x8x8xf32> to vector<16x8xf32>
    %272 = tpu.concatenate %196, %221, %246, %271 in 1 : vector<16x8xf32>, vector<16x8xf32>, vector<16x8xf32>, vector<16x8xf32> -> vector<16x32xf32>
    %273 = arith.truncf %272 : vector<16x32xf32> to vector<16x32xbf16>
    %c0_73 = arith.constant 0 : index
    %c0_74 = arith.constant 0 : index
    %274 = vector.load %arg10[%c0_73, %c0_74] : memref<32x32xbf16, #tpu.memory_space<vmem>>, vector<32x32xbf16>
    %cst_75 = arith.constant dense<0.000000e+00> : vector<16x32xf32>
    %275 = tpu.matmul %273, %274, %cst_75 {dimension_numbers = #tpu.dot_dimension_numbers<[1], [0], [0], [1], [0, 0, 1, 1], [], []>} : vector<16x32xbf16>, vector<32x32xbf16>, vector<16x32xf32> -> vector<16x32xf32>
    %276 = arith.addf %163, %275 : vector<16x32xf32>
    %c0_76 = arith.constant 0 : index
    %c0_77 = arith.constant 0 : index
    %277 = vector.load %arg17[%c0_76, %c0_77] : memref<1x32xf32, #tpu.memory_space<vmem>>, vector<1x32xf32>
    %c0_78 = arith.constant 0 : index
    %c0_79 = arith.constant 0 : index
    %278 = vector.load %arg18[%c0_78, %c0_79] : memref<1x32xf32, #tpu.memory_space<vmem>>, vector<1x32xf32>
    %cst_80 = arith.constant dense<0.000000e+00> : vector<16xf32>
    %279 = vector.multi_reduction <add>, %276, %cst_80 [1] : vector<16x32xf32> to vector<16xf32>
    %280 = vector.shape_cast %279 : vector<16xf32> to vector<16x1xf32>
    %cst_81 = arith.constant 3.200000e+01 : f32
    %281 = vector.broadcast %cst_81 : f32 to vector<16x1xf32>
    %282 = arith.divf %280, %281 : vector<16x1xf32>
    %283 = vector.broadcast %282 : vector<16x1xf32> to vector<16x32xf32>
    %284 = arith.subf %276, %283 : vector<16x32xf32>
    %285 = arith.mulf %284, %284 : vector<16x32xf32>
    %cst_82 = arith.constant dense<0.000000e+00> : vector<16xf32>
    %286 = vector.multi_reduction <add>, %285, %cst_82 [1] : vector<16x32xf32> to vector<16xf32>
    %287 = vector.shape_cast %286 : vector<16xf32> to vector<16x1xf32>
    %cst_83 = arith.constant 3.200000e+01 : f32
    %288 = vector.broadcast %cst_83 : f32 to vector<16x1xf32>
    %289 = arith.divf %287, %288 : vector<16x1xf32>
    %290 = vector.broadcast %282 : vector<16x1xf32> to vector<16x32xf32>
    %291 = arith.subf %276, %290 : vector<16x32xf32>
    %cst_84 = arith.constant 9.99999974E-6 : f32
    %292 = vector.broadcast %cst_84 : f32 to vector<16x1xf32>
    %293 = arith.addf %289, %292 : vector<16x1xf32>
    %294 = math.rsqrt %293 : vector<16x1xf32>
    %295 = vector.broadcast %294 : vector<16x1xf32> to vector<16x32xf32>
    %296 = arith.mulf %291, %295 : vector<16x32xf32>
    %297 = vector.broadcast %277 : vector<1x32xf32> to vector<16x32xf32>
    %298 = arith.mulf %296, %297 : vector<16x32xf32>
    %299 = vector.broadcast %278 : vector<1x32xf32> to vector<16x32xf32>
    %300 = arith.addf %298, %299 : vector<16x32xf32>
    %301 = arith.truncf %300 : vector<16x32xf32> to vector<16x32xbf16>
    %c0_85 = arith.constant 0 : index
    %c0_86 = arith.constant 0 : index
    %302 = vector.load %arg11[%c0_85, %c0_86] : memref<32x64xbf16, #tpu.memory_space<vmem>>, vector<32x64xbf16>
    %cst_87 = arith.constant dense<0.000000e+00> : vector<16x64xf32>
    %303 = tpu.matmul %301, %302, %cst_87 {dimension_numbers = #tpu.dot_dimension_numbers<[1], [0], [0], [1], [0, 0, 1, 1], [], []>} : vector<16x32xbf16>, vector<32x64xbf16>, vector<16x64xf32> -> vector<16x64xf32>
    %c0_88 = arith.constant 0 : index
    %c0_89 = arith.constant 0 : index
    %304 = vector.load %arg12[%c0_88, %c0_89] : memref<1x64xf32, #tpu.memory_space<vmem>>, vector<1x64xf32>
    %305 = vector.broadcast %304 : vector<1x64xf32> to vector<16x64xf32>
    %306 = arith.addf %303, %305 : vector<16x64xf32>
    %cst_90 = arith.constant 0.000000e+00 : f32
    %307 = vector.broadcast %cst_90 : f32 to vector<16x64xf32>
    %308 = arith.maximumf %306, %307 : vector<16x64xf32>
    %309 = arith.truncf %308 : vector<16x64xf32> to vector<16x64xbf16>
    %c0_91 = arith.constant 0 : index
    %c0_92 = arith.constant 0 : index
    %310 = vector.load %arg13[%c0_91, %c0_92] : memref<64x32xbf16, #tpu.memory_space<vmem>>, vector<64x32xbf16>
    %cst_93 = arith.constant dense<0.000000e+00> : vector<16x32xf32>
    %311 = tpu.matmul %309, %310, %cst_93 {dimension_numbers = #tpu.dot_dimension_numbers<[1], [0], [0], [1], [0, 0, 1, 1], [], []>} : vector<16x64xbf16>, vector<64x32xbf16>, vector<16x32xf32> -> vector<16x32xf32>
    %c0_94 = arith.constant 0 : index
    %c0_95 = arith.constant 0 : index
    %312 = vector.load %arg14[%c0_94, %c0_95] : memref<1x32xf32, #tpu.memory_space<vmem>>, vector<1x32xf32>
    %313 = vector.broadcast %312 : vector<1x32xf32> to vector<16x32xf32>
    %314 = arith.addf %311, %313 : vector<16x32xf32>
    %315 = arith.addf %300, %314 : vector<16x32xf32>
    %c0_96 = arith.constant 0 : index
    %c0_97 = arith.constant 0 : index
    %316 = vector.load %arg19[%c0_96, %c0_97] : memref<1x32xf32, #tpu.memory_space<vmem>>, vector<1x32xf32>
    %c0_98 = arith.constant 0 : index
    %c0_99 = arith.constant 0 : index
    %317 = vector.load %arg20[%c0_98, %c0_99] : memref<1x32xf32, #tpu.memory_space<vmem>>, vector<1x32xf32>
    %cst_100 = arith.constant dense<0.000000e+00> : vector<16xf32>
    %318 = vector.multi_reduction <add>, %315, %cst_100 [1] : vector<16x32xf32> to vector<16xf32>
    %319 = vector.shape_cast %318 : vector<16xf32> to vector<16x1xf32>
    %cst_101 = arith.constant 3.200000e+01 : f32
    %320 = vector.broadcast %cst_101 : f32 to vector<16x1xf32>
    %321 = arith.divf %319, %320 : vector<16x1xf32>
    %322 = vector.broadcast %321 : vector<16x1xf32> to vector<16x32xf32>
    %323 = arith.subf %315, %322 : vector<16x32xf32>
    %324 = arith.mulf %323, %323 : vector<16x32xf32>
    %cst_102 = arith.constant dense<0.000000e+00> : vector<16xf32>
    %325 = vector.multi_reduction <add>, %324, %cst_102 [1] : vector<16x32xf32> to vector<16xf32>
    %326 = vector.shape_cast %325 : vector<16xf32> to vector<16x1xf32>
    %cst_103 = arith.constant 3.200000e+01 : f32
    %327 = vector.broadcast %cst_103 : f32 to vector<16x1xf32>
    %328 = arith.divf %326, %327 : vector<16x1xf32>
    %329 = vector.broadcast %321 : vector<16x1xf32> to vector<16x32xf32>
    %330 = arith.subf %315, %329 : vector<16x32xf32>
    %cst_104 = arith.constant 9.99999974E-6 : f32
    %331 = vector.broadcast %cst_104 : f32 to vector<16x1xf32>
    %332 = arith.addf %328, %331 : vector<16x1xf32>
    %333 = math.rsqrt %332 : vector<16x1xf32>
    %334 = vector.broadcast %333 : vector<16x1xf32> to vector<16x32xf32>
    %335 = arith.mulf %330, %334 : vector<16x32xf32>
    %336 = vector.broadcast %316 : vector<1x32xf32> to vector<16x32xf32>
    %337 = arith.mulf %335, %336 : vector<16x32xf32>
    %338 = vector.broadcast %317 : vector<1x32xf32> to vector<16x32xf32>
    %339 = arith.addf %337, %338 : vector<16x32xf32>
    %c0_105 = arith.constant 0 : index
    %c0_106 = arith.constant 0 : index
    %340 = vector.load %arg21[%c0_105, %c0_106] : memref<16x32xf32, #tpu.memory_space<vmem>>, vector<16x32xf32>
    tpu.vector_store %arg21[%c0_105, %c0_106], %339 {strides = array<i32>} : memref<16x32xf32, #tpu.memory_space<vmem>>, vector<16x32xf32>,
    return
  }
}

</mosaic_0001>

<llo_original>
// kernel: tpu_custom_call.1
$region0: #{tpu_custom_call.1}
  #allocation0 [shape = 'u32[]', space=smem, size = 0x4, offset = 0x4, fixed_abs, tag = 'smem constant byte address 0x4 - core index']
  #allocation1 [shape = 'u32[144,128]{1,0:T(1,128)}', space=vmem, size = 0x12000, scoped, tag = 'internal scratch']
  %s0 = inlined_call_operand.vmem [shape: f32[16,32], index: 0, kind: input, shape index: {}]
  %s1 = inlined_call_operand.hbm [shape: bf16[16,32], index: 1, kind: input, shape index: {}]
  %s2 = inlined_call_operand.vmem [shape: f32[16,32], index: 2, kind: input, shape index: {}]
  %s3 = inlined_call_operand.vmem [shape: f32[16,32], index: 3, kind: input, shape index: {}]
  %s4 = inlined_call_operand.hbm [shape: f32[2,8,8], index: 4, kind: input, shape index: {}]
  %s5 = inlined_call_operand.hbm [shape: f32[2,8,8], index: 5, kind: input, shape index: {}]
  %s6 = inlined_call_operand.hbm [shape: bf16[32,96], index: 6, kind: input, shape index: {}]
  %s7 = inlined_call_operand.hbm [shape: bf16[32,32], index: 7, kind: input, shape index: {}]
  %s8 = inlined_call_operand.hbm [shape: bf16[32,32], index: 8, kind: input, shape index: {}]
  %s9 = inlined_call_operand.vmem [shape: bf16[32,64], index: 9, kind: input, shape index: {}]
  %s10 = inlined_call_operand.hbm [shape: bf16[32,32], index: 10, kind: input, shape index: {}]
  %s11 = inlined_call_operand.hbm [shape: bf16[32,64], index: 11, kind: input, shape index: {}]
  %s12 = inlined_call_operand.vmem [shape: f32[1,64], index: 12, kind: input, shape index: {}]
  %s13 = inlined_call_operand.vmem [shape: bf16[64,32], index: 13, kind: input, shape index: {}]
  %s14 = inlined_call_operand.vmem [shape: f32[1,32], index: 14, kind: input, shape index: {}]
  %s15 = inlined_call_operand.vmem [shape: f32[1,32], index: 15, kind: input, shape index: {}]
  %s16 = inlined_call_operand.vmem [shape: f32[1,32], index: 16, kind: input, shape index: {}]
  %s17 = inlined_call_operand.vmem [shape: f32[1,32], index: 17, kind: input, shape index: {}]
  %s18 = inlined_call_operand.vmem [shape: f32[1,32], index: 18, kind: input, shape index: {}]
  %s19 = inlined_call_operand.vmem [shape: f32[1,32], index: 19, kind: input, shape index: {}]
  %s20 = inlined_call_operand.vmem [shape: f32[1,32], index: 20, kind: input, shape index: {}]
  %s21 = inlined_call_operand.hbm [shape: f32[16,32], index: 21, kind: output, shape index: {}]
  %s22 = sld [smem:[#allocation0]]
  $region126: #{tpu_custom_call.1} parent=0
    _
  %s24 = ssub.s32 1, %s22
  %s25 = scalar_select 0, %s24, %s22
  $region1: #{tpu_custom_call.1} parent=0
    #allocation2 [shape = 'u8[4096]{0}', space=vmem, size = 0x1000, scoped, tag = 'input window, operand 1, single buffered']
    #allocation3 [shape = 's32[1]{0}', space=sflag, size = 0x4, scoped, tag = 'scoped memory for tpu_custom_call.1']
    #allocation4 [shape = 's32[1]{0}', space=sflag, size = 0x4, scoped, tag = 'scoped memory for tpu_custom_call.1']
    #allocation5 [shape = 'u8[8192]{0}', space=vmem, size = 0x2000, scoped, tag = 'input window, operand 4, single buffered']
    #allocation6 [shape = 's32[1]{0}', space=sflag, size = 0x4, scoped, tag = 'scoped memory for tpu_custom_call.1']
    #allocation7 [shape = 'u8[8192]{0}', space=vmem, size = 0x2000, scoped, tag = 'input window, operand 5, single buffered']
    #allocation8 [shape = 'u8[8192]{0}', space=vmem, size = 0x2000, scoped, tag = 'input window, operand 6, single buffered']
    #allocation9 [shape = 's32[1]{0}', space=sflag, size = 0x4, scoped, tag = 'scoped memory for tpu_custom_call.1']
    #allocation10 [shape = 'u8[8192]{0}', space=vmem, size = 0x2000, scoped, tag = 'input window, operand 7, single buffered']
    #allocation11 [shape = 'u8[8192]{0}', space=vmem, size = 0x2000, scoped, tag = 'input window, operand 8, single buffered']
    #allocation12 [shape = 's32[1]{0}', space=sflag, size = 0x4, scoped, tag = 'scoped memory for tpu_custom_call.1']
    #allocation13 [shape = 'u8[8192]{0}', space=vmem, size = 0x2000, scoped, tag = 'input window, operand 10, single buffered']
    #allocation14 [shape = 'u8[8192]{0}', space=vmem, size = 0x2000, scoped, tag = 'input window, operand 11, single buffered']
    #allocation15 [shape = 's32[1]{0}', space=sflag, size = 0x4, scoped, tag = 'scoped memory for tpu_custom_call.1']
    #allocation16 [shape = 'u8[8192]{0}', space=vmem, size = 0x2000, scoped, tag = 'output window, operand 0, single buffered']
    %26 = vsyncpa [#allocation3], 0
    %27 = vsyncpa [#allocation6], 0
    %28 = vsyncpa [#allocation9], 0
    %29 = vsyncpa [#allocation12], 0
    %30 = vsyncpa [#allocation15], 0
    %31 = vsyncpa [#allocation4], 0
    // Predicated region
    $region2: #{tpu_custom_call.1} parent=1 // pred_check
      _
    $region3: #{tpu_custom_call.1} parent=1 // pred_check_branch
      %33 = sbr.rel (0) target = $region5
    $region4: #{tpu_custom_call.1} parent=1 // pred_region
      _
    $region5: #{tpu_custom_call.1} parent=1 // pred_fallthru
      _
    // Predicated region
    $region6: #{tpu_custom_call.1} parent=1 // pred_check
      _
    $region7: #{tpu_custom_call.1} parent=1 // pred_check_branch
      %35 = sbr.rel (0) target = $region9
    $region8: #{tpu_custom_call.1} parent=1 // pred_region
      %s37 = ssub.s32 128, 128
      %38 = vsyncadd [#allocation3], %s37
      %s39 = sshll.u32 [#allocation2], 4
      %s40 = int_to_ptr.vmem [resolvable:$true] %s39
      %45 = dma.hbm_to_vmem [thread:$0]  %s1, 128, %s40, [#allocation3], 64, 64, 4
    $region9: #{tpu_custom_call.1} parent=1 // pred_fallthru
      _
    // Predicated region
    $region10: #{tpu_custom_call.1} parent=1 // pred_check
      _
    $region11: #{tpu_custom_call.1} parent=1 // pred_check_branch
      %47 = sbr.rel (0) target = $region13
    $region12: #{tpu_custom_call.1} parent=1 // pred_region
      _
    $region13: #{tpu_custom_call.1} parent=1 // pred_fallthru
      _
    // Predicated region
    $region14: #{tpu_custom_call.1} parent=1 // pred_check
      _
    $region15: #{tpu_custom_call.1} parent=1 // pred_check_branch
      %49 = sbr.rel (0) target = $region17
    $region16: #{tpu_custom_call.1} parent=1 // pred_region
      _
    $region17: #{tpu_custom_call.1} parent=1 // pred_fallthru
      _
    // Predicated region
    $region18: #{tpu_custom_call.1} parent=1 // pred_check
      _
    $region19: #{tpu_custom_call.1} parent=1 // pred_check_branch
      %51 = sbr.rel (0) target = $region21
    $region20: #{tpu_custom_call.1} parent=1 // pred_region
      %s53 = ssub.s32 256, 256
      %54 = vsyncadd [#allocation6], %s53
      %s55 = sshll.u32 [#allocation5], 4
      %s56 = int_to_ptr.vmem [resolvable:$true] %s55
      %61 = dma.hbm_to_vmem [thread:$0]  %s4, 256, %s56, [#allocation6], 128, 128, 8
    $region21: #{tpu_custom_call.1} parent=1 // pred_fallthru
      _
    // Predicated region
    $region22: #{tpu_custom_call.1} parent=1 // pred_check
      _
    $region23: #{tpu_custom_call.1} parent=1 // pred_check_branch
      %63 = sbr.rel (0) target = $region25
    $region24: #{tpu_custom_call.1} parent=1 // pred_region
      %s65 = ssub.s32 256, 256
      %66 = vsyncadd [#allocation6], %s65
      %s67 = sshll.u32 [#allocation7], 4
      %s68 = int_to_ptr.vmem [resolvable:$true] %s67
      %73 = dma.hbm_to_vmem [thread:$0]  %s5, 256, %s68, [#allocation6], 128, 128, 8
    $region25: #{tpu_custom_call.1} parent=1 // pred_fallthru
      _
    // Predicated region
    $region26: #{tpu_custom_call.1} parent=1 // pred_check
      _
    $region27: #{tpu_custom_call.1} parent=1 // pred_check_branch
      %75 = sbr.rel (0) target = $region29
    $region28: #{tpu_custom_call.1} parent=1 // pred_region
      %s77 = ssub.s32 256, 256
      %78 = vsyncadd [#allocation9], %s77
      %s79 = sshll.u32 [#allocation8], 4
      %s80 = int_to_ptr.vmem [resolvable:$true] %s79
      %85 = dma.hbm_to_vmem [thread:$0]  %s6, 256, %s80, [#allocation9], 64, 64, 4
    $region29: #{tpu_custom_call.1} parent=1 // pred_fallthru
      _
    // Predicated region
    $region30: #{tpu_custom_call.1} parent=1 // pred_check
      _
    $region31: #{tpu_custom_call.1} parent=1 // pred_check_branch
      %87 = sbr.rel (0) target = $region33
    $region32: #{tpu_custom_call.1} parent=1 // pred_region
      %s89 = ssub.s32 256, 256
      %90 = vsyncadd [#allocation9], %s89
      %s91 = sshll.u32 [#allocation10], 4
      %s92 = int_to_ptr.vmem [resolvable:$true] %s91
      %97 = dma.hbm_to_vmem [thread:$0]  %s7, 256, %s92, [#allocation9], 64, 64, 4
    $region33: #{tpu_custom_call.1} parent=1 // pred_fallthru
      _
    // Predicated region
    $region34: #{tpu_custom_call.1} parent=1 // pred_check
      _
    $region35: #{tpu_custom_call.1} parent=1 // pred_check_branch
      %99 = sbr.rel (0) target = $region37
    $region36: #{tpu_custom_call.1} parent=1 // pred_region
      %s101 = ssub.s32 256, 256
      %102 = vsyncadd [#allocation12], %s101
      %s103 = sshll.u32 [#allocation11], 4
      %s104 = int_to_ptr.vmem [resolvable:$true] %s103
      %109 = dma.hbm_to_vmem [thread:$0]  %s8, 256, %s104, [#allocation12], 64, 64, 4
    $region37: #{tpu_custom_call.1} parent=1 // pred_fallthru
      _
    // Predicated region
    $region38: #{tpu_custom_call.1} parent=1 // pred_check
      _
    $region39: #{tpu_custom_call.1} parent=1 // pred_check_branch
      %111 = sbr.rel (0) target = $region41
    $region40: #{tpu_custom_call.1} parent=1 // pred_region
      _
    $region41: #{tpu_custom_call.1} parent=1 // pred_fallthru
      _
    // Predicated region
    $region42: #{tpu_custom_call.1} parent=1 // pred_check
      _
    $region43: #{tpu_custom_call.1} parent=1 // pred_check_branch
      %113 = sbr.rel (0) target = $region45
    $region44: #{tpu_custom_call.1} parent=1 // pred_region
      %s115 = ssub.s32 256, 256
      %116 = vsyncadd [#allocation12], %s115
      %s117 = sshll.u32 [#allocation13], 4
      %s118 = int_to_ptr.vmem [resolvable:$true] %s117
      %123 = dma.hbm_to_vmem [thread:$0]  %s10, 256, %s118, [#allocation12], 64, 64, 4
    $region45: #{tpu_custom_call.1} parent=1 // pred_fallthru
      _
    // Predicated region
    $region46: #{tpu_custom_call.1} parent=1 // pred_check
      _
    $region47: #{tpu_custom_call.1} parent=1 // pred_check_branch
      %125 = sbr.rel (0) target = $region49
    $region48: #{tpu_custom_call.1} parent=1 // pred_region
      %s127 = ssub.s32 256, 256
      %128 = vsyncadd [#allocation15], %s127
      %s129 = sshll.u32 [#allocation14], 4
      %s130 = int_to_ptr.vmem [resolvable:$true] %s129
      %135 = dma.hbm_to_vmem [thread:$0]  %s11, 256, %s130, [#allocation15], 64, 64, 4
    $region49: #{tpu_custom_call.1} parent=1 // pred_fallthru
      _
    // Predicated region
    $region50: #{tpu_custom_call.1} parent=1 // pred_check
      _
    $region51: #{tpu_custom_call.1} parent=1 // pred_check_branch
      %137 = sbr.rel (0) target = $region53
    $region52: #{tpu_custom_call.1} parent=1 // pred_region
      _
    $region53: #{tpu_custom_call.1} parent=1 // pred_fallthru
      _
    // Predicated region
    $region54: #{tpu_custom_call.1} parent=1 // pred_check
      _
    $region55: #{tpu_custom_call.1} parent=1 // pred_check_branch
      %139 = sbr.rel (0) target = $region57
    $region56: #{tpu_custom_call.1} parent=1 // pred_region
      _
    $region57: #{tpu_custom_call.1} parent=1 // pred_fallthru
      _
    // Predicated region
    $region58: #{tpu_custom_call.1} parent=1 // pred_check
      _
    $region59: #{tpu_custom_call.1} parent=1 // pred_check_branch
      %141 = sbr.rel (0) target = $region61
    $region60: #{tpu_custom_call.1} parent=1 // pred_region
      _
    $region61: #{tpu_custom_call.1} parent=1 // pred_fallthru
      _
    // Predicated region
    $region62: #{tpu_custom_call.1} parent=1 // pred_check
      _
    $region63: #{tpu_custom_call.1} parent=1 // pred_check_branch
      %143 = sbr.rel (0) target = $region65
    $region64: #{tpu_custom_call.1} parent=1 // pred_region
      _
    $region65: #{tpu_custom_call.1} parent=1 // pred_fallthru
      _
    // Predicated region
    $region66: #{tpu_custom_call.1} parent=1 // pred_check
      _
    $region67: #{tpu_custom_call.1} parent=1 // pred_check_branch
      %145 = sbr.rel (0) target = $region69
    $region68: #{tpu_custom_call.1} parent=1 // pred_region
      _
    $region69: #{tpu_custom_call.1} parent=1 // pred_fallthru
      _
    // Predicated region
    $region70: #{tpu_custom_call.1} parent=1 // pred_check
      _
    $region71: #{tpu_custom_call.1} parent=1 // pred_check_branch
      %147 = sbr.rel (0) target = $region73
    $region72: #{tpu_custom_call.1} parent=1 // pred_region
      _
    $region73: #{tpu_custom_call.1} parent=1 // pred_fallthru
      _
    // Predicated region
    $region74: #{tpu_custom_call.1} parent=1 // pred_check
      _
    $region75: #{tpu_custom_call.1} parent=1 // pred_check_branch
      %149 = sbr.rel (0) target = $region77
    $region76: #{tpu_custom_call.1} parent=1 // pred_region
      _
    $region77: #{tpu_custom_call.1} parent=1 // pred_fallthru
      _
    // Predicated region
    $region78: #{tpu_custom_call.1} parent=1 // pred_check
      _
    $region79: #{tpu_custom_call.1} parent=1 // pred_check_branch
      %151 = sbr.rel (0) target = $region81
    $region80: #{tpu_custom_call.1} parent=1 // pred_region
      _
    $region81: #{tpu_custom_call.1} parent=1 // pred_fallthru
      _
    // Predicated region
    $region82: #{tpu_custom_call.1} parent=1 // pred_check
      _
    $region83: #{tpu_custom_call.1} parent=1 // pred_check_branch
      %153 = sbr.rel (0) target = $region85
    $region84: #{tpu_custom_call.1} parent=1 // pred_region
      _
    $region85: #{tpu_custom_call.1} parent=1 // pred_fallthru
      _
    // Predicated region
    $region86: #{tpu_custom_call.1} parent=1 // pred_check
      _
    $region87: #{tpu_custom_call.1} parent=1 // pred_check_branch
      %155 = sbr.rel (0) target = $region89
    $region88: #{tpu_custom_call.1} parent=1 // pred_region
      %156 = dma.done [#allocation3], 128
    $region89: #{tpu_custom_call.1} parent=1 // pred_fallthru
      _
    // Predicated region
    $region90: #{tpu_custom_call.1} parent=1 // pred_check
      _
    $region91: #{tpu_custom_call.1} parent=1 // pred_check_branch
      %158 = sbr.rel (0) target = $region93
    $region92: #{tpu_custom_call.1} parent=1 // pred_region
      %159 = dma.done [#allocation6], 256
    $region93: #{tpu_custom_call.1} parent=1 // pred_fallthru
      _
    // Predicated region
    $region94: #{tpu_custom_call.1} parent=1 // pred_check
      _
    $region95: #{tpu_custom_call.1} parent=1 // pred_check_branch
      %161 = sbr.rel (0) target = $region97
    $region96: #{tpu_custom_call.1} parent=1 // pred_region
      %162 = dma.done [#allocation6], 256
    $region97: #{tpu_custom_call.1} parent=1 // pred_fallthru
      _
    // Predicated region
    $region98: #{tpu_custom_call.1} parent=1 // pred_check
      _
    $region99: #{tpu_custom_call.1} parent=1 // pred_check_branch
      %164 = sbr.rel (0) target = $region101
    $region100: #{tpu_custom_call.1} parent=1 // pred_region
      %165 = dma.done [#allocation9], 256
    $region101: #{tpu_custom_call.1} parent=1 // pred_fallthru
      _
    // Predicated region
    $region102: #{tpu_custom_call.1} parent=1 // pred_check
      _
    $region103: #{tpu_custom_call.1} parent=1 // pred_check_branch
      %167 = sbr.rel (0) target = $region105
    $region104: #{tpu_custom_call.1} parent=1 // pred_region
      %168 = dma.done [#allocation9], 256
    $region105: #{tpu_custom_call.1} parent=1 // pred_fallthru
      _
    // Predicated region
    $region106: #{tpu_custom_call.1} parent=1 // pred_check
      _
    $region107: #{tpu_custom_call.1} parent=1 // pred_check_branch
      %170 = sbr.rel (0) target = $region109
    $region108: #{tpu_custom_call.1} parent=1 // pred_region
      %171 = dma.done [#allocation12], 256
    $region109: #{tpu_custom_call.1} parent=1 // pred_fallthru
      _
    // Predicated region
    $region110: #{tpu_custom_call.1} parent=1 // pred_check
      _
    $region111: #{tpu_custom_call.1} parent=1 // pred_check_branch
      %173 = sbr.rel (0) target = $region113
    $region112: #{tpu_custom_call.1} parent=1 // pred_region
      %174 = dma.done [#allocation12], 256
    $region113: #{tpu_custom_call.1} parent=1 // pred_fallthru
      _
    // Predicated region
    $region114: #{tpu_custom_call.1} parent=1 // pred_check
      _
    $region115: #{tpu_custom_call.1} parent=1 // pred_check_branch
      %176 = sbr.rel (0) target = $region117
    $region116: #{tpu_custom_call.1} parent=1 // pred_region
      %177 = dma.done [#allocation15], 256
    $region117: #{tpu_custom_call.1} parent=1 // pred_fallthru
      _
    %v179 = vld [vmem:[%s0] sm:$0xff]
    %v180 = vld [vmem:[%s0 + $0x8] sm:$0xff]
    %v181 = vld [vmem:[#allocation2] sm:$0xf]
    %v182 = vld [vmem:[#allocation2 + $0x4] sm:$0xf]
    %v183 = vpack.c.bf16 %v180, %v179
    %v184 = vld [vmem:[#allocation8] sm:$0xf]
    %v185 = vld [vmem:[#allocation8 + $0x4] sm:$0xf]
    %v186 = vld [vmem:[#allocation8 + $0x8] sm:$0xf]
    %v187 = vld [vmem:[#allocation8 + $0xc] sm:$0xf]
    %v192 = vunpack.c.l.b16 %v184
    %v193 = vunpack.c.l.b16 %v185
    %v194 = vunpack.c.l.b16 %v186
    %v195 = vunpack.c.l.b16 %v187
    %v196 = vpack.c.b16 %v193, %v192
    %v197 = vpack.c.b16 %v195, %v194
    %vm200 = vcmask 261120
    %v202 = vsel %vm200, %v183, 0
    %204 = vmatprep.subr.bf16.mxu0 0
    %205 = vmatpush1.bf16.msra.mxu0 %v196
    %206 = vmatprep.subr.bf16.mxu0 0
    %207 = vmatpush1.bf16.msra.mxu0 %v197
    %208 = vmatprep.subr.bf16.mxu0 0
    %209 = vmatpush1.bf16.msra.mxu0 0
    %210 = vmatprep.subr.bf16.mxu0 0
    %211 = vmatpush1.bf16.msra.mxu0 0
    %212 = vmatprep.subr.bf16.mxu0 0
    %213 = vmatpush1.bf16.msra.mxu0 0
    %214 = vmatprep.subr.bf16.mxu0 0
    %215 = vmatpush1.bf16.msra.mxu0 0
    %216 = vmatprep.subr.bf16.mxu0 0
    %217 = vmatpush1.bf16.msra.mxu0 0
    %218 = vmatprep.subr.bf16.mxu0 0
    %219 = vmatpush1.bf16.msra.mxu0 0
    %220 = vmatprep.subr.bf16.mxu0 0
    %221 = vmatpush1.bf16.msra.mxu0 0
    %222 = vmatprep.subr.bf16.mxu0 0
    %223 = vmatpush1.bf16.msra.mxu0 0
    %224 = vmatprep.subr.bf16.mxu0 0
    %225 = vmatpush1.bf16.msra.mxu0 0
    %226 = vmatprep.subr.bf16.mxu0 0
    %227 = vmatpush1.bf16.msra.mxu0 0
    %228 = vmatprep.subr.bf16.mxu0 0
    %229 = vmatpush1.bf16.msra.mxu0 0
    %230 = vmatprep.subr.bf16.mxu0 0
    %231 = vmatpush1.bf16.msra.mxu0 0
    %232 = vmatprep.subr.bf16.mxu0 0
    %233 = vmatpush1.bf16.msra.mxu0 0
    %234 = vmatprep.subr.bf16.mxu0 0
    %235 = vmatpush1.bf16.msra.mxu0 0
    %236 = vmatprep.mubr.bf16.mxu0 0
    %237 = vmatmul.mubr.bf16.gmra.mrb[0].mxu0 %v202
    %v238 = vpop.f32.mrb[0].mxu0
    %v239 = vadd.f32 0.0, %v238
    %v240 = vpop.f32.mrb[0].mxu0
    %v241 = vpop.f32.mrb[0].mxu0
    %v242 = vadd.f32 0.0, %v241
    %v243 = vpop.f32.mrb[0].mxu0
    %244 = vdwg.mxu0
    %v245 = vld [vmem:[%s2] sm:$0xff]
    %v246 = vld [vmem:[%s2 + $0x8] sm:$0xff]
    %v247 = vld [vmem:[%s3] sm:$0xff]
    %v248 = vld [vmem:[%s3 + $0x8] sm:$0xff]
    %v249 = vmul.f32 %v239, %v247
    %v250 = vmul.f32 %v242, %v248
    %253 = vrot.lane.b32.xlu0 %v239, 124
    %v254 = vpop.permute.xlu0 %253
    %255 = vrot.lane.b32.xlu0 %v242, 124
    %v256 = vpop.permute.xlu0 %255
    %259 = vrot.lane.b32.xlu0 %v239, 4
    %v260 = vpop.permute.xlu0 %259
    %261 = vrot.lane.b32.xlu0 %v242, 4
    %v262 = vpop.permute.xlu0 %261
    %vm265 = vcmask 31744
    %v266 = vsel %vm265, %v254, %v260
    %v267 = vsel %vm265, %v256, %v262
    %vm268 = vcmask 64512
    %v269 = vsel %vm268, %v266, %v254
    %v270 = vsel %vm268, %v267, %v256
    %vm271 = vcmask 97280
    %v272 = vsel %vm271, %v269, %v260
    %v273 = vsel %vm271, %v270, %v262
    %vm274 = vcmask 130048
    %v275 = vsel %vm274, %v272, %v254
    %v276 = vsel %vm274, %v273, %v256
    %vm277 = vcmask 162816
    %v278 = vsel %vm277, %v275, %v260
    %v279 = vsel %vm277, %v276, %v262
    %vm280 = vcmask 195584
    %v281 = vsel %vm280, %v278, %v254
    %v282 = vsel %vm280, %v279, %v256
    %vm283 = vcmask 228352
    %v284 = vsel %vm283, %v281, %v260
    %v285 = vsel %vm283, %v282, %v262
    %v286 = vmul.f32 %v284, %v245
    %v287 = vmul.f32 %v285, %v246
    %v288 = vadd.f32 %v249, %v286
    %v289 = vadd.f32 %v250, %v287
    %292 = vrot.lane.b32.xlu0 %v247, 32
    %v293 = vpop.permute.xlu0 %292
    %294 = vrot.lane.b32.xlu0 %v248, 32
    %v295 = vpop.permute.xlu0 %294
    %v298 = vmul.f32 %v239, %v293
    %v299 = vmul.f32 %v242, %v295
    %300 = vrot.lane.b32.xlu0 %v239, 92
    %v301 = vpop.permute.xlu0 %300
    %302 = vrot.lane.b32.xlu0 %v242, 92
    %v303 = vpop.permute.xlu0 %302
    %306 = vrot.lane.b32.xlu0 %v239, 100
    %v307 = vpop.permute.xlu0 %306
    %308 = vrot.lane.b32.xlu0 %v242, 100
    %v309 = vpop.permute.xlu0 %308
    %v312 = vsel %vm265, %v301, %v307
    %v313 = vsel %vm265, %v303, %v309
    %v314 = vsel %vm268, %v312, %v301
    %v315 = vsel %vm268, %v313, %v303
    %v316 = vsel %vm271, %v314, %v307
    %v317 = vsel %vm271, %v315, %v309
    %v318 = vsel %vm274, %v316, %v301
    %v319 = vsel %vm274, %v317, %v303
    %v320 = vsel %vm277, %v318, %v307
    %v321 = vsel %vm277, %v319, %v309
    %v322 = vsel %vm280, %v320, %v301
    %v323 = vsel %vm280, %v321, %v303
    %v324 = vsel %vm283, %v322, %v307
    %v325 = vsel %vm283, %v323, %v309
    %v326 = vmul.f32 %v324, %v245
    %v327 = vmul.f32 %v325, %v246
    %330 = vrot.lane.b32.xlu0 %v326, 32
    %v331 = vpop.permute.xlu0 %330
    %332 = vrot.lane.b32.xlu0 %v327, 32
    %v333 = vpop.permute.xlu0 %332
    %v336 = vadd.f32 %v298, %v331
    %v337 = vadd.f32 %v299, %v333
    %v338 = vld [vmem:[#allocation5] sm:$0xff]
    %v339 = vld [vmem:[#allocation5 + $0x8] sm:$0xff]
    %v340 = vpack.c.bf16 %v288, %v288
    %v341 = vpack.c.bf16 %v289, %v289
    %v342 = vpack.c.bf16 %v336, %v336
    %v343 = vpack.c.bf16 %v337, %v337
    %v344 = vpack.c.bf16 %v239, %v239
    %v345 = vpack.c.bf16 %v242, %v242
    %347 = vrot.lane.b32.xlu0 %v342, 96
    %v348 = vpop.permute.xlu0 %347
    %v350 = vsel %vm268, %v340, 0
    %v353 = vsel %vm268, %v348, 0
    %355 = vmatprep.subr.bf16.mxu0 0
    %356 = vmatpush1.bf16.xpose.msra.mxu0 %v353
    %357 = vmatprep.subr.bf16.mxu0 0
    %358 = vmatpush1.bf16.xpose.msra.mxu0 0
    %359 = vmatprep.subr.bf16.mxu0 0
    %360 = vmatpush1.bf16.xpose.msra.mxu0 0
    %361 = vmatprep.subr.bf16.mxu0 0
    %362 = vmatpush1.bf16.xpose.msra.mxu0 0
    %363 = vmatprep.subr.bf16.mxu0 0
    %364 = vmatpush1.bf16.xpose.msra.mxu0 0
    %365 = vmatprep.subr.bf16.mxu0 0
    %366 = vmatpush1.bf16.xpose.msra.mxu0 0
    %367 = vmatprep.subr.bf16.mxu0 0
    %368 = vmatpush1.bf16.xpose.msra.mxu0 0
    %369 = vmatprep.subr.bf16.mxu0 0
    %370 = vmatpush1.bf16.xpose.msra.mxu0 0
    %371 = vmatprep.subr.bf16.mxu0 0
    %372 = vmatpush1.bf16.xpose.msra.mxu0 0
    %373 = vmatprep.subr.bf16.mxu0 0
    %374 = vmatpush1.bf16.xpose.msra.mxu0 0
    %375 = vmatprep.subr.bf16.mxu0 0
    %376 = vmatpush1.bf16.xpose.msra.mxu0 0
    %377 = vmatprep.subr.bf16.mxu0 0
    %378 = vmatpush1.bf16.xpose.msra.mxu0 0
    %379 = vmatprep.subr.bf16.mxu0 0
    %380 = vmatpush1.bf16.xpose.msra.mxu0 0
    %381 = vmatprep.subr.bf16.mxu0 0
    %382 = vmatpush1.bf16.xpose.msra.mxu0 0
    %383 = vmatprep.subr.bf16.mxu0 0
    %384 = vmatpush1.bf16.xpose.msra.mxu0 0
    %385 = vmatprep.subr.bf16.mxu0 0
    %386 = vmatpush1.bf16.xpose.msra.mxu0 0
    %387 = vmatprep.mubr.bf16.mxu0 0
    %388 = vmatmul.mubr.bf16.gmra.mrb[0].mxu0 %v350
    %v389 = vpop.f32.mrb[0].mxu0
    %v390 = vadd.f32 0.0, %v389
    %v391 = vpop.f32.mrb[0].mxu0
    %v392 = vpop.f32.mrb[0].mxu0
    %v393 = vpop.f32.mrb[0].mxu0
    %394 = vdwg.mxu0
    %396 = vrot.lane.b32.xlu0 %v343, 96
    %v397 = vpop.permute.xlu0 %396
    %v399 = vsel %vm268, %v341, 0
    %v402 = vsel %vm268, %v397, 0
    %404 = vmatprep.subr.bf16.mxu0 0
    %405 = vmatpush1.bf16.xpose.msra.mxu0 %v402
    %406 = vmatprep.subr.bf16.mxu0 0
    %407 = vmatpush1.bf16.xpose.msra.mxu0 0
    %408 = vmatprep.subr.bf16.mxu0 0
    %409 = vmatpush1.bf16.xpose.msra.mxu0 0
    %410 = vmatprep.subr.bf16.mxu0 0
    %411 = vmatpush1.bf16.xpose.msra.mxu0 0
    %412 = vmatprep.subr.bf16.mxu0 0
    %413 = vmatpush1.bf16.xpose.msra.mxu0 0
    %414 = vmatprep.subr.bf16.mxu0 0
    %415 = vmatpush1.bf16.xpose.msra.mxu0 0
    %416 = vmatprep.subr.bf16.mxu0 0
    %417 = vmatpush1.bf16.xpose.msra.mxu0 0
    %418 = vmatprep.subr.bf16.mxu0 0
    %419 = vmatpush1.bf16.xpose.msra.mxu0 0
    %420 = vmatprep.subr.bf16.mxu0 0
    %421 = vmatpush1.bf16.xpose.msra.mxu0 0
    %422 = vmatprep.subr.bf16.mxu0 0
    %423 = vmatpush1.bf16.xpose.msra.mxu0 0
    %424 = vmatprep.subr.bf16.mxu0 0
    %425 = vmatpush1.bf16.xpose.msra.mxu0 0
    %426 = vmatprep.subr.bf16.mxu0 0
    %427 = vmatpush1.bf16.xpose.msra.mxu0 0
    %428 = vmatprep.subr.bf16.mxu0 0
    %429 = vmatpush1.bf16.xpose.msra.mxu0 0
    %430 = vmatprep.subr.bf16.mxu0 0
    %431 = vmatpush1.bf16.xpose.msra.mxu0 0
    %432 = vmatprep.subr.bf16.mxu0 0
    %433 = vmatpush1.bf16.xpose.msra.mxu0 0
    %434 = vmatprep.subr.bf16.mxu0 0
    %435 = vmatpush1.bf16.xpose.msra.mxu0 0
    %436 = vmatprep.mubr.bf16.mxu0 0
    %437 = vmatmul.mubr.bf16.gmra.mrb[0].mxu0 %v399
    %v438 = vpop.f32.mrb[0].mxu0
    %v439 = vadd.f32 0.0, %v438
    %v440 = vpop.f32.mrb[0].mxu0
    %v441 = vpop.f32.mrb[0].mxu0
    %v442 = vpop.f32.mrb[0].mxu0
    %443 = vdwg.mxu0
    %v444 = vmul.f32 %v390, 0.35355338
    %v445 = vmul.f32 %v439, 0.35355338
    %v446 = vadd.f32 %v444, %v338
    %v447 = vadd.f32 %v445, %v339
    %v448 = vsel %vm268, %v446, -inf
    %449 = vmax.xlane.f32.xlu0 %v448
    %v450 = vpop.xlane.xlu0 %449
    %v451 = vsel %vm268, %v447, -inf
    %452 = vmax.xlane.f32.xlu0 %v451
    %v453 = vpop.xlane.xlu0 %452
    %v454 = vsub.f32 %v446, %v450
    %v455 = vsub.f32 %v447, %v453
    %v456 = vmul.f32 %v454, 1.442695
    %v457 = vpow.pop %v456
    %v458 = vmul.f32 %v455, 1.442695
    %v459 = vpow.pop %v458
    %v460 = vsel %vm268, %v457, 0.0
    %461 = vadd.xlane.f32.xlu0 %v460
    %v462 = vpop.xlane.xlu0 %461
    %v463 = vsel %vm268, %v459, 0.0
    %464 = vadd.xlane.f32.xlu0 %v463
    %v465 = vpop.xlane.xlu0 %464
    %v466 = vrcp.pop %v462
    %v467 = vmul.f32 %v457, %v466
    %v468 = vrcp.pop %v465
    %v469 = vmul.f32 %v459, %v468
    %v470 = vpack.c.bf16 %v467, %v467
    %v471 = vpack.c.bf16 %v469, %v469
    %473 = vrot.lane.b32.xlu0 %v344, 64
    %v474 = vpop.permute.xlu0 %473
    %v476 = vsel %vm268, %v470, 0
    %vm478 = vcmask 1043456
    %v480 = vsel %vm478, %v474, 0
    %482 = vmatprep.subr.bf16.mxu0 0
    %483 = vmatpush1.bf16.msra.mxu0 %v480
    %484 = vmatprep.subr.bf16.mxu0 0
    %485 = vmatpush1.bf16.msra.mxu0 0
    %486 = vmatprep.subr.bf16.mxu0 0
    %487 = vmatpush1.bf16.msra.mxu0 0
    %488 = vmatprep.subr.bf16.mxu0 0
    %489 = vmatpush1.bf16.msra.mxu0 0
    %490 = vmatprep.subr.bf16.mxu0 0
    %491 = vmatpush1.bf16.msra.mxu0 0
    %492 = vmatprep.subr.bf16.mxu0 0
    %493 = vmatpush1.bf16.msra.mxu0 0
    %494 = vmatprep.subr.bf16.mxu0 0
    %495 = vmatpush1.bf16.msra.mxu0 0
    %496 = vmatprep.subr.bf16.mxu0 0
    %497 = vmatpush1.bf16.msra.mxu0 0
    %498 = vmatprep.subr.bf16.mxu0 0
    %499 = vmatpush1.bf16.msra.mxu0 0
    %500 = vmatprep.subr.bf16.mxu0 0
    %501 = vmatpush1.bf16.msra.mxu0 0
    %502 = vmatprep.subr.bf16.mxu0 0
    %503 = vmatpush1.bf16.msra.mxu0 0
    %504 = vmatprep.subr.bf16.mxu0 0
    %505 = vmatpush1.bf16.msra.mxu0 0
    %506 = vmatprep.subr.bf16.mxu0 0
    %507 = vmatpush1.bf16.msra.mxu0 0
    %508 = vmatprep.subr.bf16.mxu0 0
    %509 = vmatpush1.bf16.msra.mxu0 0
    %510 = vmatprep.subr.bf16.mxu0 0
    %511 = vmatpush1.bf16.msra.mxu0 0
    %512 = vmatprep.subr.bf16.mxu0 0
    %513 = vmatpush1.bf16.msra.mxu0 0
    %514 = vmatprep.mubr.bf16.mxu0 0
    %515 = vmatmul.mubr.bf16.gmra.mrb[0].mxu0 %v476
    %v516 = vpop.f32.mrb[0].mxu0
    %v517 = vadd.f32 0.0, %v516
    %v518 = vpop.f32.mrb[0].mxu0
    %v519 = vpop.f32.mrb[0].mxu0
    %v520 = vpop.f32.mrb[0].mxu0
    %521 = vdwg.mxu0
    %523 = vrot.lane.b32.xlu0 %v345, 64
    %v524 = vpop.permute.xlu0 %523
    %v526 = vsel %vm268, %v471, 0
    %v529 = vsel %vm478, %v524, 0
    %531 = vmatprep.subr.bf16.mxu0 0
    %532 = vmatpush1.bf16.msra.mxu0 %v529
    %533 = vmatprep.subr.bf16.mxu0 0
    %534 = vmatpush1.bf16.msra.mxu0 0
    %535 = vmatprep.subr.bf16.mxu0 0
    %536 = vmatpush1.bf16.msra.mxu0 0
    %537 = vmatprep.subr.bf16.mxu0 0
    %538 = vmatpush1.bf16.msra.mxu0 0
    %539 = vmatprep.subr.bf16.mxu0 0
    %540 = vmatpush1.bf16.msra.mxu0 0
    %541 = vmatprep.subr.bf16.mxu0 0
    %542 = vmatpush1.bf16.msra.mxu0 0
    %543 = vmatprep.subr.bf16.mxu0 0
    %544 = vmatpush1.bf16.msra.mxu0 0
    %545 = vmatprep.subr.bf16.mxu0 0
    %546 = vmatpush1.bf16.msra.mxu0 0
    %547 = vmatprep.subr.bf16.mxu0 0
    %548 = vmatpush1.bf16.msra.mxu0 0
    %549 = vmatprep.subr.bf16.mxu0 0
    %550 = vmatpush1.bf16.msra.mxu0 0
    %551 = vmatprep.subr.bf16.mxu0 0
    %552 = vmatpush1.bf16.msra.mxu0 0
    %553 = vmatprep.subr.bf16.mxu0 0
    %554 = vmatpush1.bf16.msra.mxu0 0
    %555 = vmatprep.subr.bf16.mxu0 0
    %556 = vmatpush1.bf16.msra.mxu0 0
    %557 = vmatprep.subr.bf16.mxu0 0
    %558 = vmatpush1.bf16.msra.mxu0 0
    %559 = vmatprep.subr.bf16.mxu0 0
    %560 = vmatpush1.bf16.msra.mxu0 0
    %561 = vmatprep.subr.bf16.mxu0 0
    %562 = vmatpush1.bf16.msra.mxu0 0
    %563 = vmatprep.mubr.bf16.mxu0 0
    %564 = vmatmul.mubr.bf16.gmra.mrb[0].mxu0 %v526
    %v565 = vpop.f32.mrb[0].mxu0
    %v566 = vadd.f32 0.0, %v565
    %v567 = vpop.f32.mrb[0].mxu0
    %v568 = vpop.f32.mrb[0].mxu0
    %v569 = vpop.f32.mrb[0].mxu0
    %570 = vdwg.mxu0
    %572 = vrot.lane.b32.xlu0 %v340, 120
    %v573 = vpop.permute.xlu0 %572
    %574 = vrot.lane.b32.xlu0 %v342, 88
    %v575 = vpop.permute.xlu0 %574
    %v577 = vsel %vm268, %v573, 0
    %v580 = vsel %vm268, %v575, 0
    %582 = vmatprep.subr.bf16.mxu0 0
    %583 = vmatpush1.bf16.xpose.msra.mxu0 %v580
    %584 = vmatprep.subr.bf16.mxu0 0
    %585 = vmatpush1.bf16.xpose.msra.mxu0 0
    %586 = vmatprep.subr.bf16.mxu0 0
    %587 = vmatpush1.bf16.xpose.msra.mxu0 0
    %588 = vmatprep.subr.bf16.mxu0 0
    %589 = vmatpush1.bf16.xpose.msra.mxu0 0
    %590 = vmatprep.subr.bf16.mxu0 0
    %591 = vmatpush1.bf16.xpose.msra.mxu0 0
    %592 = vmatprep.subr.bf16.mxu0 0
    %593 = vmatpush1.bf16.xpose.msra.mxu0 0
    %594 = vmatprep.subr.bf16.mxu0 0
    %595 = vmatpush1.bf16.xpose.msra.mxu0 0
    %596 = vmatprep.subr.bf16.mxu0 0
    %597 = vmatpush1.bf16.xpose.msra.mxu0 0
    %598 = vmatprep.subr.bf16.mxu0 0
    %599 = vmatpush1.bf16.xpose.msra.mxu0 0
    %600 = vmatprep.subr.bf16.mxu0 0
    %601 = vmatpush1.bf16.xpose.msra.mxu0 0
    %602 = vmatprep.subr.bf16.mxu0 0
    %603 = vmatpush1.bf16.xpose.msra.mxu0 0
    %604 = vmatprep.subr.bf16.mxu0 0
    %605 = vmatpush1.bf16.xpose.msra.mxu0 0
    %606 = vmatprep.subr.bf16.mxu0 0
    %607 = vmatpush1.bf16.xpose.msra.mxu0 0
    %608 = vmatprep.subr.bf16.mxu0 0
    %609 = vmatpush1.bf16.xpose.msra.mxu0 0
    %610 = vmatprep.subr.bf16.mxu0 0
    %611 = vmatpush1.bf16.xpose.msra.mxu0 0
    %612 = vmatprep.subr.bf16.mxu0 0
    %613 = vmatpush1.bf16.xpose.msra.mxu0 0
    %614 = vmatprep.mubr.bf16.mxu0 0
    %615 = vmatmul.mubr.bf16.gmra.mrb[0].mxu0 %v577
    %v616 = vpop.f32.mrb[0].mxu0
    %v617 = vadd.f32 0.0, %v616
    %v618 = vpop.f32.mrb[0].mxu0
    %v619 = vpop.f32.mrb[0].mxu0
    %v620 = vpop.f32.mrb[0].mxu0
    %621 = vdwg.mxu0
    %623 = vrot.lane.b32.xlu0 %v341, 120
    %v624 = vpop.permute.xlu0 %623
    %625 = vrot.lane.b32.xlu0 %v343, 88
    %v626 = vpop.permute.xlu0 %625
    %v628 = vsel %vm268, %v624, 0
    %v631 = vsel %vm268, %v626, 0
    %633 = vmatprep.subr.bf16.mxu0 0
    %634 = vmatpush1.bf16.xpose.msra.mxu0 %v631
    %635 = vmatprep.subr.bf16.mxu0 0
    %636 = vmatpush1.bf16.xpose.msra.mxu0 0
    %637 = vmatprep.subr.bf16.mxu0 0
    %638 = vmatpush1.bf16.xpose.msra.mxu0 0
    %639 = vmatprep.subr.bf16.mxu0 0
    %640 = vmatpush1.bf16.xpose.msra.mxu0 0
    %641 = vmatprep.subr.bf16.mxu0 0
    %642 = vmatpush1.bf16.xpose.msra.mxu0 0
    %643 = vmatprep.subr.bf16.mxu0 0
    %644 = vmatpush1.bf16.xpose.msra.mxu0 0
    %645 = vmatprep.subr.bf16.mxu0 0
    %646 = vmatpush1.bf16.xpose.msra.mxu0 0
    %647 = vmatprep.subr.bf16.mxu0 0
    %648 = vmatpush1.bf16.xpose.msra.mxu0 0
    %649 = vmatprep.subr.bf16.mxu0 0
    %650 = vmatpush1.bf16.xpose.msra.mxu0 0
    %651 = vmatprep.subr.bf16.mxu0 0
    %652 = vmatpush1.bf16.xpose.msra.mxu0 0
    %653 = vmatprep.subr.bf16.mxu0 0
    %654 = vmatpush1.bf16.xpose.msra.mxu0 0
    %655 = vmatprep.subr.bf16.mxu0 0
    %656 = vmatpush1.bf16.xpose.msra.mxu0 0
    %657 = vmatprep.subr.bf16.mxu0 0
    %658 = vmatpush1.bf16.xpose.msra.mxu0 0
    %659 = vmatprep.subr.bf16.mxu0 0
    %660 = vmatpush1.bf16.xpose.msra.mxu0 0
    %661 = vmatprep.subr.bf16.mxu0 0
    %662 = vmatpush1.bf16.xpose.msra.mxu0 0
    %663 = vmatprep.subr.bf16.mxu0 0
    %664 = vmatpush1.bf16.xpose.msra.mxu0 0
    %665 = vmatprep.mubr.bf16.mxu0 0
    %666 = vmatmul.mubr.bf16.gmra.mrb[0].mxu0 %v628
    %v667 = vpop.f32.mrb[0].mxu0
    %v668 = vadd.f32 0.0, %v667
    %v669 = vpop.f32.mrb[0].mxu0
    %v670 = vpop.f32.mrb[0].mxu0
    %v671 = vpop.f32.mrb[0].mxu0
    %672 = vdwg.mxu0
    %v673 = vmul.f32 %v617, 0.35355338
    %v674 = vmul.f32 %v668, 0.35355338
    %v675 = vadd.f32 %v673, %v338
    %v676 = vadd.f32 %v674, %v339
    %v677 = vsel %vm268, %v675, -inf
    %678 = vmax.xlane.f32.xlu0 %v677
    %v679 = vpop.xlane.xlu0 %678
    %v680 = vsel %vm268, %v676, -inf
    %681 = vmax.xlane.f32.xlu0 %v680
    %v682 = vpop.xlane.xlu0 %681
    %v683 = vsub.f32 %v675, %v679
    %v684 = vsub.f32 %v676, %v682
    %v685 = vmul.f32 %v683, 1.442695
    %v686 = vpow.pop %v685
    %v687 = vmul.f32 %v684, 1.442695
    %v688 = vpow.pop %v687
    %v689 = vsel %vm268, %v686, 0.0
    %690 = vadd.xlane.f32.xlu0 %v689
    %v691 = vpop.xlane.xlu0 %690
    %v692 = vsel %vm268, %v688, 0.0
    %693 = vadd.xlane.f32.xlu0 %v692
    %v694 = vpop.xlane.xlu0 %693
    %v695 = vrcp.pop %v691
    %v696 = vmul.f32 %v686, %v695
    %v697 = vrcp.pop %v694
    %v698 = vmul.f32 %v688, %v697
    %v699 = vpack.c.bf16 %v696, %v696
    %v700 = vpack.c.bf16 %v698, %v698
    %701 = vrot.lane.b32.xlu0 %v344, 56
    %v702 = vpop.permute.xlu0 %701
    %v704 = vsel %vm268, %v699, 0
    %v707 = vsel %vm478, %v702, 0
    %709 = vmatprep.subr.bf16.mxu0 0
    %710 = vmatpush1.bf16.msra.mxu0 %v707
    %711 = vmatprep.subr.bf16.mxu0 0
    %712 = vmatpush1.bf16.msra.mxu0 0
    %713 = vmatprep.subr.bf16.mxu0 0
    %714 = vmatpush1.bf16.msra.mxu0 0
    %715 = vmatprep.subr.bf16.mxu0 0
    %716 = vmatpush1.bf16.msra.mxu0 0
    %717 = vmatprep.subr.bf16.mxu0 0
    %718 = vmatpush1.bf16.msra.mxu0 0
    %719 = vmatprep.subr.bf16.mxu0 0
    %720 = vmatpush1.bf16.msra.mxu0 0
    %721 = vmatprep.subr.bf16.mxu0 0
    %722 = vmatpush1.bf16.msra.mxu0 0
    %723 = vmatprep.subr.bf16.mxu0 0
    %724 = vmatpush1.bf16.msra.mxu0 0
    %725 = vmatprep.subr.bf16.mxu0 0
    %726 = vmatpush1.bf16.msra.mxu0 0
    %727 = vmatprep.subr.bf16.mxu0 0
    %728 = vmatpush1.bf16.msra.mxu0 0
    %729 = vmatprep.subr.bf16.mxu0 0
    %730 = vmatpush1.bf16.msra.mxu0 0
    %731 = vmatprep.subr.bf16.mxu0 0
    %732 = vmatpush1.bf16.msra.mxu0 0
    %733 = vmatprep.subr.bf16.mxu0 0
    %734 = vmatpush1.bf16.msra.mxu0 0
    %735 = vmatprep.subr.bf16.mxu0 0
    %736 = vmatpush1.bf16.msra.mxu0 0
    %737 = vmatprep.subr.bf16.mxu0 0
    %738 = vmatpush1.bf16.msra.mxu0 0
    %739 = vmatprep.subr.bf16.mxu0 0
    %740 = vmatpush1.bf16.msra.mxu0 0
    %741 = vmatprep.mubr.bf16.mxu0 0
    %742 = vmatmul.mubr.bf16.gmra.mrb[0].mxu0 %v704
    %v743 = vpop.f32.mrb[0].mxu0
    %v744 = vadd.f32 0.0, %v743
    %v745 = vpop.f32.mrb[0].mxu0
    %v746 = vpop.f32.mrb[0].mxu0
    %v747 = vpop.f32.mrb[0].mxu0
    %748 = vdwg.mxu0
    %749 = vrot.lane.b32.xlu0 %v345, 56
    %v750 = vpop.permute.xlu0 %749
    %v752 = vsel %vm268, %v700, 0
    %v755 = vsel %vm478, %v750, 0
    %757 = vmatprep.subr.bf16.mxu0 0
    %758 = vmatpush1.bf16.msra.mxu0 %v755
    %759 = vmatprep.subr.bf16.mxu0 0
    %760 = vmatpush1.bf16.msra.mxu0 0
    %761 = vmatprep.subr.bf16.mxu0 0
    %762 = vmatpush1.bf16.msra.mxu0 0
    %763 = vmatprep.subr.bf16.mxu0 0
    %764 = vmatpush1.bf16.msra.mxu0 0
    %765 = vmatprep.subr.bf16.mxu0 0
    %766 = vmatpush1.bf16.msra.mxu0 0
    %767 = vmatprep.subr.bf16.mxu0 0
    %768 = vmatpush1.bf16.msra.mxu0 0
    %769 = vmatprep.subr.bf16.mxu0 0
    %770 = vmatpush1.bf16.msra.mxu0 0
    %771 = vmatprep.subr.bf16.mxu0 0
    %772 = vmatpush1.bf16.msra.mxu0 0
    %773 = vmatprep.subr.bf16.mxu0 0
    %774 = vmatpush1.bf16.msra.mxu0 0
    %775 = vmatprep.subr.bf16.mxu0 0
    %776 = vmatpush1.bf16.msra.mxu0 0
    %777 = vmatprep.subr.bf16.mxu0 0
    %778 = vmatpush1.bf16.msra.mxu0 0
    %779 = vmatprep.subr.bf16.mxu0 0
    %780 = vmatpush1.bf16.msra.mxu0 0
    %781 = vmatprep.subr.bf16.mxu0 0
    %782 = vmatpush1.bf16.msra.mxu0 0
    %783 = vmatprep.subr.bf16.mxu0 0
    %784 = vmatpush1.bf16.msra.mxu0 0
    %785 = vmatprep.subr.bf16.mxu0 0
    %786 = vmatpush1.bf16.msra.mxu0 0
    %787 = vmatprep.subr.bf16.mxu0 0
    %788 = vmatpush1.bf16.msra.mxu0 0
    %789 = vmatprep.mubr.bf16.mxu0 0
    %790 = vmatmul.mubr.bf16.gmra.mrb[0].mxu0 %v752
    %v791 = vpop.f32.mrb[0].mxu0
    %v792 = vadd.f32 0.0, %v791
    %v793 = vpop.f32.mrb[0].mxu0
    %v794 = vpop.f32.mrb[0].mxu0
    %v795 = vpop.f32.mrb[0].mxu0
    %796 = vdwg.mxu0
    %797 = vrot.lane.b32.xlu0 %v340, 112
    %v798 = vpop.permute.xlu0 %797
    %799 = vrot.lane.b32.xlu0 %v342, 80
    %v800 = vpop.permute.xlu0 %799
    %v802 = vsel %vm268, %v798, 0
    %v805 = vsel %vm268, %v800, 0
    %807 = vmatprep.subr.bf16.mxu0 0
    %808 = vmatpush1.bf16.xpose.msra.mxu0 %v805
    %809 = vmatprep.subr.bf16.mxu0 0
    %810 = vmatpush1.bf16.xpose.msra.mxu0 0
    %811 = vmatprep.subr.bf16.mxu0 0
    %812 = vmatpush1.bf16.xpose.msra.mxu0 0
    %813 = vmatprep.subr.bf16.mxu0 0
    %814 = vmatpush1.bf16.xpose.msra.mxu0 0
    %815 = vmatprep.subr.bf16.mxu0 0
    %816 = vmatpush1.bf16.xpose.msra.mxu0 0
    %817 = vmatprep.subr.bf16.mxu0 0
    %818 = vmatpush1.bf16.xpose.msra.mxu0 0
    %819 = vmatprep.subr.bf16.mxu0 0
    %820 = vmatpush1.bf16.xpose.msra.mxu0 0
    %821 = vmatprep.subr.bf16.mxu0 0
    %822 = vmatpush1.bf16.xpose.msra.mxu0 0
    %823 = vmatprep.subr.bf16.mxu0 0
    %824 = vmatpush1.bf16.xpose.msra.mxu0 0
    %825 = vmatprep.subr.bf16.mxu0 0
    %826 = vmatpush1.bf16.xpose.msra.mxu0 0
    %827 = vmatprep.subr.bf16.mxu0 0
    %828 = vmatpush1.bf16.xpose.msra.mxu0 0
    %829 = vmatprep.subr.bf16.mxu0 0
    %830 = vmatpush1.bf16.xpose.msra.mxu0 0
    %831 = vmatprep.subr.bf16.mxu0 0
    %832 = vmatpush1.bf16.xpose.msra.mxu0 0
    %833 = vmatprep.subr.bf16.mxu0 0
    %834 = vmatpush1.bf16.xpose.msra.mxu0 0
    %835 = vmatprep.subr.bf16.mxu0 0
    %836 = vmatpush1.bf16.xpose.msra.mxu0 0
    %837 = vmatprep.subr.bf16.mxu0 0
    %838 = vmatpush1.bf16.xpose.msra.mxu0 0
    %839 = vmatprep.mubr.bf16.mxu0 0
    %840 = vmatmul.mubr.bf16.gmra.mrb[0].mxu0 %v802
    %v841 = vpop.f32.mrb[0].mxu0
    %v842 = vadd.f32 0.0, %v841
    %v843 = vpop.f32.mrb[0].mxu0
    %v844 = vpop.f32.mrb[0].mxu0
    %v845 = vpop.f32.mrb[0].mxu0
    %846 = vdwg.mxu0
    %847 = vrot.lane.b32.xlu0 %v341, 112
    %v848 = vpop.permute.xlu0 %847
    %849 = vrot.lane.b32.xlu0 %v343, 80
    %v850 = vpop.permute.xlu0 %849
    %v852 = vsel %vm268, %v848, 0
    %v855 = vsel %vm268, %v850, 0
    %857 = vmatprep.subr.bf16.mxu0 0
    %858 = vmatpush1.bf16.xpose.msra.mxu0 %v855
    %859 = vmatprep.subr.bf16.mxu0 0
    %860 = vmatpush1.bf16.xpose.msra.mxu0 0
    %861 = vmatprep.subr.bf16.mxu0 0
    %862 = vmatpush1.bf16.xpose.msra.mxu0 0
    %863 = vmatprep.subr.bf16.mxu0 0
    %864 = vmatpush1.bf16.xpose.msra.mxu0 0
    %865 = vmatprep.subr.bf16.mxu0 0
    %866 = vmatpush1.bf16.xpose.msra.mxu0 0
    %867 = vmatprep.subr.bf16.mxu0 0
    %868 = vmatpush1.bf16.xpose.msra.mxu0 0
    %869 = vmatprep.subr.bf16.mxu0 0
    %870 = vmatpush1.bf16.xpose.msra.mxu0 0
    %871 = vmatprep.subr.bf16.mxu0 0
    %872 = vmatpush1.bf16.xpose.msra.mxu0 0
    %873 = vmatprep.subr.bf16.mxu0 0
    %874 = vmatpush1.bf16.xpose.msra.mxu0 0
    %875 = vmatprep.subr.bf16.mxu0 0
    %876 = vmatpush1.bf16.xpose.msra.mxu0 0
    %877 = vmatprep.subr.bf16.mxu0 0
    %878 = vmatpush1.bf16.xpose.msra.mxu0 0
    %879 = vmatprep.subr.bf16.mxu0 0
    %880 = vmatpush1.bf16.xpose.msra.mxu0 0
    %881 = vmatprep.subr.bf16.mxu0 0
    %882 = vmatpush1.bf16.xpose.msra.mxu0 0
    %883 = vmatprep.subr.bf16.mxu0 0
    %884 = vmatpush1.bf16.xpose.msra.mxu0 0
    %885 = vmatprep.subr.bf16.mxu0 0
    %886 = vmatpush1.bf16.xpose.msra.mxu0 0
    %887 = vmatprep.subr.bf16.mxu0 0
    %888 = vmatpush1.bf16.xpose.msra.mxu0 0
    %889 = vmatprep.mubr.bf16.mxu0 0
    %890 = vmatmul.mubr.bf16.gmra.mrb[0].mxu0 %v852
    %v891 = vpop.f32.mrb[0].mxu0
    %v892 = vadd.f32 0.0, %v891
    %v893 = vpop.f32.mrb[0].mxu0
    %v894 = vpop.f32.mrb[0].mxu0
    %v895 = vpop.f32.mrb[0].mxu0
    %896 = vdwg.mxu0
    %v897 = vmul.f32 %v842, 0.35355338
    %v898 = vmul.f32 %v892, 0.35355338
    %v899 = vadd.f32 %v897, %v338
    %v900 = vadd.f32 %v898, %v339
    %v901 = vsel %vm268, %v899, -inf
    %902 = vmax.xlane.f32.xlu0 %v901
    %v903 = vpop.xlane.xlu0 %902
    %v904 = vsel %vm268, %v900, -inf
    %905 = vmax.xlane.f32.xlu0 %v904
    %v906 = vpop.xlane.xlu0 %905
    %v907 = vsub.f32 %v899, %v903
    %v908 = vsub.f32 %v900, %v906
    %v909 = vmul.f32 %v907, 1.442695
    %v910 = vpow.pop %v909
    %v911 = vmul.f32 %v908, 1.442695
    %v912 = vpow.pop %v911
    %v913 = vsel %vm268, %v910, 0.0
    %914 = vadd.xlane.f32.xlu0 %v913
    %v915 = vpop.xlane.xlu0 %914
    %v916 = vsel %vm268, %v912, 0.0
    %917 = vadd.xlane.f32.xlu0 %v916
    %v918 = vpop.xlane.xlu0 %917
    %v919 = vrcp.pop %v915
    %v920 = vmul.f32 %v910, %v919
    %v921 = vrcp.pop %v918
    %v922 = vmul.f32 %v912, %v921
    %v923 = vpack.c.bf16 %v920, %v920
    %v924 = vpack.c.bf16 %v922, %v922
    %925 = vrot.lane.b32.xlu0 %v344, 48
    %v926 = vpop.permute.xlu0 %925
    %v928 = vsel %vm268, %v923, 0
    %v931 = vsel %vm478, %v926, 0
    %933 = vmatprep.subr.bf16.mxu0 0
    %934 = vmatpush1.bf16.msra.mxu0 %v931
    %935 = vmatprep.subr.bf16.mxu0 0
    %936 = vmatpush1.bf16.msra.mxu0 0
    %937 = vmatprep.subr.bf16.mxu0 0
    %938 = vmatpush1.bf16.msra.mxu0 0
    %939 = vmatprep.subr.bf16.mxu0 0
    %940 = vmatpush1.bf16.msra.mxu0 0
    %941 = vmatprep.subr.bf16.mxu0 0
    %942 = vmatpush1.bf16.msra.mxu0 0
    %943 = vmatprep.subr.bf16.mxu0 0
    %944 = vmatpush1.bf16.msra.mxu0 0
    %945 = vmatprep.subr.bf16.mxu0 0
    %946 = vmatpush1.bf16.msra.mxu0 0
    %947 = vmatprep.subr.bf16.mxu0 0
    %948 = vmatpush1.bf16.msra.mxu0 0
    %949 = vmatprep.subr.bf16.mxu0 0
    %950 = vmatpush1.bf16.msra.mxu0 0
    %951 = vmatprep.subr.bf16.mxu0 0
    %952 = vmatpush1.bf16.msra.mxu0 0
    %953 = vmatprep.subr.bf16.mxu0 0
    %954 = vmatpush1.bf16.msra.mxu0 0
    %955 = vmatprep.subr.bf16.mxu0 0
    %956 = vmatpush1.bf16.msra.mxu0 0
    %957 = vmatprep.subr.bf16.mxu0 0
    %958 = vmatpush1.bf16.msra.mxu0 0
    %959 = vmatprep.subr.bf16.mxu0 0
    %960 = vmatpush1.bf16.msra.mxu0 0
    %961 = vmatprep.subr.bf16.mxu0 0
    %962 = vmatpush1.bf16.msra.mxu0 0
    %963 = vmatprep.subr.bf16.mxu0 0
    %964 = vmatpush1.bf16.msra.mxu0 0
    %965 = vmatprep.mubr.bf16.mxu0 0
    %966 = vmatmul.mubr.bf16.gmra.mrb[0].mxu0 %v928
    %v967 = vpop.f32.mrb[0].mxu0
    %v968 = vadd.f32 0.0, %v967
    %v969 = vpop.f32.mrb[0].mxu0
    %v970 = vpop.f32.mrb[0].mxu0
    %v971 = vpop.f32.mrb[0].mxu0
    %972 = vdwg.mxu0
    %973 = vrot.lane.b32.xlu0 %v345, 48
    %v974 = vpop.permute.xlu0 %973
    %v976 = vsel %vm268, %v924, 0
    %v979 = vsel %vm478, %v974, 0
    %981 = vmatprep.subr.bf16.mxu0 0
    %982 = vmatpush1.bf16.msra.mxu0 %v979
    %983 = vmatprep.subr.bf16.mxu0 0
    %984 = vmatpush1.bf16.msra.mxu0 0
    %985 = vmatprep.subr.bf16.mxu0 0
    %986 = vmatpush1.bf16.msra.mxu0 0
    %987 = vmatprep.subr.bf16.mxu0 0
    %988 = vmatpush1.bf16.msra.mxu0 0
    %989 = vmatprep.subr.bf16.mxu0 0
    %990 = vmatpush1.bf16.msra.mxu0 0
    %991 = vmatprep.subr.bf16.mxu0 0
    %992 = vmatpush1.bf16.msra.mxu0 0
    %993 = vmatprep.subr.bf16.mxu0 0
    %994 = vmatpush1.bf16.msra.mxu0 0
    %995 = vmatprep.subr.bf16.mxu0 0
    %996 = vmatpush1.bf16.msra.mxu0 0
    %997 = vmatprep.subr.bf16.mxu0 0
    %998 = vmatpush1.bf16.msra.mxu0 0
    %999 = vmatprep.subr.bf16.mxu0 0
    %1000 = vmatpush1.bf16.msra.mxu0 0
    %1001 = vmatprep.subr.bf16.mxu0 0
    %1002 = vmatpush1.bf16.msra.mxu0 0
    %1003 = vmatprep.subr.bf16.mxu0 0
    %1004 = vmatpush1.bf16.msra.mxu0 0
    %1005 = vmatprep.subr.bf16.mxu0 0
    %1006 = vmatpush1.bf16.msra.mxu0 0
    %1007 = vmatprep.subr.bf16.mxu0 0
    %1008 = vmatpush1.bf16.msra.mxu0 0
    %1009 = vmatprep.subr.bf16.mxu0 0
    %1010 = vmatpush1.bf16.msra.mxu0 0
    %1011 = vmatprep.subr.bf16.mxu0 0
    %1012 = vmatpush1.bf16.msra.mxu0 0
    %1013 = vmatprep.mubr.bf16.mxu0 0
    %1014 = vmatmul.mubr.bf16.gmra.mrb[0].mxu0 %v976
    %v1015 = vpop.f32.mrb[0].mxu0
    %v1016 = vadd.f32 0.0, %v1015
    %v1017 = vpop.f32.mrb[0].mxu0
    %v1018 = vpop.f32.mrb[0].mxu0
    %v1019 = vpop.f32.mrb[0].mxu0
    %1020 = vdwg.mxu0
    %1021 = vrot.lane.b32.xlu0 %v340, 104
    %v1022 = vpop.permute.xlu0 %1021
    %1023 = vrot.lane.b32.xlu0 %v342, 72
    %v1024 = vpop.permute.xlu0 %1023
    %v1026 = vsel %vm268, %v1022, 0
    %v1029 = vsel %vm268, %v1024, 0
    %1031 = vmatprep.subr.bf16.mxu0 0
    %1032 = vmatpush1.bf16.xpose.msra.mxu0 %v1029
    %1033 = vmatprep.subr.bf16.mxu0 0
    %1034 = vmatpush1.bf16.xpose.msra.mxu0 0
    %1035 = vmatprep.subr.bf16.mxu0 0
    %1036 = vmatpush1.bf16.xpose.msra.mxu0 0
    %1037 = vmatprep.subr.bf16.mxu0 0
    %1038 = vmatpush1.bf16.xpose.msra.mxu0 0
    %1039 = vmatprep.subr.bf16.mxu0 0
    %1040 = vmatpush1.bf16.xpose.msra.mxu0 0
    %1041 = vmatprep.subr.bf16.mxu0 0
    %1042 = vmatpush1.bf16.xpose.msra.mxu0 0
    %1043 = vmatprep.subr.bf16.mxu0 0
    %1044 = vmatpush1.bf16.xpose.msra.mxu0 0
    %1045 = vmatprep.subr.bf16.mxu0 0
    %1046 = vmatpush1.bf16.xpose.msra.mxu0 0
    %1047 = vmatprep.subr.bf16.mxu0 0
    %1048 = vmatpush1.bf16.xpose.msra.mxu0 0
    %1049 = vmatprep.subr.bf16.mxu0 0
    %1050 = vmatpush1.bf16.xpose.msra.mxu0 0
    %1051 = vmatprep.subr.bf16.mxu0 0
    %1052 = vmatpush1.bf16.xpose.msra.mxu0 0
    %1053 = vmatprep.subr.bf16.mxu0 0
    %1054 = vmatpush1.bf16.xpose.msra.mxu0 0
    %1055 = vmatprep.subr.bf16.mxu0 0
    %1056 = vmatpush1.bf16.xpose.msra.mxu0 0
    %1057 = vmatprep.subr.bf16.mxu0 0
    %1058 = vmatpush1.bf16.xpose.msra.mxu0 0
    %1059 = vmatprep.subr.bf16.mxu0 0
    %1060 = vmatpush1.bf16.xpose.msra.mxu0 0
    %1061 = vmatprep.subr.bf16.mxu0 0
    %1062 = vmatpush1.bf16.xpose.msra.mxu0 0
    %1063 = vmatprep.mubr.bf16.mxu0 0
    %1064 = vmatmul.mubr.bf16.gmra.mrb[0].mxu0 %v1026
    %v1065 = vpop.f32.mrb[0].mxu0
    %v1066 = vadd.f32 0.0, %v1065
    %v1067 = vpop.f32.mrb[0].mxu0
    %v1068 = vpop.f32.mrb[0].mxu0
    %v1069 = vpop.f32.mrb[0].mxu0
    %1070 = vdwg.mxu0
    %1071 = vrot.lane.b32.xlu0 %v341, 104
    %v1072 = vpop.permute.xlu0 %1071
    %1073 = vrot.lane.b32.xlu0 %v343, 72
    %v1074 = vpop.permute.xlu0 %1073
    %v1076 = vsel %vm268, %v1072, 0
    %v1079 = vsel %vm268, %v1074, 0
    %1081 = vmatprep.subr.bf16.mxu0 0
    %1082 = vmatpush1.bf16.xpose.msra.mxu0 %v1079
    %1083 = vmatprep.subr.bf16.mxu0 0
    %1084 = vmatpush1.bf16.xpose.msra.mxu0 0
    %1085 = vmatprep.subr.bf16.mxu0 0
    %1086 = vmatpush1.bf16.xpose.msra.mxu0 0
    %1087 = vmatprep.subr.bf16.mxu0 0
    %1088 = vmatpush1.bf16.xpose.msra.mxu0 0
    %1089 = vmatprep.subr.bf16.mxu0 0
    %1090 = vmatpush1.bf16.xpose.msra.mxu0 0
    %1091 = vmatprep.subr.bf16.mxu0 0
    %1092 = vmatpush1.bf16.xpose.msra.mxu0 0
    %1093 = vmatprep.subr.bf16.mxu0 0
    %1094 = vmatpush1.bf16.xpose.msra.mxu0 0
    %1095 = vmatprep.subr.bf16.mxu0 0
    %1096 = vmatpush1.bf16.xpose.msra.mxu0 0
    %1097 = vmatprep.subr.bf16.mxu0 0
    %1098 = vmatpush1.bf16.xpose.msra.mxu0 0
    %1099 = vmatprep.subr.bf16.mxu0 0
    %1100 = vmatpush1.bf16.xpose.msra.mxu0 0
    %1101 = vmatprep.subr.bf16.mxu0 0
    %1102 = vmatpush1.bf16.xpose.msra.mxu0 0
    %1103 = vmatprep.subr.bf16.mxu0 0
    %1104 = vmatpush1.bf16.xpose.msra.mxu0 0
    %1105 = vmatprep.subr.bf16.mxu0 0
    %1106 = vmatpush1.bf16.xpose.msra.mxu0 0
    %1107 = vmatprep.subr.bf16.mxu0 0
    %1108 = vmatpush1.bf16.xpose.msra.mxu0 0
    %1109 = vmatprep.subr.bf16.mxu0 0
    %1110 = vmatpush1.bf16.xpose.msra.mxu0 0
    %1111 = vmatprep.subr.bf16.mxu0 0
    %1112 = vmatpush1.bf16.xpose.msra.mxu0 0
    %1113 = vmatprep.mubr.bf16.mxu0 0
    %1114 = vmatmul.mubr.bf16.gmra.mrb[0].mxu0 %v1076
    %v1115 = vpop.f32.mrb[0].mxu0
    %v1116 = vadd.f32 0.0, %v1115
    %v1117 = vpop.f32.mrb[0].mxu0
    %v1118 = vpop.f32.mrb[0].mxu0
    %v1119 = vpop.f32.mrb[0].mxu0
    %1120 = vdwg.mxu0
    %v1121 = vmul.f32 %v1066, 0.35355338
    %v1122 = vmul.f32 %v1116, 0.35355338
    %v1123 = vadd.f32 %v1121, %v338
    %v1124 = vadd.f32 %v1122, %v339
    %v1125 = vsel %vm268, %v1123, -inf
    %1126 = vmax.xlane.f32.xlu0 %v1125
    %v1127 = vpop.xlane.xlu0 %1126
    %v1128 = vsel %vm268, %v1124, -inf
    %1129 = vmax.xlane.f32.xlu0 %v1128
    %v1130 = vpop.xlane.xlu0 %1129
    %v1131 = vsub.f32 %v1123, %v1127
    %v1132 = vsub.f32 %v1124, %v1130
    %v1133 = vmul.f32 %v1131, 1.442695
    %v1134 = vpow.pop %v1133
    %v1135 = vmul.f32 %v1132, 1.442695
    %v1136 = vpow.pop %v1135
    %v1137 = vsel %vm268, %v1134, 0.0
    %1138 = vadd.xlane.f32.xlu0 %v1137
    %v1139 = vpop.xlane.xlu0 %1138
    %v1140 = vsel %vm268, %v1136, 0.0
    %1141 = vadd.xlane.f32.xlu0 %v1140
    %v1142 = vpop.xlane.xlu0 %1141
    %v1143 = vrcp.pop %v1139
    %v1144 = vmul.f32 %v1134, %v1143
    %v1145 = vrcp.pop %v1142
    %v1146 = vmul.f32 %v1136, %v1145
    %v1147 = vpack.c.bf16 %v1144, %v1144
    %v1148 = vpack.c.bf16 %v1146, %v1146
    %1149 = vrot.lane.b32.xlu0 %v344, 40
    %v1150 = vpop.permute.xlu0 %1149
    %v1152 = vsel %vm268, %v1147, 0
    %v1155 = vsel %vm478, %v1150, 0
    %1157 = vmatprep.subr.bf16.mxu0 0
    %1158 = vmatpush1.bf16.msra.mxu0 %v1155
    %1159 = vmatprep.subr.bf16.mxu0 0
    %1160 = vmatpush1.bf16.msra.mxu0 0
    %1161 = vmatprep.subr.bf16.mxu0 0
    %1162 = vmatpush1.bf16.msra.mxu0 0
    %1163 = vmatprep.subr.bf16.mxu0 0
    %1164 = vmatpush1.bf16.msra.mxu0 0
    %1165 = vmatprep.subr.bf16.mxu0 0
    %1166 = vmatpush1.bf16.msra.mxu0 0
    %1167 = vmatprep.subr.bf16.mxu0 0
    %1168 = vmatpush1.bf16.msra.mxu0 0
    %1169 = vmatprep.subr.bf16.mxu0 0
    %1170 = vmatpush1.bf16.msra.mxu0 0
    %1171 = vmatprep.subr.bf16.mxu0 0
    %1172 = vmatpush1.bf16.msra.mxu0 0
    %1173 = vmatprep.subr.bf16.mxu0 0
    %1174 = vmatpush1.bf16.msra.mxu0 0
    %1175 = vmatprep.subr.bf16.mxu0 0
    %1176 = vmatpush1.bf16.msra.mxu0 0
    %1177 = vmatprep.subr.bf16.mxu0 0
    %1178 = vmatpush1.bf16.msra.mxu0 0
    %1179 = vmatprep.subr.bf16.mxu0 0
    %1180 = vmatpush1.bf16.msra.mxu0 0
    %1181 = vmatprep.subr.bf16.mxu0 0
    %1182 = vmatpush1.bf16.msra.mxu0 0
    %1183 = vmatprep.subr.bf16.mxu0 0
    %1184 = vmatpush1.bf16.msra.mxu0 0
    %1185 = vmatprep.subr.bf16.mxu0 0
    %1186 = vmatpush1.bf16.msra.mxu0 0
    %1187 = vmatprep.subr.bf16.mxu0 0
    %1188 = vmatpush1.bf16.msra.mxu0 0
    %1189 = vmatprep.mubr.bf16.mxu0 0
    %1190 = vmatmul.mubr.bf16.gmra.mrb[0].mxu0 %v1152
    %v1191 = vpop.f32.mrb[0].mxu0
    %v1192 = vadd.f32 0.0, %v1191
    %v1193 = vpop.f32.mrb[0].mxu0
    %v1194 = vpop.f32.mrb[0].mxu0
    %v1195 = vpop.f32.mrb[0].mxu0
    %1196 = vdwg.mxu0
    %1197 = vrot.lane.b32.xlu0 %v345, 40
    %v1198 = vpop.permute.xlu0 %1197
    %v1200 = vsel %vm268, %v1148, 0
    %v1203 = vsel %vm478, %v1198, 0
    %1205 = vmatprep.subr.bf16.mxu0 0
    %1206 = vmatpush1.bf16.msra.mxu0 %v1203
    %1207 = vmatprep.subr.bf16.mxu0 0
    %1208 = vmatpush1.bf16.msra.mxu0 0
    %1209 = vmatprep.subr.bf16.mxu0 0
    %1210 = vmatpush1.bf16.msra.mxu0 0
    %1211 = vmatprep.subr.bf16.mxu0 0
    %1212 = vmatpush1.bf16.msra.mxu0 0
    %1213 = vmatprep.subr.bf16.mxu0 0
    %1214 = vmatpush1.bf16.msra.mxu0 0
    %1215 = vmatprep.subr.bf16.mxu0 0
    %1216 = vmatpush1.bf16.msra.mxu0 0
    %1217 = vmatprep.subr.bf16.mxu0 0
    %1218 = vmatpush1.bf16.msra.mxu0 0
    %1219 = vmatprep.subr.bf16.mxu0 0
    %1220 = vmatpush1.bf16.msra.mxu0 0
    %1221 = vmatprep.subr.bf16.mxu0 0
    %1222 = vmatpush1.bf16.msra.mxu0 0
    %1223 = vmatprep.subr.bf16.mxu0 0
    %1224 = vmatpush1.bf16.msra.mxu0 0
    %1225 = vmatprep.subr.bf16.mxu0 0
    %1226 = vmatpush1.bf16.msra.mxu0 0
    %1227 = vmatprep.subr.bf16.mxu0 0
    %1228 = vmatpush1.bf16.msra.mxu0 0
    %1229 = vmatprep.subr.bf16.mxu0 0
    %1230 = vmatpush1.bf16.msra.mxu0 0
    %1231 = vmatprep.subr.bf16.mxu0 0
    %1232 = vmatpush1.bf16.msra.mxu0 0
    %1233 = vmatprep.subr.bf16.mxu0 0
    %1234 = vmatpush1.bf16.msra.mxu0 0
    %1235 = vmatprep.subr.bf16.mxu0 0
    %1236 = vmatpush1.bf16.msra.mxu0 0
    %1237 = vmatprep.mubr.bf16.mxu0 0
    %1238 = vmatmul.mubr.bf16.gmra.mrb[0].mxu0 %v1200
    %v1239 = vpop.f32.mrb[0].mxu0
    %v1240 = vadd.f32 0.0, %v1239
    %v1241 = vpop.f32.mrb[0].mxu0
    %v1242 = vpop.f32.mrb[0].mxu0
    %v1243 = vpop.f32.mrb[0].mxu0
    %1244 = vdwg.mxu0
    %1247 = vrot.lane.b32.xlu0 %v744, 8
    %v1248 = vpop.permute.xlu0 %1247
    %1249 = vrot.lane.b32.xlu0 %v792, 8
    %v1250 = vpop.permute.xlu0 %1249
    %1255 = vrot.lane.b32.xlu0 %v968, 16
    %v1256 = vpop.permute.xlu0 %1255
    %1257 = vrot.lane.b32.xlu0 %v1016, 16
    %v1258 = vpop.permute.xlu0 %1257
    %1263 = vrot.lane.b32.xlu0 %v1192, 24
    %v1264 = vpop.permute.xlu0 %1263
    %1265 = vrot.lane.b32.xlu0 %v1240, 24
    %v1266 = vpop.permute.xlu0 %1265
    %v1269 = vsel %vm268, %v517, %v1248
    %v1270 = vsel %vm268, %v566, %v1250
    %v1271 = vsel %vm274, %v1269, %v1256
    %v1272 = vsel %vm274, %v1270, %v1258
    %v1273 = vsel %vm280, %v1271, %v1264
    %v1274 = vsel %vm280, %v1272, %v1266
    %v1275 = vpack.c.bf16 %v1274, %v1273
    %v1276 = vld [vmem:[#allocation10] sm:$0xf]
    %v1277 = vld [vmem:[#allocation10 + $0x4] sm:$0xf]
    %v1278 = vld [vmem:[#allocation10 + $0x8] sm:$0xf]
    %v1279 = vld [vmem:[#allocation10 + $0xc] sm:$0xf]
    %v1284 = vunpack.c.l.b16 %v1276
    %v1285 = vunpack.c.l.b16 %v1277
    %v1286 = vunpack.c.l.b16 %v1278
    %v1287 = vunpack.c.l.b16 %v1279
    %v1288 = vpack.c.b16 %v1285, %v1284
    %v1289 = vpack.c.b16 %v1287, %v1286
    %v1293 = vsel %vm200, %v1275, 0
    %1295 = vmatprep.subr.bf16.mxu0 0
    %1296 = vmatpush1.bf16.msra.mxu0 %v1288
    %1297 = vmatprep.subr.bf16.mxu0 0
    %1298 = vmatpush1.bf16.msra.mxu0 %v1289
    %1299 = vmatprep.subr.bf16.mxu0 0
    %1300 = vmatpush1.bf16.msra.mxu0 0
    %1301 = vmatprep.subr.bf16.mxu0 0
    %1302 = vmatpush1.bf16.msra.mxu0 0
    %1303 = vmatprep.subr.bf16.mxu0 0
    %1304 = vmatpush1.bf16.msra.mxu0 0
    %1305 = vmatprep.subr.bf16.mxu0 0
    %1306 = vmatpush1.bf16.msra.mxu0 0
    %1307 = vmatprep.subr.bf16.mxu0 0
    %1308 = vmatpush1.bf16.msra.mxu0 0
    %1309 = vmatprep.subr.bf16.mxu0 0
    %1310 = vmatpush1.bf16.msra.mxu0 0
    %1311 = vmatprep.subr.bf16.mxu0 0
    %1312 = vmatpush1.bf16.msra.mxu0 0
    %1313 = vmatprep.subr.bf16.mxu0 0
    %1314 = vmatpush1.bf16.msra.mxu0 0
    %1315 = vmatprep.subr.bf16.mxu0 0
    %1316 = vmatpush1.bf16.msra.mxu0 0
    %1317 = vmatprep.subr.bf16.mxu0 0
    %1318 = vmatpush1.bf16.msra.mxu0 0
    %1319 = vmatprep.subr.bf16.mxu0 0
    %1320 = vmatpush1.bf16.msra.mxu0 0
    %1321 = vmatprep.subr.bf16.mxu0 0
    %1322 = vmatpush1.bf16.msra.mxu0 0
    %1323 = vmatprep.subr.bf16.mxu0 0
    %1324 = vmatpush1.bf16.msra.mxu0 0
    %1325 = vmatprep.subr.bf16.mxu0 0
    %1326 = vmatpush1.bf16.msra.mxu0 0
    %1327 = vmatprep.mubr.bf16.mxu0 0
    %1328 = vmatmul.mubr.bf16.gmra.mrb[0].mxu0 %v1293
    %v1329 = vpop.f32.mrb[0].mxu0
    %v1330 = vadd.f32 0.0, %v1329
    %v1331 = vpop.f32.mrb[0].mxu0
    %v1332 = vpop.f32.mrb[0].mxu0
    %v1333 = vadd.f32 0.0, %v1332
    %v1334 = vpop.f32.mrb[0].mxu0
    %1335 = vdwg.mxu0
    %v1336 = vadd.f32 %v179, %v1330
    %v1337 = vadd.f32 %v180, %v1333
    %v1338 = vld [vmem:[%s15] sm:$0x1]
    %v1339 = vld [vmem:[%s16] sm:$0x1]
    %v1340 = vsel %vm200, %v1336, 0.0
    %1341 = vadd.xlane.f32.xlu0 %v1340
    %v1342 = vpop.xlane.xlu0 %1341
    %v1343 = vsel %vm200, %v1337, 0.0
    %1344 = vadd.xlane.f32.xlu0 %v1343
    %v1345 = vpop.xlane.xlu0 %1344
    %v1346 = vrcp.pop 32.0
    %v1347 = vmul.f32 %v1342, %v1346
    %v1348 = vmul.f32 %v1345, %v1346
    %v1349 = vsub.f32 %v1336, %v1347
    %v1350 = vsub.f32 %v1337, %v1348
    %v1351 = vmul.f32 %v1349, %v1349
    %v1352 = vmul.f32 %v1350, %v1350
    %v1353 = vsel %vm200, %v1351, 0.0
    %1354 = vadd.xlane.f32.xlu0 %v1353
    %v1355 = vpop.xlane.xlu0 %1354
    %v1356 = vsel %vm200, %v1352, 0.0
    %1357 = vadd.xlane.f32.xlu0 %v1356
    %v1358 = vpop.xlane.xlu0 %1357
    %v1359 = vmul.f32 %v1355, %v1346
    %v1360 = vmul.f32 %v1358, %v1346
    %v1361 = vadd.f32 %v1359, 1e-05
    %v1362 = vadd.f32 %v1360, 1e-05
    %v1363 = vrsqrt.pop %v1361
    %v1364 = vrsqrt.pop %v1362
    %v1365 = vmul.f32 %v1349, %v1363
    %v1366 = vmul.f32 %v1350, %v1364
    %v1368 = vlaneseq
    %v1369 = vshrl.u32 %v1368, 7
    %v1370 = vsub.s32 0, %v1369
    %v1371 = vrot.slane %v1338, %v1370
    %v1373 = vmul.f32 %v1365, %v1371
    %v1374 = vmul.f32 %v1366, %v1371
    %v1376 = vlaneseq
    %v1377 = vshrl.u32 %v1376, 7
    %v1378 = vsub.s32 0, %v1377
    %v1379 = vrot.slane %v1339, %v1378
    %v1381 = vadd.f32 %v1373, %v1379
    %v1382 = vadd.f32 %v1374, %v1379
    %v1383 = vpack.c.bf16 %v1382, %v1381
    %v1384 = vld [vmem:[#allocation11] sm:$0xf]
    %v1385 = vld [vmem:[#allocation11 + $0x4] sm:$0xf]
    %v1386 = vld [vmem:[#allocation11 + $0x8] sm:$0xf]
    %v1387 = vld [vmem:[#allocation11 + $0xc] sm:$0xf]
    %v1392 = vunpack.c.l.b16 %v1384
    %v1393 = vunpack.c.l.b16 %v1385
    %v1394 = vunpack.c.l.b16 %v1386
    %v1395 = vunpack.c.l.b16 %v1387
    %v1396 = vpack.c.b16 %v1393, %v1392
    %v1397 = vpack.c.b16 %v1395, %v1394
    %v1401 = vsel %vm200, %v1383, 0
    %1403 = vmatprep.subr.bf16.mxu0 0
    %1404 = vmatpush1.bf16.msra.mxu0 %v1396
    %1405 = vmatprep.subr.bf16.mxu0 0
    %1406 = vmatpush1.bf16.msra.mxu0 %v1397
    %1407 = vmatprep.subr.bf16.mxu0 0
    %1408 = vmatpush1.bf16.msra.mxu0 0
    %1409 = vmatprep.subr.bf16.mxu0 0
    %1410 = vmatpush1.bf16.msra.mxu0 0
    %1411 = vmatprep.subr.bf16.mxu0 0
    %1412 = vmatpush1.bf16.msra.mxu0 0
    %1413 = vmatprep.subr.bf16.mxu0 0
    %1414 = vmatpush1.bf16.msra.mxu0 0
    %1415 = vmatprep.subr.bf16.mxu0 0
    %1416 = vmatpush1.bf16.msra.mxu0 0
    %1417 = vmatprep.subr.bf16.mxu0 0
    %1418 = vmatpush1.bf16.msra.mxu0 0
    %1419 = vmatprep.subr.bf16.mxu0 0
    %1420 = vmatpush1.bf16.msra.mxu0 0
    %1421 = vmatprep.subr.bf16.mxu0 0
    %1422 = vmatpush1.bf16.msra.mxu0 0
    %1423 = vmatprep.subr.bf16.mxu0 0
    %1424 = vmatpush1.bf16.msra.mxu0 0
    %1425 = vmatprep.subr.bf16.mxu0 0
    %1426 = vmatpush1.bf16.msra.mxu0 0
    %1427 = vmatprep.subr.bf16.mxu0 0
    %1428 = vmatpush1.bf16.msra.mxu0 0
    %1429 = vmatprep.subr.bf16.mxu0 0
    %1430 = vmatpush1.bf16.msra.mxu0 0
    %1431 = vmatprep.subr.bf16.mxu0 0
    %1432 = vmatpush1.bf16.msra.mxu0 0
    %1433 = vmatprep.subr.bf16.mxu0 0
    %1434 = vmatpush1.bf16.msra.mxu0 0
    %1435 = vmatprep.mubr.bf16.mxu0 0
    %1436 = vmatmul.mubr.bf16.gmra.mrb[0].mxu0 %v1401
    %v1437 = vpop.f32.mrb[0].mxu0
    %v1438 = vadd.f32 0.0, %v1437
    %v1439 = vpop.f32.mrb[0].mxu0
    %v1440 = vpop.f32.mrb[0].mxu0
    %v1441 = vadd.f32 0.0, %v1440
    %v1442 = vpop.f32.mrb[0].mxu0
    %1443 = vdwg.mxu0
    %v1444 = vld [vmem:[%s9] sm:$0xf]
    %v1445 = vld [vmem:[%s9 + $0x4] sm:$0xf]
    %v1446 = vld [vmem:[%s9 + $0x8] sm:$0xf]
    %v1447 = vld [vmem:[%s9 + $0xc] sm:$0xf]
    %v1450 = vunpack.c.l.b16 %v181
    %v1451 = vunpack.c.l.b16 %v182
    %v1452 = vpack.c.b16 %v1451, %v1450
    %v1457 = vunpack.c.l.b16 %v1444
    %v1458 = vunpack.c.l.b16 %v1445
    %v1459 = vunpack.c.l.b16 %v1446
    %v1460 = vunpack.c.l.b16 %v1447
    %v1461 = vpack.c.b16 %v1458, %v1457
    %v1462 = vpack.c.b16 %v1460, %v1459
    %v1466 = vsel %vm200, %v1452, 0
    %1468 = vmatprep.subr.bf16.mxu0 0
    %1469 = vmatpush1.bf16.msra.mxu0 %v1461
    %1470 = vmatprep.subr.bf16.mxu0 0
    %1471 = vmatpush1.bf16.msra.mxu0 %v1462
    %1472 = vmatprep.subr.bf16.mxu0 0
    %1473 = vmatpush1.bf16.msra.mxu0 0
    %1474 = vmatprep.subr.bf16.mxu0 0
    %1475 = vmatpush1.bf16.msra.mxu0 0
    %1476 = vmatprep.subr.bf16.mxu0 0
    %1477 = vmatpush1.bf16.msra.mxu0 0
    %1478 = vmatprep.subr.bf16.mxu0 0
    %1479 = vmatpush1.bf16.msra.mxu0 0
    %1480 = vmatprep.subr.bf16.mxu0 0
    %1481 = vmatpush1.bf16.msra.mxu0 0
    %1482 = vmatprep.subr.bf16.mxu0 0
    %1483 = vmatpush1.bf16.msra.mxu0 0
    %1484 = vmatprep.subr.bf16.mxu0 0
    %1485 = vmatpush1.bf16.msra.mxu0 0
    %1486 = vmatprep.subr.bf16.mxu0 0
    %1487 = vmatpush1.bf16.msra.mxu0 0
    %1488 = vmatprep.subr.bf16.mxu0 0
    %1489 = vmatpush1.bf16.msra.mxu0 0
    %1490 = vmatprep.subr.bf16.mxu0 0
    %1491 = vmatpush1.bf16.msra.mxu0 0
    %1492 = vmatprep.subr.bf16.mxu0 0
    %1493 = vmatpush1.bf16.msra.mxu0 0
    %1494 = vmatprep.subr.bf16.mxu0 0
    %1495 = vmatpush1.bf16.msra.mxu0 0
    %1496 = vmatprep.subr.bf16.mxu0 0
    %1497 = vmatpush1.bf16.msra.mxu0 0
    %1498 = vmatprep.subr.bf16.mxu0 0
    %1499 = vmatpush1.bf16.msra.mxu0 0
    %1500 = vmatprep.mubr.bf16.mxu0 0
    %1501 = vmatmul.mubr.bf16.gmra.mrb[0].mxu0 %v1466
    %v1502 = vpop.f32.mrb[0].mxu0
    %v1503 = vadd.f32 0.0, %v1502
    %v1504 = vpop.f32.mrb[0].mxu0
    %v1505 = vpop.f32.mrb[0].mxu0
    %v1506 = vadd.f32 0.0, %v1505
    %v1507 = vpop.f32.mrb[0].mxu0
    %1508 = vdwg.mxu0
    %v1509 = vld [vmem:[#allocation7] sm:$0xff]
    %v1510 = vld [vmem:[#allocation7 + $0x8] sm:$0xff]
    %v1511 = vpack.c.bf16 %v1438, %v1438
    %v1512 = vpack.c.bf16 %v1441, %v1441
    %v1513 = vpack.c.bf16 %v1503, %v1503
    %v1514 = vpack.c.bf16 %v1506, %v1506
    %v1516 = vsel %vm268, %v1511, 0
    %v1519 = vsel %vm268, %v1513, 0
    %1521 = vmatprep.subr.bf16.mxu0 0
    %1522 = vmatpush1.bf16.xpose.msra.mxu0 %v1519
    %1523 = vmatprep.subr.bf16.mxu0 0
    %1524 = vmatpush1.bf16.xpose.msra.mxu0 0
    %1525 = vmatprep.subr.bf16.mxu0 0
    %1526 = vmatpush1.bf16.xpose.msra.mxu0 0
    %1527 = vmatprep.subr.bf16.mxu0 0
    %1528 = vmatpush1.bf16.xpose.msra.mxu0 0
    %1529 = vmatprep.subr.bf16.mxu0 0
    %1530 = vmatpush1.bf16.xpose.msra.mxu0 0
    %1531 = vmatprep.subr.bf16.mxu0 0
    %1532 = vmatpush1.bf16.xpose.msra.mxu0 0
    %1533 = vmatprep.subr.bf16.mxu0 0
    %1534 = vmatpush1.bf16.xpose.msra.mxu0 0
    %1535 = vmatprep.subr.bf16.mxu0 0
    %1536 = vmatpush1.bf16.xpose.msra.mxu0 0
    %1537 = vmatprep.subr.bf16.mxu0 0
    %1538 = vmatpush1.bf16.xpose.msra.mxu0 0
    %1539 = vmatprep.subr.bf16.mxu0 0
    %1540 = vmatpush1.bf16.xpose.msra.mxu0 0
    %1541 = vmatprep.subr.bf16.mxu0 0
    %1542 = vmatpush1.bf16.xpose.msra.mxu0 0
    %1543 = vmatprep.subr.bf16.mxu0 0
    %1544 = vmatpush1.bf16.xpose.msra.mxu0 0
    %1545 = vmatprep.subr.bf16.mxu0 0
    %1546 = vmatpush1.bf16.xpose.msra.mxu0 0
    %1547 = vmatprep.subr.bf16.mxu0 0
    %1548 = vmatpush1.bf16.xpose.msra.mxu0 0
    %1549 = vmatprep.subr.bf16.mxu0 0
    %1550 = vmatpush1.bf16.xpose.msra.mxu0 0
    %1551 = vmatprep.subr.bf16.mxu0 0
    %1552 = vmatpush1.bf16.xpose.msra.mxu0 0
    %1553 = vmatprep.mubr.bf16.mxu0 0
    %1554 = vmatmul.mubr.bf16.gmra.mrb[0].mxu0 %v1516
    %v1555 = vpop.f32.mrb[0].mxu0
    %v1556 = vadd.f32 0.0, %v1555
    %v1557 = vpop.f32.mrb[0].mxu0
    %v1558 = vpop.f32.mrb[0].mxu0
    %v1559 = vpop.f32.mrb[0].mxu0
    %1560 = vdwg.mxu0
    %v1562 = vsel %vm268, %v1512, 0
    %v1565 = vsel %vm268, %v1514, 0
    %1567 = vmatprep.subr.bf16.mxu0 0
    %1568 = vmatpush1.bf16.xpose.msra.mxu0 %v1565
    %1569 = vmatprep.subr.bf16.mxu0 0
    %1570 = vmatpush1.bf16.xpose.msra.mxu0 0
    %1571 = vmatprep.subr.bf16.mxu0 0
    %1572 = vmatpush1.bf16.xpose.msra.mxu0 0
    %1573 = vmatprep.subr.bf16.mxu0 0
    %1574 = vmatpush1.bf16.xpose.msra.mxu0 0
    %1575 = vmatprep.subr.bf16.mxu0 0
    %1576 = vmatpush1.bf16.xpose.msra.mxu0 0
    %1577 = vmatprep.subr.bf16.mxu0 0
    %1578 = vmatpush1.bf16.xpose.msra.mxu0 0
    %1579 = vmatprep.subr.bf16.mxu0 0
    %1580 = vmatpush1.bf16.xpose.msra.mxu0 0
    %1581 = vmatprep.subr.bf16.mxu0 0
    %1582 = vmatpush1.bf16.xpose.msra.mxu0 0
    %1583 = vmatprep.subr.bf16.mxu0 0
    %1584 = vmatpush1.bf16.xpose.msra.mxu0 0
    %1585 = vmatprep.subr.bf16.mxu0 0
    %1586 = vmatpush1.bf16.xpose.msra.mxu0 0
    %1587 = vmatprep.subr.bf16.mxu0 0
    %1588 = vmatpush1.bf16.xpose.msra.mxu0 0
    %1589 = vmatprep.subr.bf16.mxu0 0
    %1590 = vmatpush1.bf16.xpose.msra.mxu0 0
    %1591 = vmatprep.subr.bf16.mxu0 0
    %1592 = vmatpush1.bf16.xpose.msra.mxu0 0
    %1593 = vmatprep.subr.bf16.mxu0 0
    %1594 = vmatpush1.bf16.xpose.msra.mxu0 0
    %1595 = vmatprep.subr.bf16.mxu0 0
    %1596 = vmatpush1.bf16.xpose.msra.mxu0 0
    %1597 = vmatprep.subr.bf16.mxu0 0
    %1598 = vmatpush1.bf16.xpose.msra.mxu0 0
    %1599 = vmatprep.mubr.bf16.mxu0 0
    %1600 = vmatmul.mubr.bf16.gmra.mrb[0].mxu0 %v1562
    %v1601 = vpop.f32.mrb[0].mxu0
    %v1602 = vadd.f32 0.0, %v1601
    %v1603 = vpop.f32.mrb[0].mxu0
    %v1604 = vpop.f32.mrb[0].mxu0
    %v1605 = vpop.f32.mrb[0].mxu0
    %1606 = vdwg.mxu0
    %v1607 = vmul.f32 %v1556, 0.35355338
    %v1608 = vmul.f32 %v1602, 0.35355338
    %v1609 = vadd.f32 %v1607, %v1509
    %v1610 = vadd.f32 %v1608, %v1510
    %v1611 = vsel %vm268, %v1609, -inf
    %1612 = vmax.xlane.f32.xlu0 %v1611
    %v1613 = vpop.xlane.xlu0 %1612
    %v1614 = vsel %vm268, %v1610, -inf
    %1615 = vmax.xlane.f32.xlu0 %v1614
    %v1616 = vpop.xlane.xlu0 %1615
    %v1617 = vsub.f32 %v1609, %v1613
    %v1618 = vsub.f32 %v1610, %v1616
    %v1619 = vmul.f32 %v1617, 1.442695
    %v1620 = vpow.pop %v1619
    %v1621 = vmul.f32 %v1618, 1.442695
    %v1622 = vpow.pop %v1621
    %v1623 = vsel %vm268, %v1620, 0.0
    %1624 = vadd.xlane.f32.xlu0 %v1623
    %v1625 = vpop.xlane.xlu0 %1624
    %v1626 = vsel %vm268, %v1622, 0.0
    %1627 = vadd.xlane.f32.xlu0 %v1626
    %v1628 = vpop.xlane.xlu0 %1627
    %v1629 = vrcp.pop %v1625
    %v1630 = vmul.f32 %v1620, %v1629
    %v1631 = vrcp.pop %v1628
    %v1632 = vmul.f32 %v1622, %v1631
    %v1633 = vpack.c.bf16 %v1630, %v1630
    %v1634 = vpack.c.bf16 %v1632, %v1632
    %1636 = vrot.lane.b32.xlu0 %v1513, 96
    %v1637 = vpop.permute.xlu0 %1636
    %v1639 = vsel %vm268, %v1633, 0
    %v1642 = vsel %vm478, %v1637, 0
    %1644 = vmatprep.subr.bf16.mxu0 0
    %1645 = vmatpush1.bf16.msra.mxu0 %v1642
    %1646 = vmatprep.subr.bf16.mxu0 0
    %1647 = vmatpush1.bf16.msra.mxu0 0
    %1648 = vmatprep.subr.bf16.mxu0 0
    %1649 = vmatpush1.bf16.msra.mxu0 0
    %1650 = vmatprep.subr.bf16.mxu0 0
    %1651 = vmatpush1.bf16.msra.mxu0 0
    %1652 = vmatprep.subr.bf16.mxu0 0
    %1653 = vmatpush1.bf16.msra.mxu0 0
    %1654 = vmatprep.subr.bf16.mxu0 0
    %1655 = vmatpush1.bf16.msra.mxu0 0
    %1656 = vmatprep.subr.bf16.mxu0 0
    %1657 = vmatpush1.bf16.msra.mxu0 0
    %1658 = vmatprep.subr.bf16.mxu0 0
    %1659 = vmatpush1.bf16.msra.mxu0 0
    %1660 = vmatprep.subr.bf16.mxu0 0
    %1661 = vmatpush1.bf16.msra.mxu0 0
    %1662 = vmatprep.subr.bf16.mxu0 0
    %1663 = vmatpush1.bf16.msra.mxu0 0
    %1664 = vmatprep.subr.bf16.mxu0 0
    %1665 = vmatpush1.bf16.msra.mxu0 0
    %1666 = vmatprep.subr.bf16.mxu0 0
    %1667 = vmatpush1.bf16.msra.mxu0 0
    %1668 = vmatprep.subr.bf16.mxu0 0
    %1669 = vmatpush1.bf16.msra.mxu0 0
    %1670 = vmatprep.subr.bf16.mxu0 0
    %1671 = vmatpush1.bf16.msra.mxu0 0
    %1672 = vmatprep.subr.bf16.mxu0 0
    %1673 = vmatpush1.bf16.msra.mxu0 0
    %1674 = vmatprep.subr.bf16.mxu0 0
    %1675 = vmatpush1.bf16.msra.mxu0 0
    %1676 = vmatprep.mubr.bf16.mxu0 0
    %1677 = vmatmul.mubr.bf16.gmra.mrb[0].mxu0 %v1639
    %v1678 = vpop.f32.mrb[0].mxu0
    %v1679 = vadd.f32 0.0, %v1678
    %v1680 = vpop.f32.mrb[0].mxu0
    %v1681 = vpop.f32.mrb[0].mxu0
    %v1682 = vpop.f32.mrb[0].mxu0
    %1683 = vdwg.mxu0
    %1685 = vrot.lane.b32.xlu0 %v1514, 96
    %v1686 = vpop.permute.xlu0 %1685
    %v1688 = vsel %vm268, %v1634, 0
    %v1691 = vsel %vm478, %v1686, 0
    %1693 = vmatprep.subr.bf16.mxu0 0
    %1694 = vmatpush1.bf16.msra.mxu0 %v1691
    %1695 = vmatprep.subr.bf16.mxu0 0
    %1696 = vmatpush1.bf16.msra.mxu0 0
    %1697 = vmatprep.subr.bf16.mxu0 0
    %1698 = vmatpush1.bf16.msra.mxu0 0
    %1699 = vmatprep.subr.bf16.mxu0 0
    %1700 = vmatpush1.bf16.msra.mxu0 0
    %1701 = vmatprep.subr.bf16.mxu0 0
    %1702 = vmatpush1.bf16.msra.mxu0 0
    %1703 = vmatprep.subr.bf16.mxu0 0
    %1704 = vmatpush1.bf16.msra.mxu0 0
    %1705 = vmatprep.subr.bf16.mxu0 0
    %1706 = vmatpush1.bf16.msra.mxu0 0
    %1707 = vmatprep.subr.bf16.mxu0 0
    %1708 = vmatpush1.bf16.msra.mxu0 0
    %1709 = vmatprep.subr.bf16.mxu0 0
    %1710 = vmatpush1.bf16.msra.mxu0 0
    %1711 = vmatprep.subr.bf16.mxu0 0
    %1712 = vmatpush1.bf16.msra.mxu0 0
    %1713 = vmatprep.subr.bf16.mxu0 0
    %1714 = vmatpush1.bf16.msra.mxu0 0
    %1715 = vmatprep.subr.bf16.mxu0 0
    %1716 = vmatpush1.bf16.msra.mxu0 0
    %1717 = vmatprep.subr.bf16.mxu0 0
    %1718 = vmatpush1.bf16.msra.mxu0 0
    %1719 = vmatprep.subr.bf16.mxu0 0
    %1720 = vmatpush1.bf16.msra.mxu0 0
    %1721 = vmatprep.subr.bf16.mxu0 0
    %1722 = vmatpush1.bf16.msra.mxu0 0
    %1723 = vmatprep.subr.bf16.mxu0 0
    %1724 = vmatpush1.bf16.msra.mxu0 0
    %1725 = vmatprep.mubr.bf16.mxu0 0
    %1726 = vmatmul.mubr.bf16.gmra.mrb[0].mxu0 %v1688
    %v1727 = vpop.f32.mrb[0].mxu0
    %v1728 = vadd.f32 0.0, %v1727
    %v1729 = vpop.f32.mrb[0].mxu0
    %v1730 = vpop.f32.mrb[0].mxu0
    %v1731 = vpop.f32.mrb[0].mxu0
    %1732 = vdwg.mxu0
    %1734 = vrot.lane.b32.xlu0 %v1511, 120
    %v1735 = vpop.permute.xlu0 %1734
    %1736 = vrot.lane.b32.xlu0 %v1513, 120
    %v1737 = vpop.permute.xlu0 %1736
    %v1739 = vsel %vm268, %v1735, 0
    %v1742 = vsel %vm268, %v1737, 0
    %1744 = vmatprep.subr.bf16.mxu0 0
    %1745 = vmatpush1.bf16.xpose.msra.mxu0 %v1742
    %1746 = vmatprep.subr.bf16.mxu0 0
    %1747 = vmatpush1.bf16.xpose.msra.mxu0 0
    %1748 = vmatprep.subr.bf16.mxu0 0
    %1749 = vmatpush1.bf16.xpose.msra.mxu0 0
    %1750 = vmatprep.subr.bf16.mxu0 0
    %1751 = vmatpush1.bf16.xpose.msra.mxu0 0
    %1752 = vmatprep.subr.bf16.mxu0 0
    %1753 = vmatpush1.bf16.xpose.msra.mxu0 0
    %1754 = vmatprep.subr.bf16.mxu0 0
    %1755 = vmatpush1.bf16.xpose.msra.mxu0 0
    %1756 = vmatprep.subr.bf16.mxu0 0
    %1757 = vmatpush1.bf16.xpose.msra.mxu0 0
    %1758 = vmatprep.subr.bf16.mxu0 0
    %1759 = vmatpush1.bf16.xpose.msra.mxu0 0
    %1760 = vmatprep.subr.bf16.mxu0 0
    %1761 = vmatpush1.bf16.xpose.msra.mxu0 0
    %1762 = vmatprep.subr.bf16.mxu0 0
    %1763 = vmatpush1.bf16.xpose.msra.mxu0 0
    %1764 = vmatprep.subr.bf16.mxu0 0
    %1765 = vmatpush1.bf16.xpose.msra.mxu0 0
    %1766 = vmatprep.subr.bf16.mxu0 0
    %1767 = vmatpush1.bf16.xpose.msra.mxu0 0
    %1768 = vmatprep.subr.bf16.mxu0 0
    %1769 = vmatpush1.bf16.xpose.msra.mxu0 0
    %1770 = vmatprep.subr.bf16.mxu0 0
    %1771 = vmatpush1.bf16.xpose.msra.mxu0 0
    %1772 = vmatprep.subr.bf16.mxu0 0
    %1773 = vmatpush1.bf16.xpose.msra.mxu0 0
    %1774 = vmatprep.subr.bf16.mxu0 0
    %1775 = vmatpush1.bf16.xpose.msra.mxu0 0
    %1776 = vmatprep.mubr.bf16.mxu0 0
    %1777 = vmatmul.mubr.bf16.gmra.mrb[0].mxu0 %v1739
    %v1778 = vpop.f32.mrb[0].mxu0
    %v1779 = vadd.f32 0.0, %v1778
    %v1780 = vpop.f32.mrb[0].mxu0
    %v1781 = vpop.f32.mrb[0].mxu0
    %v1782 = vpop.f32.mrb[0].mxu0
    %1783 = vdwg.mxu0
    %1785 = vrot.lane.b32.xlu0 %v1512, 120
    %v1786 = vpop.permute.xlu0 %1785
    %1787 = vrot.lane.b32.xlu0 %v1514, 120
    %v1788 = vpop.permute.xlu0 %1787
    %v1790 = vsel %vm268, %v1786, 0
    %v1793 = vsel %vm268, %v1788, 0
    %1795 = vmatprep.subr.bf16.mxu0 0
    %1796 = vmatpush1.bf16.xpose.msra.mxu0 %v1793
    %1797 = vmatprep.subr.bf16.mxu0 0
    %1798 = vmatpush1.bf16.xpose.msra.mxu0 0
    %1799 = vmatprep.subr.bf16.mxu0 0
    %1800 = vmatpush1.bf16.xpose.msra.mxu0 0
    %1801 = vmatprep.subr.bf16.mxu0 0
    %1802 = vmatpush1.bf16.xpose.msra.mxu0 0
    %1803 = vmatprep.subr.bf16.mxu0 0
    %1804 = vmatpush1.bf16.xpose.msra.mxu0 0
    %1805 = vmatprep.subr.bf16.mxu0 0
    %1806 = vmatpush1.bf16.xpose.msra.mxu0 0
    %1807 = vmatprep.subr.bf16.mxu0 0
    %1808 = vmatpush1.bf16.xpose.msra.mxu0 0
    %1809 = vmatprep.subr.bf16.mxu0 0
    %1810 = vmatpush1.bf16.xpose.msra.mxu0 0
    %1811 = vmatprep.subr.bf16.mxu0 0
    %1812 = vmatpush1.bf16.xpose.msra.mxu0 0
    %1813 = vmatprep.subr.bf16.mxu0 0
    %1814 = vmatpush1.bf16.xpose.msra.mxu0 0
    %1815 = vmatprep.subr.bf16.mxu0 0
    %1816 = vmatpush1.bf16.xpose.msra.mxu0 0
    %1817 = vmatprep.subr.bf16.mxu0 0
    %1818 = vmatpush1.bf16.xpose.msra.mxu0 0
    %1819 = vmatprep.subr.bf16.mxu0 0
    %1820 = vmatpush1.bf16.xpose.msra.mxu0 0
    %1821 = vmatprep.subr.bf16.mxu0 0
    %1822 = vmatpush1.bf16.xpose.msra.mxu0 0
    %1823 = vmatprep.subr.bf16.mxu0 0
    %1824 = vmatpush1.bf16.xpose.msra.mxu0 0
    %1825 = vmatprep.subr.bf16.mxu0 0
    %1826 = vmatpush1.bf16.xpose.msra.mxu0 0
    %1827 = vmatprep.mubr.bf16.mxu0 0
    %1828 = vmatmul.mubr.bf16.gmra.mrb[0].mxu0 %v1790
    %v1829 = vpop.f32.mrb[0].mxu0
    %v1830 = vadd.f32 0.0, %v1829
    %v1831 = vpop.f32.mrb[0].mxu0
    %v1832 = vpop.f32.mrb[0].mxu0
    %v1833 = vpop.f32.mrb[0].mxu0
    %1834 = vdwg.mxu0
    %v1835 = vmul.f32 %v1779, 0.35355338
    %v1836 = vmul.f32 %v1830, 0.35355338
    %v1837 = vadd.f32 %v1835, %v1509
    %v1838 = vadd.f32 %v1836, %v1510
    %v1839 = vsel %vm268, %v1837, -inf
    %1840 = vmax.xlane.f32.xlu0 %v1839
    %v1841 = vpop.xlane.xlu0 %1840
    %v1842 = vsel %vm268, %v1838, -inf
    %1843 = vmax.xlane.f32.xlu0 %v1842
    %v1844 = vpop.xlane.xlu0 %1843
    %v1845 = vsub.f32 %v1837, %v1841
    %v1846 = vsub.f32 %v1838, %v1844
    %v1847 = vmul.f32 %v1845, 1.442695
    %v1848 = vpow.pop %v1847
    %v1849 = vmul.f32 %v1846, 1.442695
    %v1850 = vpow.pop %v1849
    %v1851 = vsel %vm268, %v1848, 0.0
    %1852 = vadd.xlane.f32.xlu0 %v1851
    %v1853 = vpop.xlane.xlu0 %1852
    %v1854 = vsel %vm268, %v1850, 0.0
    %1855 = vadd.xlane.f32.xlu0 %v1854
    %v1856 = vpop.xlane.xlu0 %1855
    %v1857 = vrcp.pop %v1853
    %v1858 = vmul.f32 %v1848, %v1857
    %v1859 = vrcp.pop %v1856
    %v1860 = vmul.f32 %v1850, %v1859
    %v1861 = vpack.c.bf16 %v1858, %v1858
    %v1862 = vpack.c.bf16 %v1860, %v1860
    %1863 = vrot.lane.b32.xlu0 %v1513, 88
    %v1864 = vpop.permute.xlu0 %1863
    %v1866 = vsel %vm268, %v1861, 0
    %v1869 = vsel %vm478, %v1864, 0
    %1871 = vmatprep.subr.bf16.mxu0 0
    %1872 = vmatpush1.bf16.msra.mxu0 %v1869
    %1873 = vmatprep.subr.bf16.mxu0 0
    %1874 = vmatpush1.bf16.msra.mxu0 0
    %1875 = vmatprep.subr.bf16.mxu0 0
    %1876 = vmatpush1.bf16.msra.mxu0 0
    %1877 = vmatprep.subr.bf16.mxu0 0
    %1878 = vmatpush1.bf16.msra.mxu0 0
    %1879 = vmatprep.subr.bf16.mxu0 0
    %1880 = vmatpush1.bf16.msra.mxu0 0
    %1881 = vmatprep.subr.bf16.mxu0 0
    %1882 = vmatpush1.bf16.msra.mxu0 0
    %1883 = vmatprep.subr.bf16.mxu0 0
    %1884 = vmatpush1.bf16.msra.mxu0 0
    %1885 = vmatprep.subr.bf16.mxu0 0
    %1886 = vmatpush1.bf16.msra.mxu0 0
    %1887 = vmatprep.subr.bf16.mxu0 0
    %1888 = vmatpush1.bf16.msra.mxu0 0
    %1889 = vmatprep.subr.bf16.mxu0 0
    %1890 = vmatpush1.bf16.msra.mxu0 0
    %1891 = vmatprep.subr.bf16.mxu0 0
    %1892 = vmatpush1.bf16.msra.mxu0 0
    %1893 = vmatprep.subr.bf16.mxu0 0
    %1894 = vmatpush1.bf16.msra.mxu0 0
    %1895 = vmatprep.subr.bf16.mxu0 0
    %1896 = vmatpush1.bf16.msra.mxu0 0
    %1897 = vmatprep.subr.bf16.mxu0 0
    %1898 = vmatpush1.bf16.msra.mxu0 0
    %1899 = vmatprep.subr.bf16.mxu0 0
    %1900 = vmatpush1.bf16.msra.mxu0 0
    %1901 = vmatprep.subr.bf16.mxu0 0
    %1902 = vmatpush1.bf16.msra.mxu0 0
    %1903 = vmatprep.mubr.bf16.mxu0 0
    %1904 = vmatmul.mubr.bf16.gmra.mrb[0].mxu0 %v1866
    %v1905 = vpop.f32.mrb[0].mxu0
    %v1906 = vadd.f32 0.0, %v1905
    %v1907 = vpop.f32.mrb[0].mxu0
    %v1908 = vpop.f32.mrb[0].mxu0
    %v1909 = vpop.f32.mrb[0].mxu0
    %1910 = vdwg.mxu0
    %1911 = vrot.lane.b32.xlu0 %v1514, 88
    %v1912 = vpop.permute.xlu0 %1911
    %v1914 = vsel %vm268, %v1862, 0
    %v1917 = vsel %vm478, %v1912, 0
    %1919 = vmatprep.subr.bf16.mxu0 0
    %1920 = vmatpush1.bf16.msra.mxu0 %v1917
    %1921 = vmatprep.subr.bf16.mxu0 0
    %1922 = vmatpush1.bf16.msra.mxu0 0
    %1923 = vmatprep.subr.bf16.mxu0 0
    %1924 = vmatpush1.bf16.msra.mxu0 0
    %1925 = vmatprep.subr.bf16.mxu0 0
    %1926 = vmatpush1.bf16.msra.mxu0 0
    %1927 = vmatprep.subr.bf16.mxu0 0
    %1928 = vmatpush1.bf16.msra.mxu0 0
    %1929 = vmatprep.subr.bf16.mxu0 0
    %1930 = vmatpush1.bf16.msra.mxu0 0
    %1931 = vmatprep.subr.bf16.mxu0 0
    %1932 = vmatpush1.bf16.msra.mxu0 0
    %1933 = vmatprep.subr.bf16.mxu0 0
    %1934 = vmatpush1.bf16.msra.mxu0 0
    %1935 = vmatprep.subr.bf16.mxu0 0
    %1936 = vmatpush1.bf16.msra.mxu0 0
    %1937 = vmatprep.subr.bf16.mxu0 0
    %1938 = vmatpush1.bf16.msra.mxu0 0
    %1939 = vmatprep.subr.bf16.mxu0 0
    %1940 = vmatpush1.bf16.msra.mxu0 0
    %1941 = vmatprep.subr.bf16.mxu0 0
    %1942 = vmatpush1.bf16.msra.mxu0 0
    %1943 = vmatprep.subr.bf16.mxu0 0
    %1944 = vmatpush1.bf16.msra.mxu0 0
    %1945 = vmatprep.subr.bf16.mxu0 0
    %1946 = vmatpush1.bf16.msra.mxu0 0
    %1947 = vmatprep.subr.bf16.mxu0 0
    %1948 = vmatpush1.bf16.msra.mxu0 0
    %1949 = vmatprep.subr.bf16.mxu0 0
    %1950 = vmatpush1.bf16.msra.mxu0 0
    %1951 = vmatprep.mubr.bf16.mxu0 0
    %1952 = vmatmul.mubr.bf16.gmra.mrb[0].mxu0 %v1914
    %v1953 = vpop.f32.mrb[0].mxu0
    %v1954 = vadd.f32 0.0, %v1953
    %v1955 = vpop.f32.mrb[0].mxu0
    %v1956 = vpop.f32.mrb[0].mxu0
    %v1957 = vpop.f32.mrb[0].mxu0
    %1958 = vdwg.mxu0
    %1959 = vrot.lane.b32.xlu0 %v1511, 112
    %v1960 = vpop.permute.xlu0 %1959
    %1961 = vrot.lane.b32.xlu0 %v1513, 112
    %v1962 = vpop.permute.xlu0 %1961
    %v1964 = vsel %vm268, %v1960, 0
    %v1967 = vsel %vm268, %v1962, 0
    %1969 = vmatprep.subr.bf16.mxu0 0
    %1970 = vmatpush1.bf16.xpose.msra.mxu0 %v1967
    %1971 = vmatprep.subr.bf16.mxu0 0
    %1972 = vmatpush1.bf16.xpose.msra.mxu0 0
    %1973 = vmatprep.subr.bf16.mxu0 0
    %1974 = vmatpush1.bf16.xpose.msra.mxu0 0
    %1975 = vmatprep.subr.bf16.mxu0 0
    %1976 = vmatpush1.bf16.xpose.msra.mxu0 0
    %1977 = vmatprep.subr.bf16.mxu0 0
    %1978 = vmatpush1.bf16.xpose.msra.mxu0 0
    %1979 = vmatprep.subr.bf16.mxu0 0
    %1980 = vmatpush1.bf16.xpose.msra.mxu0 0
    %1981 = vmatprep.subr.bf16.mxu0 0
    %1982 = vmatpush1.bf16.xpose.msra.mxu0 0
    %1983 = vmatprep.subr.bf16.mxu0 0
    %1984 = vmatpush1.bf16.xpose.msra.mxu0 0
    %1985 = vmatprep.subr.bf16.mxu0 0
    %1986 = vmatpush1.bf16.xpose.msra.mxu0 0
    %1987 = vmatprep.subr.bf16.mxu0 0
    %1988 = vmatpush1.bf16.xpose.msra.mxu0 0
    %1989 = vmatprep.subr.bf16.mxu0 0
    %1990 = vmatpush1.bf16.xpose.msra.mxu0 0
    %1991 = vmatprep.subr.bf16.mxu0 0
    %1992 = vmatpush1.bf16.xpose.msra.mxu0 0
    %1993 = vmatprep.subr.bf16.mxu0 0
    %1994 = vmatpush1.bf16.xpose.msra.mxu0 0
    %1995 = vmatprep.subr.bf16.mxu0 0
    %1996 = vmatpush1.bf16.xpose.msra.mxu0 0
    %1997 = vmatprep.subr.bf16.mxu0 0
    %1998 = vmatpush1.bf16.xpose.msra.mxu0 0
    %1999 = vmatprep.subr.bf16.mxu0 0
    %2000 = vmatpush1.bf16.xpose.msra.mxu0 0
    %2001 = vmatprep.mubr.bf16.mxu0 0
    %2002 = vmatmul.mubr.bf16.gmra.mrb[0].mxu0 %v1964
    %v2003 = vpop.f32.mrb[0].mxu0
    %v2004 = vadd.f32 0.0, %v2003
    %v2005 = vpop.f32.mrb[0].mxu0
    %v2006 = vpop.f32.mrb[0].mxu0
    %v2007 = vpop.f32.mrb[0].mxu0
    %2008 = vdwg.mxu0
    %2009 = vrot.lane.b32.xlu0 %v1512, 112
    %v2010 = vpop.permute.xlu0 %2009
    %2011 = vrot.lane.b32.xlu0 %v1514, 112
    %v2012 = vpop.permute.xlu0 %2011
    %v2014 = vsel %vm268, %v2010, 0
    %v2017 = vsel %vm268, %v2012, 0
    %2019 = vmatprep.subr.bf16.mxu0 0
    %2020 = vmatpush1.bf16.xpose.msra.mxu0 %v2017
    %2021 = vmatprep.subr.bf16.mxu0 0
    %2022 = vmatpush1.bf16.xpose.msra.mxu0 0
    %2023 = vmatprep.subr.bf16.mxu0 0
    %2024 = vmatpush1.bf16.xpose.msra.mxu0 0
    %2025 = vmatprep.subr.bf16.mxu0 0
    %2026 = vmatpush1.bf16.xpose.msra.mxu0 0
    %2027 = vmatprep.subr.bf16.mxu0 0
    %2028 = vmatpush1.bf16.xpose.msra.mxu0 0
    %2029 = vmatprep.subr.bf16.mxu0 0
    %2030 = vmatpush1.bf16.xpose.msra.mxu0 0
    %2031 = vmatprep.subr.bf16.mxu0 0
    %2032 = vmatpush1.bf16.xpose.msra.mxu0 0
    %2033 = vmatprep.subr.bf16.mxu0 0
    %2034 = vmatpush1.bf16.xpose.msra.mxu0 0
    %2035 = vmatprep.subr.bf16.mxu0 0
    %2036 = vmatpush1.bf16.xpose.msra.mxu0 0
    %2037 = vmatprep.subr.bf16.mxu0 0
    %2038 = vmatpush1.bf16.xpose.msra.mxu0 0
    %2039 = vmatprep.subr.bf16.mxu0 0
    %2040 = vmatpush1.bf16.xpose.msra.mxu0 0
    %2041 = vmatprep.subr.bf16.mxu0 0
    %2042 = vmatpush1.bf16.xpose.msra.mxu0 0
    %2043 = vmatprep.subr.bf16.mxu0 0
    %2044 = vmatpush1.bf16.xpose.msra.mxu0 0
    %2045 = vmatprep.subr.bf16.mxu0 0
    %2046 = vmatpush1.bf16.xpose.msra.mxu0 0
    %2047 = vmatprep.subr.bf16.mxu0 0
    %2048 = vmatpush1.bf16.xpose.msra.mxu0 0
    %2049 = vmatprep.subr.bf16.mxu0 0
    %2050 = vmatpush1.bf16.xpose.msra.mxu0 0
    %2051 = vmatprep.mubr.bf16.mxu0 0
    %2052 = vmatmul.mubr.bf16.gmra.mrb[0].mxu0 %v2014
    %v2053 = vpop.f32.mrb[0].mxu0
    %v2054 = vadd.f32 0.0, %v2053
    %v2055 = vpop.f32.mrb[0].mxu0
    %v2056 = vpop.f32.mrb[0].mxu0
    %v2057 = vpop.f32.mrb[0].mxu0
    %2058 = vdwg.mxu0
    %v2059 = vmul.f32 %v2004, 0.35355338
    %v2060 = vmul.f32 %v2054, 0.35355338
    %v2061 = vadd.f32 %v2059, %v1509
    %v2062 = vadd.f32 %v2060, %v1510
    %v2063 = vsel %vm268, %v2061, -inf
    %2064 = vmax.xlane.f32.xlu0 %v2063
    %v2065 = vpop.xlane.xlu0 %2064
    %v2066 = vsel %vm268, %v2062, -inf
    %2067 = vmax.xlane.f32.xlu0 %v2066
    %v2068 = vpop.xlane.xlu0 %2067
    %v2069 = vsub.f32 %v2061, %v2065
    %v2070 = vsub.f32 %v2062, %v2068
    %v2071 = vmul.f32 %v2069, 1.442695
    %v2072 = vpow.pop %v2071
    %v2073 = vmul.f32 %v2070, 1.442695
    %v2074 = vpow.pop %v2073
    %v2075 = vsel %vm268, %v2072, 0.0
    %2076 = vadd.xlane.f32.xlu0 %v2075
    %v2077 = vpop.xlane.xlu0 %2076
    %v2078 = vsel %vm268, %v2074, 0.0
    %2079 = vadd.xlane.f32.xlu0 %v2078
    %v2080 = vpop.xlane.xlu0 %2079
    %v2081 = vrcp.pop %v2077
    %v2082 = vmul.f32 %v2072, %v2081
    %v2083 = vrcp.pop %v2080
    %v2084 = vmul.f32 %v2074, %v2083
    %v2085 = vpack.c.bf16 %v2082, %v2082
    %v2086 = vpack.c.bf16 %v2084, %v2084
    %2087 = vrot.lane.b32.xlu0 %v1513, 80
    %v2088 = vpop.permute.xlu0 %2087
    %v2090 = vsel %vm268, %v2085, 0
    %v2093 = vsel %vm478, %v2088, 0
    %2095 = vmatprep.subr.bf16.mxu0 0
    %2096 = vmatpush1.bf16.msra.mxu0 %v2093
    %2097 = vmatprep.subr.bf16.mxu0 0
    %2098 = vmatpush1.bf16.msra.mxu0 0
    %2099 = vmatprep.subr.bf16.mxu0 0
    %2100 = vmatpush1.bf16.msra.mxu0 0
    %2101 = vmatprep.subr.bf16.mxu0 0
    %2102 = vmatpush1.bf16.msra.mxu0 0
    %2103 = vmatprep.subr.bf16.mxu0 0
    %2104 = vmatpush1.bf16.msra.mxu0 0
    %2105 = vmatprep.subr.bf16.mxu0 0
    %2106 = vmatpush1.bf16.msra.mxu0 0
    %2107 = vmatprep.subr.bf16.mxu0 0
    %2108 = vmatpush1.bf16.msra.mxu0 0
    %2109 = vmatprep.subr.bf16.mxu0 0
    %2110 = vmatpush1.bf16.msra.mxu0 0
    %2111 = vmatprep.subr.bf16.mxu0 0
    %2112 = vmatpush1.bf16.msra.mxu0 0
    %2113 = vmatprep.subr.bf16.mxu0 0
    %2114 = vmatpush1.bf16.msra.mxu0 0
    %2115 = vmatprep.subr.bf16.mxu0 0
    %2116 = vmatpush1.bf16.msra.mxu0 0
    %2117 = vmatprep.subr.bf16.mxu0 0
    %2118 = vmatpush1.bf16.msra.mxu0 0
    %2119 = vmatprep.subr.bf16.mxu0 0
    %2120 = vmatpush1.bf16.msra.mxu0 0
    %2121 = vmatprep.subr.bf16.mxu0 0
    %2122 = vmatpush1.bf16.msra.mxu0 0
    %2123 = vmatprep.subr.bf16.mxu0 0
    %2124 = vmatpush1.bf16.msra.mxu0 0
    %2125 = vmatprep.subr.bf16.mxu0 0
    %2126 = vmatpush1.bf16.msra.mxu0 0
    %2127 = vmatprep.mubr.bf16.mxu0 0
    %2128 = vmatmul.mubr.bf16.gmra.mrb[0].mxu0 %v2090
    %v2129 = vpop.f32.mrb[0].mxu0
    %v2130 = vadd.f32 0.0, %v2129
    %v2131 = vpop.f32.mrb[0].mxu0
    %v2132 = vpop.f32.mrb[0].mxu0
    %v2133 = vpop.f32.mrb[0].mxu0
    %2134 = vdwg.mxu0
    %2135 = vrot.lane.b32.xlu0 %v1514, 80
    %v2136 = vpop.permute.xlu0 %2135
    %v2138 = vsel %vm268, %v2086, 0
    %v2141 = vsel %vm478, %v2136, 0
    %2143 = vmatprep.subr.bf16.mxu0 0
    %2144 = vmatpush1.bf16.msra.mxu0 %v2141
    %2145 = vmatprep.subr.bf16.mxu0 0
    %2146 = vmatpush1.bf16.msra.mxu0 0
    %2147 = vmatprep.subr.bf16.mxu0 0
    %2148 = vmatpush1.bf16.msra.mxu0 0
    %2149 = vmatprep.subr.bf16.mxu0 0
    %2150 = vmatpush1.bf16.msra.mxu0 0
    %2151 = vmatprep.subr.bf16.mxu0 0
    %2152 = vmatpush1.bf16.msra.mxu0 0
    %2153 = vmatprep.subr.bf16.mxu0 0
    %2154 = vmatpush1.bf16.msra.mxu0 0
    %2155 = vmatprep.subr.bf16.mxu0 0
    %2156 = vmatpush1.bf16.msra.mxu0 0
    %2157 = vmatprep.subr.bf16.mxu0 0
    %2158 = vmatpush1.bf16.msra.mxu0 0
    %2159 = vmatprep.subr.bf16.mxu0 0
    %2160 = vmatpush1.bf16.msra.mxu0 0
    %2161 = vmatprep.subr.bf16.mxu0 0
    %2162 = vmatpush1.bf16.msra.mxu0 0
    %2163 = vmatprep.subr.bf16.mxu0 0
    %2164 = vmatpush1.bf16.msra.mxu0 0
    %2165 = vmatprep.subr.bf16.mxu0 0
    %2166 = vmatpush1.bf16.msra.mxu0 0
    %2167 = vmatprep.subr.bf16.mxu0 0
    %2168 = vmatpush1.bf16.msra.mxu0 0
    %2169 = vmatprep.subr.bf16.mxu0 0
    %2170 = vmatpush1.bf16.msra.mxu0 0
    %2171 = vmatprep.subr.bf16.mxu0 0
    %2172 = vmatpush1.bf16.msra.mxu0 0
    %2173 = vmatprep.subr.bf16.mxu0 0
    %2174 = vmatpush1.bf16.msra.mxu0 0
    %2175 = vmatprep.mubr.bf16.mxu0 0
    %2176 = vmatmul.mubr.bf16.gmra.mrb[0].mxu0 %v2138
    %v2177 = vpop.f32.mrb[0].mxu0
    %v2178 = vadd.f32 0.0, %v2177
    %v2179 = vpop.f32.mrb[0].mxu0
    %v2180 = vpop.f32.mrb[0].mxu0
    %v2181 = vpop.f32.mrb[0].mxu0
    %2182 = vdwg.mxu0
    %2183 = vrot.lane.b32.xlu0 %v1511, 104
    %v2184 = vpop.permute.xlu0 %2183
    %2185 = vrot.lane.b32.xlu0 %v1513, 104
    %v2186 = vpop.permute.xlu0 %2185
    %v2188 = vsel %vm268, %v2184, 0
    %v2191 = vsel %vm268, %v2186, 0
    %2193 = vmatprep.subr.bf16.mxu0 0
    %2194 = vmatpush1.bf16.xpose.msra.mxu0 %v2191
    %2195 = vmatprep.subr.bf16.mxu0 0
    %2196 = vmatpush1.bf16.xpose.msra.mxu0 0
    %2197 = vmatprep.subr.bf16.mxu0 0
    %2198 = vmatpush1.bf16.xpose.msra.mxu0 0
    %2199 = vmatprep.subr.bf16.mxu0 0
    %2200 = vmatpush1.bf16.xpose.msra.mxu0 0
    %2201 = vmatprep.subr.bf16.mxu0 0
    %2202 = vmatpush1.bf16.xpose.msra.mxu0 0
    %2203 = vmatprep.subr.bf16.mxu0 0
    %2204 = vmatpush1.bf16.xpose.msra.mxu0 0
    %2205 = vmatprep.subr.bf16.mxu0 0
    %2206 = vmatpush1.bf16.xpose.msra.mxu0 0
    %2207 = vmatprep.subr.bf16.mxu0 0
    %2208 = vmatpush1.bf16.xpose.msra.mxu0 0
    %2209 = vmatprep.subr.bf16.mxu0 0
    %2210 = vmatpush1.bf16.xpose.msra.mxu0 0
    %2211 = vmatprep.subr.bf16.mxu0 0
    %2212 = vmatpush1.bf16.xpose.msra.mxu0 0
    %2213 = vmatprep.subr.bf16.mxu0 0
    %2214 = vmatpush1.bf16.xpose.msra.mxu0 0
    %2215 = vmatprep.subr.bf16.mxu0 0
    %2216 = vmatpush1.bf16.xpose.msra.mxu0 0
    %2217 = vmatprep.subr.bf16.mxu0 0
    %2218 = vmatpush1.bf16.xpose.msra.mxu0 0
    %2219 = vmatprep.subr.bf16.mxu0 0
    %2220 = vmatpush1.bf16.xpose.msra.mxu0 0
    %2221 = vmatprep.subr.bf16.mxu0 0
    %2222 = vmatpush1.bf16.xpose.msra.mxu0 0
    %2223 = vmatprep.subr.bf16.mxu0 0
    %2224 = vmatpush1.bf16.xpose.msra.mxu0 0
    %2225 = vmatprep.mubr.bf16.mxu0 0
    %2226 = vmatmul.mubr.bf16.gmra.mrb[0].mxu0 %v2188
    %v2227 = vpop.f32.mrb[0].mxu0
    %v2228 = vadd.f32 0.0, %v2227
    %v2229 = vpop.f32.mrb[0].mxu0
    %v2230 = vpop.f32.mrb[0].mxu0
    %v2231 = vpop.f32.mrb[0].mxu0
    %2232 = vdwg.mxu0
    %2233 = vrot.lane.b32.xlu0 %v1512, 104
    %v2234 = vpop.permute.xlu0 %2233
    %2235 = vrot.lane.b32.xlu0 %v1514, 104
    %v2236 = vpop.permute.xlu0 %2235
    %v2238 = vsel %vm268, %v2234, 0
    %v2241 = vsel %vm268, %v2236, 0
    %2243 = vmatprep.subr.bf16.mxu0 0
    %2244 = vmatpush1.bf16.xpose.msra.mxu0 %v2241
    %2245 = vmatprep.subr.bf16.mxu0 0
    %2246 = vmatpush1.bf16.xpose.msra.mxu0 0
    %2247 = vmatprep.subr.bf16.mxu0 0
    %2248 = vmatpush1.bf16.xpose.msra.mxu0 0
    %2249 = vmatprep.subr.bf16.mxu0 0
    %2250 = vmatpush1.bf16.xpose.msra.mxu0 0
    %2251 = vmatprep.subr.bf16.mxu0 0
    %2252 = vmatpush1.bf16.xpose.msra.mxu0 0
    %2253 = vmatprep.subr.bf16.mxu0 0
    %2254 = vmatpush1.bf16.xpose.msra.mxu0 0
    %2255 = vmatprep.subr.bf16.mxu0 0
    %2256 = vmatpush1.bf16.xpose.msra.mxu0 0
    %2257 = vmatprep.subr.bf16.mxu0 0
    %2258 = vmatpush1.bf16.xpose.msra.mxu0 0
    %2259 = vmatprep.subr.bf16.mxu0 0
    %2260 = vmatpush1.bf16.xpose.msra.mxu0 0
    %2261 = vmatprep.subr.bf16.mxu0 0
    %2262 = vmatpush1.bf16.xpose.msra.mxu0 0
    %2263 = vmatprep.subr.bf16.mxu0 0
    %2264 = vmatpush1.bf16.xpose.msra.mxu0 0
    %2265 = vmatprep.subr.bf16.mxu0 0
    %2266 = vmatpush1.bf16.xpose.msra.mxu0 0
    %2267 = vmatprep.subr.bf16.mxu0 0
    %2268 = vmatpush1.bf16.xpose.msra.mxu0 0
    %2269 = vmatprep.subr.bf16.mxu0 0
    %2270 = vmatpush1.bf16.xpose.msra.mxu0 0
    %2271 = vmatprep.subr.bf16.mxu0 0
    %2272 = vmatpush1.bf16.xpose.msra.mxu0 0
    %2273 = vmatprep.subr.bf16.mxu0 0
    %2274 = vmatpush1.bf16.xpose.msra.mxu0 0
    %2275 = vmatprep.mubr.bf16.mxu0 0
    %2276 = vmatmul.mubr.bf16.gmra.mrb[0].mxu0 %v2238
    %v2277 = vpop.f32.mrb[0].mxu0
    %v2278 = vadd.f32 0.0, %v2277
    %v2279 = vpop.f32.mrb[0].mxu0
    %v2280 = vpop.f32.mrb[0].mxu0
    %v2281 = vpop.f32.mrb[0].mxu0
    %2282 = vdwg.mxu0
    %v2283 = vmul.f32 %v2228, 0.35355338
    %v2284 = vmul.f32 %v2278, 0.35355338
    %v2285 = vadd.f32 %v2283, %v1509
    %v2286 = vadd.f32 %v2284, %v1510
    %v2287 = vsel %vm268, %v2285, -inf
    %2288 = vmax.xlane.f32.xlu0 %v2287
    %v2289 = vpop.xlane.xlu0 %2288
    %v2290 = vsel %vm268, %v2286, -inf
    %2291 = vmax.xlane.f32.xlu0 %v2290
    %v2292 = vpop.xlane.xlu0 %2291
    %v2293 = vsub.f32 %v2285, %v2289
    %v2294 = vsub.f32 %v2286, %v2292
    %v2295 = vmul.f32 %v2293, 1.442695
    %v2296 = vpow.pop %v2295
    %v2297 = vmul.f32 %v2294, 1.442695
    %v2298 = vpow.pop %v2297
    %v2299 = vsel %vm268, %v2296, 0.0
    %2300 = vadd.xlane.f32.xlu0 %v2299
    %v2301 = vpop.xlane.xlu0 %2300
    %v2302 = vsel %vm268, %v2298, 0.0
    %2303 = vadd.xlane.f32.xlu0 %v2302
    %v2304 = vpop.xlane.xlu0 %2303
    %v2305 = vrcp.pop %v2301
    %v2306 = vmul.f32 %v2296, %v2305
    %v2307 = vrcp.pop %v2304
    %v2308 = vmul.f32 %v2298, %v2307
    %v2309 = vpack.c.bf16 %v2306, %v2306
    %v2310 = vpack.c.bf16 %v2308, %v2308
    %2311 = vrot.lane.b32.xlu0 %v1513, 72
    %v2312 = vpop.permute.xlu0 %2311
    %v2314 = vsel %vm268, %v2309, 0
    %v2317 = vsel %vm478, %v2312, 0
    %2319 = vmatprep.subr.bf16.mxu0 0
    %2320 = vmatpush1.bf16.msra.mxu0 %v2317
    %2321 = vmatprep.subr.bf16.mxu0 0
    %2322 = vmatpush1.bf16.msra.mxu0 0
    %2323 = vmatprep.subr.bf16.mxu0 0
    %2324 = vmatpush1.bf16.msra.mxu0 0
    %2325 = vmatprep.subr.bf16.mxu0 0
    %2326 = vmatpush1.bf16.msra.mxu0 0
    %2327 = vmatprep.subr.bf16.mxu0 0
    %2328 = vmatpush1.bf16.msra.mxu0 0
    %2329 = vmatprep.subr.bf16.mxu0 0
    %2330 = vmatpush1.bf16.msra.mxu0 0
    %2331 = vmatprep.subr.bf16.mxu0 0
    %2332 = vmatpush1.bf16.msra.mxu0 0
    %2333 = vmatprep.subr.bf16.mxu0 0
    %2334 = vmatpush1.bf16.msra.mxu0 0
    %2335 = vmatprep.subr.bf16.mxu0 0
    %2336 = vmatpush1.bf16.msra.mxu0 0
    %2337 = vmatprep.subr.bf16.mxu0 0
    %2338 = vmatpush1.bf16.msra.mxu0 0
    %2339 = vmatprep.subr.bf16.mxu0 0
    %2340 = vmatpush1.bf16.msra.mxu0 0
    %2341 = vmatprep.subr.bf16.mxu0 0
    %2342 = vmatpush1.bf16.msra.mxu0 0
    %2343 = vmatprep.subr.bf16.mxu0 0
    %2344 = vmatpush1.bf16.msra.mxu0 0
    %2345 = vmatprep.subr.bf16.mxu0 0
    %2346 = vmatpush1.bf16.msra.mxu0 0
    %2347 = vmatprep.subr.bf16.mxu0 0
    %2348 = vmatpush1.bf16.msra.mxu0 0
    %2349 = vmatprep.subr.bf16.mxu0 0
    %2350 = vmatpush1.bf16.msra.mxu0 0
    %2351 = vmatprep.mubr.bf16.mxu0 0
    %2352 = vmatmul.mubr.bf16.gmra.mrb[0].mxu0 %v2314
    %v2353 = vpop.f32.mrb[0].mxu0
    %v2354 = vadd.f32 0.0, %v2353
    %v2355 = vpop.f32.mrb[0].mxu0
    %v2356 = vpop.f32.mrb[0].mxu0
    %v2357 = vpop.f32.mrb[0].mxu0
    %2358 = vdwg.mxu0
    %2359 = vrot.lane.b32.xlu0 %v1514, 72
    %v2360 = vpop.permute.xlu0 %2359
    %v2362 = vsel %vm268, %v2310, 0
    %v2365 = vsel %vm478, %v2360, 0
    %2367 = vmatprep.subr.bf16.mxu0 0
    %2368 = vmatpush1.bf16.msra.mxu0 %v2365
    %2369 = vmatprep.subr.bf16.mxu0 0
    %2370 = vmatpush1.bf16.msra.mxu0 0
    %2371 = vmatprep.subr.bf16.mxu0 0
    %2372 = vmatpush1.bf16.msra.mxu0 0
    %2373 = vmatprep.subr.bf16.mxu0 0
    %2374 = vmatpush1.bf16.msra.mxu0 0
    %2375 = vmatprep.subr.bf16.mxu0 0
    %2376 = vmatpush1.bf16.msra.mxu0 0
    %2377 = vmatprep.subr.bf16.mxu0 0
    %2378 = vmatpush1.bf16.msra.mxu0 0
    %2379 = vmatprep.subr.bf16.mxu0 0
    %2380 = vmatpush1.bf16.msra.mxu0 0
    %2381 = vmatprep.subr.bf16.mxu0 0
    %2382 = vmatpush1.bf16.msra.mxu0 0
    %2383 = vmatprep.subr.bf16.mxu0 0
    %2384 = vmatpush1.bf16.msra.mxu0 0
    %2385 = vmatprep.subr.bf16.mxu0 0
    %2386 = vmatpush1.bf16.msra.mxu0 0
    %2387 = vmatprep.subr.bf16.mxu0 0
    %2388 = vmatpush1.bf16.msra.mxu0 0
    %2389 = vmatprep.subr.bf16.mxu0 0
    %2390 = vmatpush1.bf16.msra.mxu0 0
    %2391 = vmatprep.subr.bf16.mxu0 0
    %2392 = vmatpush1.bf16.msra.mxu0 0
    %2393 = vmatprep.subr.bf16.mxu0 0
    %2394 = vmatpush1.bf16.msra.mxu0 0
    %2395 = vmatprep.subr.bf16.mxu0 0
    %2396 = vmatpush1.bf16.msra.mxu0 0
    %2397 = vmatprep.subr.bf16.mxu0 0
    %2398 = vmatpush1.bf16.msra.mxu0 0
    %2399 = vmatprep.mubr.bf16.mxu0 0
    %2400 = vmatmul.mubr.bf16.gmra.mrb[0].mxu0 %v2362
    %v2401 = vpop.f32.mrb[0].mxu0
    %v2402 = vadd.f32 0.0, %v2401
    %v2403 = vpop.f32.mrb[0].mxu0
    %v2404 = vpop.f32.mrb[0].mxu0
    %v2405 = vpop.f32.mrb[0].mxu0
    %2406 = vdwg.mxu0
    %2409 = vrot.lane.b32.xlu0 %v1906, 8
    %v2410 = vpop.permute.xlu0 %2409
    %2411 = vrot.lane.b32.xlu0 %v1954, 8
    %v2412 = vpop.permute.xlu0 %2411
    %2417 = vrot.lane.b32.xlu0 %v2130, 16
    %v2418 = vpop.permute.xlu0 %2417
    %2419 = vrot.lane.b32.xlu0 %v2178, 16
    %v2420 = vpop.permute.xlu0 %2419
    %2425 = vrot.lane.b32.xlu0 %v2354, 24
    %v2426 = vpop.permute.xlu0 %2425
    %2427 = vrot.lane.b32.xlu0 %v2402, 24
    %v2428 = vpop.permute.xlu0 %2427
    %v2431 = vsel %vm268, %v1679, %v2410
    %v2432 = vsel %vm268, %v1728, %v2412
    %v2433 = vsel %vm274, %v2431, %v2418
    %v2434 = vsel %vm274, %v2432, %v2420
    %v2435 = vsel %vm280, %v2433, %v2426
    %v2436 = vsel %vm280, %v2434, %v2428
    %v2437 = vpack.c.bf16 %v2436, %v2435
    %v2438 = vld [vmem:[#allocation13] sm:$0xf]
    %v2439 = vld [vmem:[#allocation13 + $0x4] sm:$0xf]
    %v2440 = vld [vmem:[#allocation13 + $0x8] sm:$0xf]
    %v2441 = vld [vmem:[#allocation13 + $0xc] sm:$0xf]
    %v2446 = vunpack.c.l.b16 %v2438
    %v2447 = vunpack.c.l.b16 %v2439
    %v2448 = vunpack.c.l.b16 %v2440
    %v2449 = vunpack.c.l.b16 %v2441
    %v2450 = vpack.c.b16 %v2447, %v2446
    %v2451 = vpack.c.b16 %v2449, %v2448
    %v2455 = vsel %vm200, %v2437, 0
    %2457 = vmatprep.subr.bf16.mxu0 0
    %2458 = vmatpush1.bf16.msra.mxu0 %v2450
    %2459 = vmatprep.subr.bf16.mxu0 0
    %2460 = vmatpush1.bf16.msra.mxu0 %v2451
    %2461 = vmatprep.subr.bf16.mxu0 0
    %2462 = vmatpush1.bf16.msra.mxu0 0
    %2463 = vmatprep.subr.bf16.mxu0 0
    %2464 = vmatpush1.bf16.msra.mxu0 0
    %2465 = vmatprep.subr.bf16.mxu0 0
    %2466 = vmatpush1.bf16.msra.mxu0 0
    %2467 = vmatprep.subr.bf16.mxu0 0
    %2468 = vmatpush1.bf16.msra.mxu0 0
    %2469 = vmatprep.subr.bf16.mxu0 0
    %2470 = vmatpush1.bf16.msra.mxu0 0
    %2471 = vmatprep.subr.bf16.mxu0 0
    %2472 = vmatpush1.bf16.msra.mxu0 0
    %2473 = vmatprep.subr.bf16.mxu0 0
    %2474 = vmatpush1.bf16.msra.mxu0 0
    %2475 = vmatprep.subr.bf16.mxu0 0
    %2476 = vmatpush1.bf16.msra.mxu0 0
    %2477 = vmatprep.subr.bf16.mxu0 0
    %2478 = vmatpush1.bf16.msra.mxu0 0
    %2479 = vmatprep.subr.bf16.mxu0 0
    %2480 = vmatpush1.bf16.msra.mxu0 0
    %2481 = vmatprep.subr.bf16.mxu0 0
    %2482 = vmatpush1.bf16.msra.mxu0 0
    %2483 = vmatprep.subr.bf16.mxu0 0
    %2484 = vmatpush1.bf16.msra.mxu0 0
    %2485 = vmatprep.subr.bf16.mxu0 0
    %2486 = vmatpush1.bf16.msra.mxu0 0
    %2487 = vmatprep.subr.bf16.mxu0 0
    %2488 = vmatpush1.bf16.msra.mxu0 0
    %2489 = vmatprep.mubr.bf16.mxu0 0
    %2490 = vmatmul.mubr.bf16.gmra.mrb[0].mxu0 %v2455
    %v2491 = vpop.f32.mrb[0].mxu0
    %v2492 = vadd.f32 0.0, %v2491
    %v2493 = vpop.f32.mrb[0].mxu0
    %v2494 = vpop.f32.mrb[0].mxu0
    %v2495 = vadd.f32 0.0, %v2494
    %v2496 = vpop.f32.mrb[0].mxu0
    %2497 = vdwg.mxu0
    %v2498 = vadd.f32 %v1381, %v2492
    %v2499 = vadd.f32 %v1382, %v2495
    %v2500 = vld [vmem:[%s17] sm:$0x1]
    %v2501 = vld [vmem:[%s18] sm:$0x1]
    %v2502 = vsel %vm200, %v2498, 0.0
    %2503 = vadd.xlane.f32.xlu0 %v2502
    %v2504 = vpop.xlane.xlu0 %2503
    %v2505 = vsel %vm200, %v2499, 0.0
    %2506 = vadd.xlane.f32.xlu0 %v2505
    %v2507 = vpop.xlane.xlu0 %2506
    %v2508 = vmul.f32 %v2504, %v1346
    %v2509 = vmul.f32 %v2507, %v1346
    %v2510 = vsub.f32 %v2498, %v2508
    %v2511 = vsub.f32 %v2499, %v2509
    %v2512 = vmul.f32 %v2510, %v2510
    %v2513 = vmul.f32 %v2511, %v2511
    %v2514 = vsel %vm200, %v2512, 0.0
    %2515 = vadd.xlane.f32.xlu0 %v2514
    %v2516 = vpop.xlane.xlu0 %2515
    %v2517 = vsel %vm200, %v2513, 0.0
    %2518 = vadd.xlane.f32.xlu0 %v2517
    %v2519 = vpop.xlane.xlu0 %2518
    %v2520 = vmul.f32 %v2516, %v1346
    %v2521 = vmul.f32 %v2519, %v1346
    %v2522 = vadd.f32 %v2520, 1e-05
    %v2523 = vadd.f32 %v2521, 1e-05
    %v2524 = vrsqrt.pop %v2522
    %v2525 = vrsqrt.pop %v2523
    %v2526 = vmul.f32 %v2510, %v2524
    %v2527 = vmul.f32 %v2511, %v2525
    %v2529 = vlaneseq
    %v2530 = vshrl.u32 %v2529, 7
    %v2531 = vsub.s32 0, %v2530
    %v2532 = vrot.slane %v2500, %v2531
    %v2534 = vmul.f32 %v2526, %v2532
    %v2535 = vmul.f32 %v2527, %v2532
    %v2537 = vlaneseq
    %v2538 = vshrl.u32 %v2537, 7
    %v2539 = vsub.s32 0, %v2538
    %v2540 = vrot.slane %v2501, %v2539
    %v2542 = vadd.f32 %v2534, %v2540
    %v2543 = vadd.f32 %v2535, %v2540
    %v2544 = vpack.c.bf16 %v2543, %v2542
    %v2545 = vld [vmem:[#allocation14] sm:$0xf]
    %v2546 = vld [vmem:[#allocation14 + $0x4] sm:$0xf]
    %v2547 = vld [vmem:[#allocation14 + $0x8] sm:$0xf]
    %v2548 = vld [vmem:[#allocation14 + $0xc] sm:$0xf]
    %v2549 = vld [vmem:[%s12] sm:$0x1]
    %v2551 = vlaneseq
    %v2552 = vshrl.u32 %v2551, 7
    %v2553 = vsub.s32 0, %v2552
    %v2554 = vrot.slane %v2549, %v2553
    %v2560 = vunpack.c.l.b16 %v2545
    %v2561 = vunpack.c.l.b16 %v2546
    %v2562 = vunpack.c.l.b16 %v2547
    %v2563 = vunpack.c.l.b16 %v2548
    %v2564 = vpack.c.b16 %v2561, %v2560
    %v2565 = vpack.c.b16 %v2563, %v2562
    %v2569 = vsel %vm200, %v2544, 0
    %2571 = vmatprep.subr.bf16.mxu0 0
    %2572 = vmatpush1.bf16.msra.mxu0 %v2564
    %2573 = vmatprep.subr.bf16.mxu0 0
    %2574 = vmatpush1.bf16.msra.mxu0 %v2565
    %2575 = vmatprep.subr.bf16.mxu0 0
    %2576 = vmatpush1.bf16.msra.mxu0 0
    %2577 = vmatprep.subr.bf16.mxu0 0
    %2578 = vmatpush1.bf16.msra.mxu0 0
    %2579 = vmatprep.subr.bf16.mxu0 0
    %2580 = vmatpush1.bf16.msra.mxu0 0
    %2581 = vmatprep.subr.bf16.mxu0 0
    %2582 = vmatpush1.bf16.msra.mxu0 0
    %2583 = vmatprep.subr.bf16.mxu0 0
    %2584 = vmatpush1.bf16.msra.mxu0 0
    %2585 = vmatprep.subr.bf16.mxu0 0
    %2586 = vmatpush1.bf16.msra.mxu0 0
    %2587 = vmatprep.subr.bf16.mxu0 0
    %2588 = vmatpush1.bf16.msra.mxu0 0
    %2589 = vmatprep.subr.bf16.mxu0 0
    %2590 = vmatpush1.bf16.msra.mxu0 0
    %2591 = vmatprep.subr.bf16.mxu0 0
    %2592 = vmatpush1.bf16.msra.mxu0 0
    %2593 = vmatprep.subr.bf16.mxu0 0
    %2594 = vmatpush1.bf16.msra.mxu0 0
    %2595 = vmatprep.subr.bf16.mxu0 0
    %2596 = vmatpush1.bf16.msra.mxu0 0
    %2597 = vmatprep.subr.bf16.mxu0 0
    %2598 = vmatpush1.bf16.msra.mxu0 0
    %2599 = vmatprep.subr.bf16.mxu0 0
    %2600 = vmatpush1.bf16.msra.mxu0 0
    %2601 = vmatprep.subr.bf16.mxu0 0
    %2602 = vmatpush1.bf16.msra.mxu0 0
    %2603 = vmatprep.mubr.bf16.mxu0 0
    %2604 = vmatmul.mubr.bf16.gmra.mrb[0].mxu0 %v2569
    %v2605 = vpop.f32.mrb[0].mxu0
    %v2606 = vadd.f32 %v2554, %v2605
    %v2607 = vpop.f32.mrb[0].mxu0
    %v2608 = vpop.f32.mrb[0].mxu0
    %v2609 = vadd.f32 %v2554, %v2608
    %v2610 = vpop.f32.mrb[0].mxu0
    %2611 = vdwg.mxu0
    %v2612 = vmax.f32 %v2606, 0.0
    %v2613 = vmax.f32 %v2609, 0.0
    %v2614 = vpack.c.bf16 %v2613, %v2612
    %v2615 = vld [vmem:[%s13] sm:$0xf]
    %v2616 = vld [vmem:[%s13 + $0x4] sm:$0xf]
    %v2617 = vld [vmem:[%s13 + $0x8] sm:$0xf]
    %v2618 = vld [vmem:[%s13 + $0xc] sm:$0xf]
    %v2619 = vld [vmem:[%s13 + $0x10] sm:$0xf]
    %v2620 = vld [vmem:[%s13 + $0x14] sm:$0xf]
    %v2621 = vld [vmem:[%s13 + $0x18] sm:$0xf]
    %v2622 = vld [vmem:[%s13 + $0x1c] sm:$0xf]
    %v2623 = vld [vmem:[%s14] sm:$0x1]
    %v2625 = vlaneseq
    %v2626 = vshrl.u32 %v2625, 7
    %v2627 = vsub.s32 0, %v2626
    %v2628 = vrot.slane %v2623, %v2627
    %v2638 = vunpack.c.l.b16 %v2615
    %v2639 = vunpack.c.l.b16 %v2616
    %v2640 = vunpack.c.l.b16 %v2617
    %v2641 = vunpack.c.l.b16 %v2618
    %v2642 = vunpack.c.l.b16 %v2619
    %v2643 = vunpack.c.l.b16 %v2620
    %v2644 = vunpack.c.l.b16 %v2621
    %v2645 = vunpack.c.l.b16 %v2622
    %v2646 = vpack.c.b16 %v2639, %v2638
    %v2647 = vpack.c.b16 %v2641, %v2640
    %v2648 = vpack.c.b16 %v2643, %v2642
    %v2649 = vpack.c.b16 %v2645, %v2644
    %vm2654 = vcmask 523264
    %v2656 = vsel %vm2654, %v2614, 0
    %2658 = vmatprep.subr.bf16.mxu0 0
    %2659 = vmatpush1.bf16.msra.mxu0 %v2646
    %2660 = vmatprep.subr.bf16.mxu0 0
    %2661 = vmatpush1.bf16.msra.mxu0 %v2647
    %2662 = vmatprep.subr.bf16.mxu0 0
    %2663 = vmatpush1.bf16.msra.mxu0 %v2648
    %2664 = vmatprep.subr.bf16.mxu0 0
    %2665 = vmatpush1.bf16.msra.mxu0 %v2649
    %2666 = vmatprep.subr.bf16.mxu0 0
    %2667 = vmatpush1.bf16.msra.mxu0 0
    %2668 = vmatprep.subr.bf16.mxu0 0
    %2669 = vmatpush1.bf16.msra.mxu0 0
    %2670 = vmatprep.subr.bf16.mxu0 0
    %2671 = vmatpush1.bf16.msra.mxu0 0
    %2672 = vmatprep.subr.bf16.mxu0 0
    %2673 = vmatpush1.bf16.msra.mxu0 0
    %2674 = vmatprep.subr.bf16.mxu0 0
    %2675 = vmatpush1.bf16.msra.mxu0 0
    %2676 = vmatprep.subr.bf16.mxu0 0
    %2677 = vmatpush1.bf16.msra.mxu0 0
    %2678 = vmatprep.subr.bf16.mxu0 0
    %2679 = vmatpush1.bf16.msra.mxu0 0
    %2680 = vmatprep.subr.bf16.mxu0 0
    %2681 = vmatpush1.bf16.msra.mxu0 0
    %2682 = vmatprep.subr.bf16.mxu0 0
    %2683 = vmatpush1.bf16.msra.mxu0 0
    %2684 = vmatprep.subr.bf16.mxu0 0
    %2685 = vmatpush1.bf16.msra.mxu0 0
    %2686 = vmatprep.subr.bf16.mxu0 0
    %2687 = vmatpush1.bf16.msra.mxu0 0
    %2688 = vmatprep.subr.bf16.mxu0 0
    %2689 = vmatpush1.bf16.msra.mxu0 0
    %2690 = vmatprep.mubr.bf16.mxu0 0
    %2691 = vmatmul.mubr.bf16.gmra.mrb[0].mxu0 %v2656
    %v2692 = vpop.f32.mrb[0].mxu0
    %v2693 = vadd.f32 %v2628, %v2692
    %v2694 = vpop.f32.mrb[0].mxu0
    %v2695 = vpop.f32.mrb[0].mxu0
    %v2696 = vadd.f32 %v2628, %v2695
    %v2697 = vpop.f32.mrb[0].mxu0
    %2698 = vdwg.mxu0
    %v2699 = vadd.f32 %v2542, %v2693
    %v2700 = vadd.f32 %v2543, %v2696
    %v2701 = vld [vmem:[%s19] sm:$0x1]
    %v2702 = vld [vmem:[%s20] sm:$0x1]
    %v2703 = vsel %vm200, %v2699, 0.0
    %2704 = vadd.xlane.f32.xlu0 %v2703
    %v2705 = vpop.xlane.xlu0 %2704
    %v2706 = vsel %vm200, %v2700, 0.0
    %2707 = vadd.xlane.f32.xlu0 %v2706
    %v2708 = vpop.xlane.xlu0 %2707
    %v2709 = vmul.f32 %v2705, %v1346
    %v2710 = vmul.f32 %v2708, %v1346
    %v2711 = vsub.f32 %v2699, %v2709
    %v2712 = vsub.f32 %v2700, %v2710
    %v2713 = vmul.f32 %v2711, %v2711
    %v2714 = vmul.f32 %v2712, %v2712
    %v2715 = vsel %vm200, %v2713, 0.0
    %2716 = vadd.xlane.f32.xlu0 %v2715
    %v2717 = vpop.xlane.xlu0 %2716
    %v2718 = vsel %vm200, %v2714, 0.0
    %2719 = vadd.xlane.f32.xlu0 %v2718
    %v2720 = vpop.xlane.xlu0 %2719
    %v2721 = vmul.f32 %v2717, %v1346
    %v2722 = vmul.f32 %v2720, %v1346
    %v2723 = vadd.f32 %v2721, 1e-05
    %v2724 = vadd.f32 %v2722, 1e-05
    %v2725 = vrsqrt.pop %v2723
    %v2726 = vrsqrt.pop %v2724
    %v2727 = vmul.f32 %v2711, %v2725
    %v2728 = vmul.f32 %v2712, %v2726
    %v2730 = vlaneseq
    %v2731 = vshrl.u32 %v2730, 7
    %v2732 = vsub.s32 0, %v2731
    %v2733 = vrot.slane %v2701, %v2732
    %v2735 = vmul.f32 %v2727, %v2733
    %v2736 = vmul.f32 %v2728, %v2733
    %v2738 = vlaneseq
    %v2739 = vshrl.u32 %v2738, 7
    %v2740 = vsub.s32 0, %v2739
    %v2741 = vrot.slane %v2702, %v2740
    %v2743 = vadd.f32 %v2735, %v2741
    %v2744 = vadd.f32 %v2736, %v2741
    %2745 = vst.msk [vmem:[#allocation16] sm:$0xff] %vm200, %v2743
    %2746 = vst.msk [vmem:[#allocation16 + $0x8] sm:$0xff] %vm200, %v2744
    // Predicated region
    $region118: #{tpu_custom_call.1} parent=1 // pred_check
      _
    $region119: #{tpu_custom_call.1} parent=1 // pred_check_branch
      %2748 = sbr.rel (0) target = $region121
    $region120: #{tpu_custom_call.1} parent=1 // pred_region
      %s2750 = ssub.s32 256, 256
      %2751 = vsyncadd [#allocation4], %s2750
      %s2752 = sshll.u32 [#allocation16], 4
      %s2753 = int_to_ptr.vmem [resolvable:$true] %s2752
      %2758 = dma.vmem_to_hbm [thread:$0]  %s2753, 256, %s21, [#allocation4], 128, 128, 8
    $region121: #{tpu_custom_call.1} parent=1 // pred_fallthru
      _
    // Predicated region
    $region122: #{tpu_custom_call.1} parent=1 // pred_check
      _
    $region123: #{tpu_custom_call.1} parent=1 // pred_check_branch
      %2760 = sbr.rel (0) target = $region125
    $region124: #{tpu_custom_call.1} parent=1 // pred_region
      %2761 = dma.done [#allocation4], 256
    $region125: #{tpu_custom_call.1} parent=1 // pred_fallthru
      _
    %2762 = vsyncpa [#allocation3], 1
    %2763 = vsyncpa [#allocation6], 1
    %2764 = vsyncpa [#allocation9], 1
    %2765 = vsyncpa [#allocation12], 1
    %2766 = vsyncpa [#allocation15], 1
    %2767 = vsyncpa [#allocation4], 1

</llo_original>
